<compile_context>
chip_gen: v5e
topology: v5e:2x2
jax: 0.10.0
libtpu: 0.0.40
codegen_flags: <defaults>
</compile_context>

<pallas_src>
import functools
import math

import jax
import jax.numpy as jnp
from jax.experimental import pallas as pl
from jax.experimental.pallas import tpu as pltpu


_VMEM_LIMIT = 64 * 1024 * 1024  # raise scoped VMEM (v6e has 128 MiB physical)
_ROW_BLOCK = 256                # token-tile size for row-tiled grids


def _row_tile(M, target=_ROW_BLOCK):
    """Row-tile: full M when small, else a multiple-of-8 tile."""
    return M if M <= target else target


# -----------------------------------------------------------------------------
# In-kernel math helpers (VPU/EUP only; no unsupported primitives)
# -----------------------------------------------------------------------------
def _erf_approx(x):
    # Abramowitz & Stegun 7.1.26, |err| < 1.5e-7 — matches PyTorch's exact
    # (erf-based) nn.GELU to well below bf16/f32-activation noise.
    a1, a2, a3, a4, a5 = 0.254829592, -0.284496736, 1.421413741, -1.453152027, 1.061405429
    p = 0.3275911
    ax = jnp.abs(x)
    t = 1.0 / (1.0 + p * ax)
    poly = ((((a5 * t + a4) * t + a3) * t + a2) * t + a1) * t
    y = 1.0 - poly * jnp.exp(-ax * ax)
    return jnp.where(x >= 0, y, -y)


def _gelu_exact(x):
    return 0.5 * x * (1.0 + _erf_approx(x * 0.7071067811865476))


def _layernorm_f32(x, g, b, eps=1e-5):
    mu = jnp.mean(x, axis=-1, keepdims=True)
    var = jnp.mean(jnp.square(x - mu), axis=-1, keepdims=True)
    return (x - mu) * jax.lax.rsqrt(var + eps) * g + b


# -----------------------------------------------------------------------------
# Kernel 1: fused LayerNorm -> Linear (emits both xn and y)
# -----------------------------------------------------------------------------
def _ln_linear_kernel(x_ref, g_ref, b_ref, w_ref, bias_ref, xn_ref, y_ref):
    x = x_ref[...].astype(jnp.float32)
    xn = _layernorm_f32(x, g_ref[...], b_ref[...])
    xn_bf = xn.astype(jnp.bfloat16)
    xn_ref[...] = xn_bf
    y = jnp.dot(xn_bf, w_ref[...], preferred_element_type=jnp.float32) + bias_ref[...]
    y_ref[...] = y.astype(y_ref.dtype)


def ln_linear(x, g, b, w, bias, *, y_dtype=jnp.bfloat16):
    """LayerNorm(x) then matmul.  Returns (xn_bf16, y).  x:(M,D), w:(D,N)."""
    M, D = x.shape
    N = w.shape[1]
    bm = _row_tile(M)
    return pl.pallas_call(
        _ln_linear_kernel,
        grid=(pl.cdiv(M, bm),),
        in_specs=[
            pl.BlockSpec((bm, D), lambda i: (i, 0)),
            pl.BlockSpec((1, D), lambda i: (0, 0)),
            pl.BlockSpec((1, D), lambda i: (0, 0)),
            pl.BlockSpec((D, N), lambda i: (0, 0)),
            pl.BlockSpec((1, N), lambda i: (0, 0)),
        ],
        out_specs=(
            pl.BlockSpec((bm, D), lambda i: (i, 0)),
            pl.BlockSpec((bm, N), lambda i: (i, 0)),
        ),
        out_shape=(
            jax.ShapeDtypeStruct((M, D), jnp.bfloat16),
            jax.ShapeDtypeStruct((M, N), y_dtype),
        ),
        compiler_params=pltpu.CompilerParams(
            dimension_semantics=("parallel",), vmem_limit_bytes=_VMEM_LIMIT),
    )(x, g.reshape(1, D), b.reshape(1, D), w, bias.reshape(1, N))


# -----------------------------------------------------------------------------
# Kernel 2: fused patch embedding  LN -> Linear -> LN
# -----------------------------------------------------------------------------
def _patch_embed_kernel(x_ref, g1_ref, b1_ref, w_ref, bias_ref, g2_ref, b2_ref, o_ref):
    x = x_ref[...].astype(jnp.float32)
    xn = _layernorm_f32(x, g1_ref[...], b1_ref[...])
    t = jnp.dot(xn.astype(jnp.bfloat16), w_ref[...],
                preferred_element_type=jnp.float32) + bias_ref[...]
    o_ref[...] = _layernorm_f32(t, g2_ref[...], b2_ref[...]).astype(o_ref.dtype)


def patch_embed(x, g1, b1, w, bias, g2, b2):
    M, pd = x.shape
    D = w.shape[1]
    bm = _row_tile(M)
    return pl.pallas_call(
        _patch_embed_kernel,
        grid=(pl.cdiv(M, bm),),
        in_specs=[
            pl.BlockSpec((bm, pd), lambda i: (i, 0)),
            pl.BlockSpec((1, pd), lambda i: (0, 0)),
            pl.BlockSpec((1, pd), lambda i: (0, 0)),
            pl.BlockSpec((pd, D), lambda i: (0, 0)),
            pl.BlockSpec((1, D), lambda i: (0, 0)),
            pl.BlockSpec((1, D), lambda i: (0, 0)),
            pl.BlockSpec((1, D), lambda i: (0, 0)),
        ],
        out_specs=pl.BlockSpec((bm, D), lambda i: (i, 0)),
        out_shape=jax.ShapeDtypeStruct((M, D), jnp.float32),
        compiler_params=pltpu.CompilerParams(
            dimension_semantics=("parallel",), vmem_limit_bytes=_VMEM_LIMIT),
    )(x, g1.reshape(1, pd), b1.reshape(1, pd), w, bias.reshape(1, D),
      g2.reshape(1, D), b2.reshape(1, D))


# -----------------------------------------------------------------------------
# Kernel 3: attention.  grid over batch, heads looped in-kernel; q/k/v and the
# output are lane-dense (S, H*dh) slabs (no host-side head transposes).
# -----------------------------------------------------------------------------
def _attention_kernel(q_ref, k_ref, v_ref, o_ref, *, n_heads, d_head, scale):
    q = q_ref[0]
    k = k_ref[0]
    v = v_ref[0]
    outs = []
    for h in range(n_heads):
        sl = slice(h * d_head, (h + 1) * d_head)
        qh, kh, vh = q[:, sl], k[:, sl], v[:, sl]
        # contract last dims directly (no in-kernel transpose of k)
        s = jax.lax.dot_general(qh, kh, (((1,), (1,)), ((), ())),
                                preferred_element_type=jnp.float32) * scale
        s = s - jnp.max(s, axis=-1, keepdims=True)
        p = jnp.exp(s)
        p = p * pl.reciprocal(jnp.sum(p, axis=-1, keepdims=True), approx=True)
        outs.append(jnp.dot(p.astype(vh.dtype), vh,
                            preferred_element_type=jnp.float32))
    # single full-width (lane-dense) store
    o_ref[0] = jnp.concatenate(outs, axis=-1).astype(o_ref.dtype)


def attention(q, k, v, *, n_heads, d_head):
    """q,k,v:(B,S,H*dh) bf16 -> (B,S,H*dh) bf16."""
    B, S, HD = q.shape
    kern = functools.partial(_attention_kernel, n_heads=n_heads, d_head=d_head,
                             scale=1.0 / math.sqrt(d_head))
    return pl.pallas_call(
        kern,
        grid=(B,),
        in_specs=[pl.BlockSpec((1, S, HD), lambda b: (b, 0, 0))] * 3,
        out_specs=pl.BlockSpec((1, S, HD), lambda b: (b, 0, 0)),
        out_shape=jax.ShapeDtypeStruct((B, S, HD), jnp.bfloat16),
        compiler_params=pltpu.CompilerParams(
            dimension_semantics=("parallel",), vmem_limit_bytes=_VMEM_LIMIT),
    )(q, k, v)


# -----------------------------------------------------------------------------
# Kernel 4: per-expert gated matmul (used for both MoE value & output proj).
#   gate_on_input=False: out += g * (x @ W_e)     (value proj, g on output)
#   gate_on_input=True : out += (g * x) @ W_e     (output proj, g on input)
# Accumulation over the expert axis happens in an f32 VMEM scratch.
# TODO(synk): dense over all E experts (zero-gated experts still matmul'd);
#             for large E use PrefetchScalarGridSpec token dispatch instead.
# -----------------------------------------------------------------------------
def _moe_matmul_kernel(x_ref, g_ref, w_ref, o_ref, acc_ref, *, gate_on_input):
    e = pl.program_id(1)

    @pl.when(e == 0)
    def _():
        acc_ref[...] = jnp.zeros_like(acc_ref)

    g = g_ref[0].astype(jnp.float32)
    if gate_on_input:
        xg = (x_ref[...].astype(jnp.float32) * g).astype(jnp.bfloat16)
        acc_ref[...] += jnp.dot(xg, w_ref[0], preferred_element_type=jnp.float32)
    else:
        y = jnp.dot(x_ref[...], w_ref[0], preferred_element_type=jnp.float32)
        acc_ref[...] += g * y

    @pl.when(e == pl.num_programs(1) - 1)
    def _():
        o_ref[...] = acc_ref[...].astype(o_ref.dtype)


def moe_matmul(x, gates, w, *, gate_on_input, out_dtype):
    """x:(M,K) bf16, gates:(E,M,G) bf16 (lane-dense), w:(E,K,N) bf16 -> (M,N)."""
    M, K = x.shape
    E, _, N = w.shape
    G = gates.shape[-1]
    bm = _row_tile(M)
    kern = functools.partial(_moe_matmul_kernel, gate_on_input=gate_on_input)
    return pl.pallas_call(
        kern,
        grid=(pl.cdiv(M, bm), E),
        in_specs=[
            pl.BlockSpec((bm, K), lambda m, e: (m, 0)),
            pl.BlockSpec((1, bm, G), lambda m, e: (e, m, 0)),
            pl.BlockSpec((1, K, N), lambda m, e: (e, 0, 0)),
        ],
        out_specs=pl.BlockSpec((bm, N), lambda m, e: (m, 0)),
        out_shape=jax.ShapeDtypeStruct((M, N), out_dtype),
        scratch_shapes=[pltpu.VMEM((bm, N), jnp.float32)],
        compiler_params=pltpu.CompilerParams(
            dimension_semantics=("parallel", "arbitrary"),
            vmem_limit_bytes=_VMEM_LIMIT),
    )(x, gates, w)


# -----------------------------------------------------------------------------
# Kernel 5: per-expert gated FFN (GELU), accumulated over experts.
# TODO(synk): on v7x (64 MiB VMEM) chunk the hidden dim Hd onto an extra grid
#             axis at production sizes (D*Hd bf16 weights > scoped VMEM).
# -----------------------------------------------------------------------------
def _moe_ffn_kernel(x_ref, g_ref, w1_ref, b1_ref, w2_ref, b2_ref, o_ref, acc_ref):
    e = pl.program_id(1)

    @pl.when(e == 0)
    def _():
        acc_ref[...] = jnp.zeros_like(acc_ref)

    h = jnp.dot(x_ref[...], w1_ref[0], preferred_element_type=jnp.float32) + b1_ref[0]
    h = _gelu_exact(h)
    y = jnp.dot(h.astype(jnp.bfloat16), w2_ref[0],
                preferred_element_type=jnp.float32) + b2_ref[0]
    acc_ref[...] += g_ref[0].astype(jnp.float32) * y

    @pl.when(e == pl.num_programs(1) - 1)
    def _():
        o_ref[...] = acc_ref[...].astype(o_ref.dtype)


def moe_ffn(x, gates, w1, b1, w2, b2):
    """x:(M,D) bf16, gates:(E,M,D) bf16, w1:(E,D,Hd), w2:(E,Hd,D) -> (M,D) f32."""
    M, D = x.shape
    E, _, Hd = w1.shape
    bm = _row_tile(M)
    return pl.pallas_call(
        _moe_ffn_kernel,
        grid=(pl.cdiv(M, bm), E),
        in_specs=[
            pl.BlockSpec((bm, D), lambda m, e: (m, 0)),
            pl.BlockSpec((1, bm, D), lambda m, e: (e, m, 0)),
            pl.BlockSpec((1, D, Hd), lambda m, e: (e, 0, 0)),
            pl.BlockSpec((1, 1, Hd), lambda m, e: (e, 0, 0)),
            pl.BlockSpec((1, Hd, D), lambda m, e: (e, 0, 0)),
            pl.BlockSpec((1, 1, D), lambda m, e: (e, 0, 0)),
        ],
        out_specs=pl.BlockSpec((bm, D), lambda m, e: (m, 0)),
        out_shape=jax.ShapeDtypeStruct((M, D), jnp.float32),
        scratch_shapes=[pltpu.VMEM((bm, D), jnp.float32)],
        compiler_params=pltpu.CompilerParams(
            dimension_semantics=("parallel", "arbitrary"),
            vmem_limit_bytes=_VMEM_LIMIT),
    )(x, gates, w1, b1.reshape(E, 1, Hd), w2, b2.reshape(E, 1, D))


# -----------------------------------------------------------------------------
# Model glue (plain JAX: gating top-k, reshapes, residual adds)
# -----------------------------------------------------------------------------
def topk_gates(logits, k):
    """Exact top-k softmax gates (ties resolved like torch.topk, by index)."""
    _, idx = jax.lax.top_k(logits, k)
    mask = jnp.sum(jax.nn.one_hot(idx, logits.shape[-1], dtype=jnp.float32),
                   axis=-2) > 0
    masked = jnp.where(mask, logits, -jnp.inf)
    return jax.nn.softmax(masked, axis=-1)


def switchhead_attention(x_flat, lp, B, S, cfg):
    # TODO(synk): SwitchHeadAttention source not provided; canonical SwitchHead
    # (shared Q/K, per-head top-k MoE value & output projections) implemented.
    T, D = x_flat.shape
    H, dh = cfg["n_heads"], cfg["d_head"]
    E, sel = cfg["n_experts"], cfg["sel_experts"]
    HD = H * dh

    # fused LayerNorm + [Q | K | attn-gate] projection (one MXU pass over xn)
    xn, qkg = ln_linear(x_flat, lp["ln1_g"], lp["ln1_b"], lp["Wqkg"], lp["bqkg"])
    q = qkg[:, :HD]
    k = qkg[:, HD:2 * HD]
    glog = qkg[:, 2 * HD:].astype(jnp.float32).reshape(T, H, E)

    gates = topk_gates(glog, sel)                                   # (T,H,E) f32
    # lane-dense per-expert gate slab: g_rep[e, t, h*dh + j] = gates[t, h, e]
    g_rep = jnp.repeat(gates.transpose(2, 0, 1), dh, axis=2).astype(jnp.bfloat16)

    # per-expert value projection, all heads at once: (T,D)@(D,H*dh)
    v = moe_matmul(xn, g_rep, lp["Wv"], gate_on_input=False,
                   out_dtype=jnp.bfloat16)                          # (T, HD)

    o = attention(q.reshape(B, S, HD), k.reshape(B, S, HD), v.reshape(B, S, HD),
                  n_heads=H, d_head=dh).reshape(T, HD)

    # per-expert output projection: (gate*o):(T,H*dh) @ (H*dh,D)
    return moe_matmul(o, g_rep, lp["Wo"], gate_on_input=True,
                      out_dtype=jnp.float32)                        # (T, D)


def moe_layer(x_flat, lp, cfg):
    # TODO(synk): MoELayer source not provided; top-k softmax-gated GELU FFNs.
    T, D = x_flat.shape
    E, sel = cfg["n_experts"], cfg["sel_experts"]
    xn, glog = ln_linear(x_flat, lp["ln2_g"], lp["ln2_b"], lp["Wg_moe"],
                         lp["bg_moe"], y_dtype=jnp.float32)         # (T,E)
    gates = topk_gates(glog, sel)                                   # (T,E)
    g_b = jnp.broadcast_to(gates.T[:, :, None], (E, T, D)).astype(jnp.bfloat16)
    return moe_ffn(xn, g_b, lp["W1"], lp["b1"], lp["W2"], lp["b2"])  # (T,D) f32


def encoder_layer(x, lp, cfg):
    B, S, D = x.shape
    x_flat = x.reshape(B * S, D)                       # f32 residual stream
    x_flat = x_flat + switchhead_attention(x_flat, lp, B, S, cfg)
    x_flat = x_flat + moe_layer(x_flat, lp, cfg)
    return x_flat.reshape(B, S, D)


def vit_moe_forward(params, x, cfg):
    B, C, IH, IW = x.shape
    p, D = cfg["patch_size"], cfg["dim"]
    gh, gw = IH // p, IW // p
    N = gh * gw
    pd = p * p * C

    # Rearrange 'b c (h p1) (w p2) -> b (h w) (p1 p2 c)'
    patches = (x.reshape(B, C, gh, p, gw, p)
                 .transpose(0, 2, 4, 3, 5, 1)
                 .reshape(B * N, pd))
    tok = patch_embed(patches, params["pe_ln1_g"], params["pe_ln1_b"],
                      params["pe_W"], params["pe_b"],
                      params["pe_ln2_g"], params["pe_ln2_b"]).reshape(B, N, D)

    cls = jnp.broadcast_to(params["class_token"], (B, 1, D))
    seq = jnp.concatenate([cls, tok], axis=1) + params["pos_enc"]

    for lp in params["layers"]:
        seq = encoder_layer(seq, lp, cfg)

    # LayerNorm is per-token, so normalizing only the CLS rows is equivalent.
    cls_tok = seq[:, 0, :]                                            # (B, D)
    _, logits = ln_linear(cls_tok, params["norm_g"], params["norm_b"],
                          params["Wc"], params["bc"], y_dtype=jnp.float32)
    return logits


# -----------------------------------------------------------------------------
# Deterministic parameter init (weights bf16, biases / LN params f32)
# -----------------------------------------------------------------------------
def init_params(key, cfg):
    D, H, dh = cfg["dim"], cfg["n_heads"], cfg["d_head"]
    E, Hd = cfg["n_experts"], cfg["moe_hidden"]
    pd, depth = cfg["patch_dim"], cfg["depth"]
    S = cfg["num_patches"] + 1
    HD = H * dh

    keys = iter(jax.random.split(key, 16 + depth * 16))

    def nrm(shape, std=0.02, dtype=jnp.bfloat16):
        return (std * jax.random.normal(next(keys), shape, jnp.float32)).astype(dtype)

    zeros = lambda s: jnp.zeros(s, jnp.float32)
    ones = lambda s: jnp.ones(s, jnp.float32)

    params = {
        "pe_ln1_g": ones((pd,)), "pe_ln1_b": zeros((pd,)),
        "pe_W": nrm((pd, D)), "pe_b": zeros((D,)),
        "pe_ln2_g": ones((D,)), "pe_ln2_b": zeros((D,)),
        "class_token": nrm((1, 1, D), 1.0, jnp.float32),
        "pos_enc": nrm((1, S, D), 1.0, jnp.float32),
        "norm_g": ones((D,)), "norm_b": zeros((D,)),
        "Wc": nrm((D, cfg["num_classes"])), "bc": zeros((cfg["num_classes"],)),
        "layers": [],
    }
    for _ in range(depth):
        params["layers"].append({
            "ln1_g": ones((D,)), "ln1_b": zeros((D,)),
            "ln2_g": ones((D,)), "ln2_b": zeros((D,)),
            # fused [Q | K | attention-gate] projection
            "Wqkg": nrm((D, 2 * HD + H * E)), "bqkg": zeros((2 * HD + H * E,)),
            # per-expert value / output projections, stored kernel-ready:
            #   Wv[e, d, h*dh+j],  Wo[e, h*dh+j, d]
            "Wv": nrm((E, D, HD)),
            "Wo": nrm((E, HD, D)),
            "Wg_moe": nrm((D, E)), "bg_moe": zeros((E,)),
            "W1": nrm((E, D, Hd)), "b1": zeros((E, Hd)),
            "W2": nrm((E, Hd, D)), "b2": zeros((E, D)),
        })
    return params


# -----------------------------------------------------------------------------
if __name__ == "__main__":
    # Small config consistent with ViTMoE(dim, image_size, patch_size, ...)
    B, C, IMG, P = 2, 3, 16, 8
    cfg = dict(
        dim=32,
        image_size=IMG,
        patch_size=P,
        patch_dim=P * P * C,
        n_heads=2,
        d_head=8,
        depth=2,
        n_experts=4,
        sel_experts=2,
        num_classes=10,
        num_patches=(IMG // P) ** 2,
        moe_hidden=128,
    )

    key = jax.random.PRNGKey(0)
    kp, kx = jax.random.split(key)
    params = init_params(kp, cfg)
    x = jax.random.normal(kx, (B, C, IMG, IMG), jnp.float32)  # NCHW like PyTorch

    fwd = jax.jit(functools.partial(vit_moe_forward, cfg=cfg))
    out = jax.block_until_ready(fwd(params, x))

    assert out.shape == (B, cfg["num_classes"])
    assert bool(jnp.all(jnp.isfinite(out)))
    print("KERNEL_OK")
</pallas_src>

<mosaic_0001>
module attributes {stable_mosaic.version = 11 : i64} {
  func.func @_patch_embed_kernel(%arg0: i32, %arg1: memref<8x192xf32, #tpu.memory_space<vmem>>, %arg2: memref<1x192xf32, #tpu.memory_space<vmem>>, %arg3: memref<1x192xf32, #tpu.memory_space<vmem>>, %arg4: memref<192x32xbf16, #tpu.memory_space<vmem>>, %arg5: memref<1x32xf32, #tpu.memory_space<vmem>>, %arg6: memref<1x32xf32, #tpu.memory_space<vmem>>, %arg7: memref<1x32xf32, #tpu.memory_space<vmem>>, %arg8: memref<8x32xf32, #tpu.memory_space<vmem>>) attributes {dimension_semantics = [#tpu.dimension_semantics<parallel>], iteration_bounds = array<i64: 1>, scalar_prefetch = 0 : i64, scratch_operands = 0 : i64, tpu.core_type = #tpu.core_type<tc>, window_params = [{transform_indices = @transform_0, window_bounds = array<i64: 8, 192>}, {pipeline_mode = #tpu.pipeline_mode<synchronous>, transform_indices = @transform_1, window_bounds = array<i64: 1, 192>}, {pipeline_mode = #tpu.pipeline_mode<synchronous>, transform_indices = @transform_2, window_bounds = array<i64: 1, 192>}, {pipeline_mode = #tpu.pipeline_mode<synchronous>, transform_indices = @transform_3, window_bounds = array<i64: 192, 32>}, {pipeline_mode = #tpu.pipeline_mode<synchronous>, transform_indices = @transform_4, window_bounds = array<i64: 1, 32>}, {pipeline_mode = #tpu.pipeline_mode<synchronous>, transform_indices = @transform_5, window_bounds = array<i64: 1, 32>}, {pipeline_mode = #tpu.pipeline_mode<synchronous>, transform_indices = @transform_6, window_bounds = array<i64: 1, 32>}, {transform_indices = @transform_7, window_bounds = array<i64: 8, 32>}]} {
    %c0 = arith.constant 0 : index
    %c0_0 = arith.constant 0 : index
    %0 = vector.load %arg1[%c0, %c0_0] : memref<8x192xf32, #tpu.memory_space<vmem>>, vector<8x192xf32>
    %c0_1 = arith.constant 0 : index
    %c0_2 = arith.constant 0 : index
    %1 = vector.load %arg2[%c0_1, %c0_2] : memref<1x192xf32, #tpu.memory_space<vmem>>, vector<1x192xf32>
    %c0_3 = arith.constant 0 : index
    %c0_4 = arith.constant 0 : index
    %2 = vector.load %arg3[%c0_3, %c0_4] : memref<1x192xf32, #tpu.memory_space<vmem>>, vector<1x192xf32>
    %cst = arith.constant dense<0.000000e+00> : vector<8xf32>
    %3 = vector.multi_reduction <add>, %0, %cst [1] : vector<8x192xf32> to vector<8xf32>
    %4 = vector.shape_cast %3 : vector<8xf32> to vector<8x1xf32>
    %cst_5 = arith.constant 1.920000e+02 : f32
    %5 = vector.broadcast %cst_5 : f32 to vector<8x1xf32>
    %6 = arith.divf %4, %5 : vector<8x1xf32>
    %7 = vector.broadcast %6 : vector<8x1xf32> to vector<8x192xf32>
    %8 = arith.subf %0, %7 : vector<8x192xf32>
    %9 = arith.mulf %8, %8 : vector<8x192xf32>
    %cst_6 = arith.constant dense<0.000000e+00> : vector<8xf32>
    %10 = vector.multi_reduction <add>, %9, %cst_6 [1] : vector<8x192xf32> to vector<8xf32>
    %11 = vector.shape_cast %10 : vector<8xf32> to vector<8x1xf32>
    %cst_7 = arith.constant 1.920000e+02 : f32
    %12 = vector.broadcast %cst_7 : f32 to vector<8x1xf32>
    %13 = arith.divf %11, %12 : vector<8x1xf32>
    %14 = vector.broadcast %6 : vector<8x1xf32> to vector<8x192xf32>
    %15 = arith.subf %0, %14 : vector<8x192xf32>
    %cst_8 = arith.constant 9.99999974E-6 : f32
    %16 = vector.broadcast %cst_8 : f32 to vector<8x1xf32>
    %17 = arith.addf %13, %16 : vector<8x1xf32>
    %18 = math.rsqrt %17 : vector<8x1xf32>
    %19 = vector.broadcast %18 : vector<8x1xf32> to vector<8x192xf32>
    %20 = arith.mulf %15, %19 : vector<8x192xf32>
    %21 = vector.broadcast %1 : vector<1x192xf32> to vector<8x192xf32>
    %22 = arith.mulf %20, %21 : vector<8x192xf32>
    %23 = vector.broadcast %2 : vector<1x192xf32> to vector<8x192xf32>
    %24 = arith.addf %22, %23 : vector<8x192xf32>
    %25 = arith.truncf %24 : vector<8x192xf32> to vector<8x192xbf16>
    %c0_9 = arith.constant 0 : index
    %c0_10 = arith.constant 0 : index
    %26 = vector.load %arg4[%c0_9, %c0_10] : memref<192x32xbf16, #tpu.memory_space<vmem>>, vector<192x32xbf16>
    %cst_11 = arith.constant dense<0.000000e+00> : vector<8x32xf32>
    %27 = tpu.matmul %25, %26, %cst_11 {dimension_numbers = #tpu.dot_dimension_numbers<[1], [0], [0], [1], [0, 0, 1, 1], [], []>} : vector<8x192xbf16>, vector<192x32xbf16>, vector<8x32xf32> -> vector<8x32xf32>
    %c0_12 = arith.constant 0 : index
    %c0_13 = arith.constant 0 : index
    %28 = vector.load %arg5[%c0_12, %c0_13] : memref<1x32xf32, #tpu.memory_space<vmem>>, vector<1x32xf32>
    %29 = vector.broadcast %28 : vector<1x32xf32> to vector<8x32xf32>
    %30 = arith.addf %27, %29 : vector<8x32xf32>
    %c0_14 = arith.constant 0 : index
    %c0_15 = arith.constant 0 : index
    %31 = vector.load %arg6[%c0_14, %c0_15] : memref<1x32xf32, #tpu.memory_space<vmem>>, vector<1x32xf32>
    %c0_16 = arith.constant 0 : index
    %c0_17 = arith.constant 0 : index
    %32 = vector.load %arg7[%c0_16, %c0_17] : memref<1x32xf32, #tpu.memory_space<vmem>>, vector<1x32xf32>
    %cst_18 = arith.constant dense<0.000000e+00> : vector<8xf32>
    %33 = vector.multi_reduction <add>, %30, %cst_18 [1] : vector<8x32xf32> to vector<8xf32>
    %34 = vector.shape_cast %33 : vector<8xf32> to vector<8x1xf32>
    %cst_19 = arith.constant 3.200000e+01 : f32
    %35 = vector.broadcast %cst_19 : f32 to vector<8x1xf32>
    %36 = arith.divf %34, %35 : vector<8x1xf32>
    %37 = vector.broadcast %36 : vector<8x1xf32> to vector<8x32xf32>
    %38 = arith.subf %30, %37 : vector<8x32xf32>
    %39 = arith.mulf %38, %38 : vector<8x32xf32>
    %cst_20 = arith.constant dense<0.000000e+00> : vector<8xf32>
    %40 = vector.multi_reduction <add>, %39, %cst_20 [1] : vector<8x32xf32> to vector<8xf32>
    %41 = vector.shape_cast %40 : vector<8xf32> to vector<8x1xf32>
    %cst_21 = arith.constant 3.200000e+01 : f32
    %42 = vector.broadcast %cst_21 : f32 to vector<8x1xf32>
    %43 = arith.divf %41, %42 : vector<8x1xf32>
    %44 = vector.broadcast %36 : vector<8x1xf32> to vector<8x32xf32>
    %45 = arith.subf %30, %44 : vector<8x32xf32>
    %cst_22 = arith.constant 9.99999974E-6 : f32
    %46 = vector.broadcast %cst_22 : f32 to vector<8x1xf32>
    %47 = arith.addf %43, %46 : vector<8x1xf32>
    %48 = math.rsqrt %47 : vector<8x1xf32>
    %49 = vector.broadcast %48 : vector<8x1xf32> to vector<8x32xf32>
    %50 = arith.mulf %45, %49 : vector<8x32xf32>
    %51 = vector.broadcast %31 : vector<1x32xf32> to vector<8x32xf32>
    %52 = arith.mulf %50, %51 : vector<8x32xf32>
    %53 = vector.broadcast %32 : vector<1x32xf32> to vector<8x32xf32>
    %54 = arith.addf %52, %53 : vector<8x32xf32>
    %c0_23 = arith.constant 0 : index
    %c0_24 = arith.constant 0 : index
    %55 = vector.load %arg8[%c0_23, %c0_24] : memref<8x32xf32, #tpu.memory_space<vmem>>, vector<8x32xf32>
    tpu.vector_store %arg8[%c0_23, %c0_24], %54 {strides = array<i32>} : memref<8x32xf32, #tpu.memory_space<vmem>>, vector<8x32xf32>,
    return
  }
  func.func @transform_0(%arg0: i32) -> (i32, i32) {
    %c0_i32 = arith.constant 0 : i32
    %c0_i32_0 = arith.constant 0 : i32
    return %arg0, %c0_i32 : i32, i32
  }
  func.func @transform_1(%arg0: i32) -> (i32, i32) {
    %c0_i32 = arith.constant 0 : i32
    %c0_i32_0 = arith.constant 0 : i32
    %c0_i32_1 = arith.constant 0 : i32
    return %c0_i32, %c0_i32_0 : i32, i32
  }
  func.func @transform_2(%arg0: i32) -> (i32, i32) {
    %c0_i32 = arith.constant 0 : i32
    %c0_i32_0 = arith.constant 0 : i32
    %c0_i32_1 = arith.constant 0 : i32
    return %c0_i32, %c0_i32_0 : i32, i32
  }
  func.func @transform_3(%arg0: i32) -> (i32, i32) {
    %c0_i32 = arith.constant 0 : i32
    %c0_i32_0 = arith.constant 0 : i32
    %c0_i32_1 = arith.constant 0 : i32
    return %c0_i32, %c0_i32_0 : i32, i32
  }
  func.func @transform_4(%arg0: i32) -> (i32, i32) {
    %c0_i32 = arith.constant 0 : i32
    %c0_i32_0 = arith.constant 0 : i32
    %c0_i32_1 = arith.constant 0 : i32
    return %c0_i32, %c0_i32_0 : i32, i32
  }
  func.func @transform_5(%arg0: i32) -> (i32, i32) {
    %c0_i32 = arith.constant 0 : i32
    %c0_i32_0 = arith.constant 0 : i32
    %c0_i32_1 = arith.constant 0 : i32
    return %c0_i32, %c0_i32_0 : i32, i32
  }
  func.func @transform_6(%arg0: i32) -> (i32, i32) {
    %c0_i32 = arith.constant 0 : i32
    %c0_i32_0 = arith.constant 0 : i32
    %c0_i32_1 = arith.constant 0 : i32
    return %c0_i32, %c0_i32_0 : i32, i32
  }
  func.func @transform_7(%arg0: i32) -> (i32, i32) {
    %c0_i32 = arith.constant 0 : i32
    %c0_i32_0 = arith.constant 0 : i32
    return %arg0, %c0_i32 : i32, i32
  }
}

module attributes {stable_mosaic.version = 11 : i64} {
  func.func @_ln_linear_kernel(%arg0: i32, %arg1: memref<10x32xf32, #tpu.memory_space<vmem>>, %arg2: memref<1x32xf32, #tpu.memory_space<vmem>>, %arg3: memref<1x32xf32, #tpu.memory_space<vmem>>, %arg4: memref<32x40xbf16, #tpu.memory_space<vmem>>, %arg5: memref<1x40xf32, #tpu.memory_space<vmem>>, %arg6: memref<10x32xbf16, #tpu.memory_space<vmem>>, %arg7: memref<10x40xbf16, #tpu.memory_space<vmem>>) attributes {dimension_semantics = [#tpu.dimension_semantics<parallel>], iteration_bounds = array<i64: 1>, scalar_prefetch = 0 : i64, scratch_operands = 0 : i64, tpu.core_type = #tpu.core_type<tc>, window_params = [{transform_indices = @transform_0, window_bounds = array<i64: 10, 32>}, {pipeline_mode = #tpu.pipeline_mode<synchronous>, transform_indices = @transform_1, window_bounds = array<i64: 1, 32>}, {pipeline_mode = #tpu.pipeline_mode<synchronous>, transform_indices = @transform_2, window_bounds = array<i64: 1, 32>}, {pipeline_mode = #tpu.pipeline_mode<synchronous>, transform_indices = @transform_3, window_bounds = array<i64: 32, 40>}, {pipeline_mode = #tpu.pipeline_mode<synchronous>, transform_indices = @transform_4, window_bounds = array<i64: 1, 40>}, {transform_indices = @transform_5, window_bounds = array<i64: 10, 32>}, {transform_indices = @transform_6, window_bounds = array<i64: 10, 40>}]} {
    %c0 = arith.constant 0 : index
    %c0_0 = arith.constant 0 : index
    %0 = vector.load %arg1[%c0, %c0_0] : memref<10x32xf32, #tpu.memory_space<vmem>>, vector<10x32xf32>
    %c0_1 = arith.constant 0 : index
    %c0_2 = arith.constant 0 : index
    %1 = vector.load %arg2[%c0_1, %c0_2] : memref<1x32xf32, #tpu.memory_space<vmem>>, vector<1x32xf32>
    %c0_3 = arith.constant 0 : index
    %c0_4 = arith.constant 0 : index
    %2 = vector.load %arg3[%c0_3, %c0_4] : memref<1x32xf32, #tpu.memory_space<vmem>>, vector<1x32xf32>
    %cst = arith.constant dense<0.000000e+00> : vector<10xf32>
    %3 = vector.multi_reduction <add>, %0, %cst [1] : vector<10x32xf32> to vector<10xf32>
    %4 = vector.shape_cast %3 : vector<10xf32> to vector<10x1xf32>
    %cst_5 = arith.constant 3.200000e+01 : f32
    %5 = vector.broadcast %cst_5 : f32 to vector<10x1xf32>
    %6 = arith.divf %4, %5 : vector<10x1xf32>
    %7 = vector.broadcast %6 : vector<10x1xf32> to vector<10x32xf32>
    %8 = arith.subf %0, %7 : vector<10x32xf32>
    %9 = arith.mulf %8, %8 : vector<10x32xf32>
    %cst_6 = arith.constant dense<0.000000e+00> : vector<10xf32>
    %10 = vector.multi_reduction <add>, %9, %cst_6 [1] : vector<10x32xf32> to vector<10xf32>
    %11 = vector.shape_cast %10 : vector<10xf32> to vector<10x1xf32>
    %cst_7 = arith.constant 3.200000e+01 : f32
    %12 = vector.broadcast %cst_7 : f32 to vector<10x1xf32>
    %13 = arith.divf %11, %12 : vector<10x1xf32>
    %14 = vector.broadcast %6 : vector<10x1xf32> to vector<10x32xf32>
    %15 = arith.subf %0, %14 : vector<10x32xf32>
    %cst_8 = arith.constant 9.99999974E-6 : f32
    %16 = vector.broadcast %cst_8 : f32 to vector<10x1xf32>
    %17 = arith.addf %13, %16 : vector<10x1xf32>
    %18 = math.rsqrt %17 : vector<10x1xf32>
    %19 = vector.broadcast %18 : vector<10x1xf32> to vector<10x32xf32>
    %20 = arith.mulf %15, %19 : vector<10x32xf32>
    %21 = vector.broadcast %1 : vector<1x32xf32> to vector<10x32xf32>
    %22 = arith.mulf %20, %21 : vector<10x32xf32>
    %23 = vector.broadcast %2 : vector<1x32xf32> to vector<10x32xf32>
    %24 = arith.addf %22, %23 : vector<10x32xf32>
    %25 = arith.truncf %24 : vector<10x32xf32> to vector<10x32xbf16>
    %c0_9 = arith.constant 0 : index
    %c0_10 = arith.constant 0 : index
    %26 = vector.load %arg6[%c0_9, %c0_10] : memref<10x32xbf16, #tpu.memory_space<vmem>>, vector<10x32xbf16>
    tpu.vector_store %arg6[%c0_9, %c0_10], %25 {strides = array<i32>} : memref<10x32xbf16, #tpu.memory_space<vmem>>, vector<10x32xbf16>,
    %c0_11 = arith.constant 0 : index
    %c0_12 = arith.constant 0 : index
    %27 = vector.load %arg4[%c0_11, %c0_12] : memref<32x40xbf16, #tpu.memory_space<vmem>>, vector<32x40xbf16>
    %cst_13 = arith.constant dense<0.000000e+00> : vector<10x40xf32>
    %28 = tpu.matmul %25, %27, %cst_13 {dimension_numbers = #tpu.dot_dimension_numbers<[1], [0], [0], [1], [0, 0, 1, 1], [], []>} : vector<10x32xbf16>, vector<32x40xbf16>, vector<10x40xf32> -> vector<10x40xf32>
    %c0_14 = arith.constant 0 : index
    %c0_15 = arith.constant 0 : index
    %29 = vector.load %arg5[%c0_14, %c0_15] : memref<1x40xf32, #tpu.memory_space<vmem>>, vector<1x40xf32>
    %30 = vector.broadcast %29 : vector<1x40xf32> to vector<10x40xf32>
    %31 = arith.addf %28, %30 : vector<10x40xf32>
    %32 = arith.truncf %31 : vector<10x40xf32> to vector<10x40xbf16>
    %c0_16 = arith.constant 0 : index
    %c0_17 = arith.constant 0 : index
    %33 = vector.load %arg7[%c0_16, %c0_17] : memref<10x40xbf16, #tpu.memory_space<vmem>>, vector<10x40xbf16>
    tpu.vector_store %arg7[%c0_16, %c0_17], %32 {strides = array<i32>} : memref<10x40xbf16, #tpu.memory_space<vmem>>, vector<10x40xbf16>,
    return
  }
  func.func @transform_0(%arg0: i32) -> (i32, i32) {
    %c0_i32 = arith.constant 0 : i32
    %c0_i32_0 = arith.constant 0 : i32
    return %arg0, %c0_i32 : i32, i32
  }
  func.func @transform_1(%arg0: i32) -> (i32, i32) {
    %c0_i32 = arith.constant 0 : i32
    %c0_i32_0 = arith.constant 0 : i32
    %c0_i32_1 = arith.constant 0 : i32
    return %c0_i32, %c0_i32_0 : i32, i32
  }
  func.func @transform_2(%arg0: i32) -> (i32, i32) {
    %c0_i32 = arith.constant 0 : i32
    %c0_i32_0 = arith.constant 0 : i32
    %c0_i32_1 = arith.constant 0 : i32
    return %c0_i32, %c0_i32_0 : i32, i32
  }
  func.func @transform_3(%arg0: i32) -> (i32, i32) {
    %c0_i32 = arith.constant 0 : i32
    %c0_i32_0 = arith.constant 0 : i32
    %c0_i32_1 = arith.constant 0 : i32
    return %c0_i32, %c0_i32_0 : i32, i32
  }
  func.func @transform_4(%arg0: i32) -> (i32, i32) {
    %c0_i32 = arith.constant 0 : i32
    %c0_i32_0 = arith.constant 0 : i32
    %c0_i32_1 = arith.constant 0 : i32
    return %c0_i32, %c0_i32_0 : i32, i32
  }
  func.func @transform_5(%arg0: i32) -> (i32, i32) {
    %c0_i32 = arith.constant 0 : i32
    %c0_i32_0 = arith.constant 0 : i32
    return %arg0, %c0_i32 : i32, i32
  }
  func.func @transform_6(%arg0: i32) -> (i32, i32) {
    %c0_i32 = arith.constant 0 : i32
    %c0_i32_0 = arith.constant 0 : i32
    return %arg0, %c0_i32 : i32, i32
  }
}

module attributes {stable_mosaic.version = 11 : i64} {
  func.func @_moe_matmul_kernel(%arg0: i32, %arg1: i32, %arg2: memref<10x32xbf16, #tpu.memory_space<vmem>>, %arg3: memref<1x10x16xbf16, #tpu.memory_space<vmem>>, %arg4: memref<1x32x16xbf16, #tpu.memory_space<vmem>>, %arg5: memref<10x16xbf16, #tpu.memory_space<vmem>>, %arg6: memref<10x16xf32, #tpu.memory_space<vmem>>) attributes {dimension_semantics = [#tpu.dimension_semantics<parallel>, #tpu.dimension_semantics<arbitrary>], iteration_bounds = array<i64: 1, 4>, scalar_prefetch = 0 : i64, scratch_operands = 1 : i64, tpu.core_type = #tpu.core_type<tc>, window_params = [{transform_indices = @transform_0, window_bounds = array<i64: 10, 32>}, {transform_indices = @transform_1, window_bounds = array<i64: 1, 10, 16>}, {transform_indices = @transform_2, window_bounds = array<i64: 1, 32, 16>}, {transform_indices = @transform_3, window_bounds = array<i64: 10, 16>}]} {
    %c0_i32 = arith.constant 0 : i32
    %0 = arith.cmpi eq, %arg1, %c0_i32 : i32
    %1 = arith.extui %0 : i1 to i32
    %c0_i32_0 = arith.constant 0 : i32
    %2 = arith.cmpi ne, %1, %c0_i32_0 : i32
    scf.if %2 {
      %cst_13 = arith.constant 0.000000e+00 : f32
      %17 = vector.broadcast %cst_13 : f32 to vector<10x16xf32>
      %c0_14 = arith.constant 0 : index
      %c0_15 = arith.constant 0 : index
      %18 = vector.load %arg6[%c0_14, %c0_15] : memref<10x16xf32, #tpu.memory_space<vmem>>, vector<10x16xf32>
      tpu.vector_store %arg6[%c0_14, %c0_15], %17 {strides = array<i32>} : memref<10x16xf32, #tpu.memory_space<vmem>>, vector<10x16xf32>,
    } else {
    }
    %c0 = arith.constant 0 : index
    %c0_1 = arith.constant 0 : index
    %c0_2 = arith.constant 0 : index
    %3 = vector.load %arg3[%c0, %c0_1, %c0_2] : memref<1x10x16xbf16, #tpu.memory_space<vmem>>, vector<1x10x16xbf16>
    %4 = vector.shape_cast %3 : vector<1x10x16xbf16> to vector<10x16xbf16>
    %5 = arith.extf %4 : vector<10x16xbf16> to vector<10x16xf32>
    %c0_3 = arith.constant 0 : index
    %c0_4 = arith.constant 0 : index
    %6 = vector.load %arg2[%c0_3, %c0_4] : memref<10x32xbf16, #tpu.memory_space<vmem>>, vector<10x32xbf16>
    %c0_5 = arith.constant 0 : index
    %c0_6 = arith.constant 0 : index
    %c0_7 = arith.constant 0 : index
    %7 = vector.load %arg4[%c0_5, %c0_6, %c0_7] : memref<1x32x16xbf16, #tpu.memory_space<vmem>>, vector<1x32x16xbf16>
    %8 = vector.shape_cast %7 : vector<1x32x16xbf16> to vector<32x16xbf16>
    %cst = arith.constant dense<0.000000e+00> : vector<10x16xf32>
    %9 = tpu.matmul %6, %8, %cst {dimension_numbers = #tpu.dot_dimension_numbers<[1], [0], [0], [1], [0, 0, 1, 1], [], []>} : vector<10x32xbf16>, vector<32x16xbf16>, vector<10x16xf32> -> vector<10x16xf32>
    %c0_8 = arith.constant 0 : index
    %c0_9 = arith.constant 0 : index
    %10 = vector.load %arg6[%c0_8, %c0_9] : memref<10x16xf32, #tpu.memory_space<vmem>>, vector<10x16xf32>
    %11 = arith.mulf %5, %9 : vector<10x16xf32>
    %12 = arith.addf %10, %11 : vector<10x16xf32>
    %c0_10 = arith.constant 0 : index
    %c0_11 = arith.constant 0 : index
    %13 = vector.load %arg6[%c0_10, %c0_11] : memref<10x16xf32, #tpu.memory_space<vmem>>, vector<10x16xf32>
    tpu.vector_store %arg6[%c0_10, %c0_11], %12 {strides = array<i32>} : memref<10x16xf32, #tpu.memory_space<vmem>>, vector<10x16xf32>,
    %c3_i32 = arith.constant 3 : i32
    %14 = arith.cmpi eq, %arg1, %c3_i32 : i32
    %15 = arith.extui %14 : i1 to i32
    %c0_i32_12 = arith.constant 0 : i32
    %16 = arith.cmpi ne, %15, %c0_i32_12 : i32
    scf.if %16 {
      %c0_13 = arith.constant 0 : index
      %c0_14 = arith.constant 0 : index
      %17 = vector.load %arg6[%c0_13, %c0_14] : memref<10x16xf32, #tpu.memory_space<vmem>>, vector<10x16xf32>
      %18 = arith.truncf %17 : vector<10x16xf32> to vector<10x16xbf16>
      %c0_15 = arith.constant 0 : index
      %c0_16 = arith.constant 0 : index
      %19 = vector.load %arg5[%c0_15, %c0_16] : memref<10x16xbf16, #tpu.memory_space<vmem>>, vector<10x16xbf16>
      tpu.vector_store %arg5[%c0_15, %c0_16], %18 {strides = array<i32>} : memref<10x16xbf16, #tpu.memory_space<vmem>>, vector<10x16xbf16>,
    } else {
    }
    return
  }
  func.func @transform_0(%arg0: i32, %arg1: i32) -> (i32, i32) {
    %c0_i32 = arith.constant 0 : i32
    %c0_i32_0 = arith.constant 0 : i32
    return %arg0, %c0_i32 : i32, i32
  }
  func.func @transform_1(%arg0: i32, %arg1: i32) -> (i32, i32, i32) {
    %c0_i32 = arith.constant 0 : i32
    %c0_i32_0 = arith.constant 0 : i32
    return %arg1, %arg0, %c0_i32 : i32, i32, i32
  }
  func.func @transform_2(%arg0: i32, %arg1: i32) -> (i32, i32, i32) {
    %c0_i32 = arith.constant 0 : i32
    %c0_i32_0 = arith.constant 0 : i32
    %c0_i32_1 = arith.constant 0 : i32
    return %arg1, %c0_i32, %c0_i32_0 : i32, i32, i32
  }
  func.func @transform_3(%arg0: i32, %arg1: i32) -> (i32, i32) {
    %c0_i32 = arith.constant 0 : i32
    %c0_i32_0 = arith.constant 0 : i32
    return %arg0, %c0_i32 : i32, i32
  }
}

module attributes {stable_mosaic.version = 11 : i64} {
  func.func @_attention_kernel(%arg0: i32, %arg1: memref<1x5x16xbf16, #tpu.memory_space<vmem>>, %arg2: memref<1x5x16xbf16, #tpu.memory_space<vmem>>, %arg3: memref<1x5x16xbf16, #tpu.memory_space<vmem>>, %arg4: memref<1x5x16xbf16, #tpu.memory_space<vmem>>) attributes {dimension_semantics = [#tpu.dimension_semantics<parallel>], iteration_bounds = array<i64: 2>, scalar_prefetch = 0 : i64, scratch_operands = 0 : i64, tpu.core_type = #tpu.core_type<tc>, window_params = [{transform_indices = @transform_0, window_bounds = array<i64: 1, 5, 16>}, {transform_indices = @transform_1, window_bounds = array<i64: 1, 5, 16>}, {transform_indices = @transform_2, window_bounds = array<i64: 1, 5, 16>}, {transform_indices = @transform_3, window_bounds = array<i64: 1, 5, 16>}]} {
    %c0 = arith.constant 0 : index
    %c0_0 = arith.constant 0 : index
    %c0_1 = arith.constant 0 : index
    %0 = vector.load %arg1[%c0, %c0_0, %c0_1] : memref<1x5x16xbf16, #tpu.memory_space<vmem>>, vector<1x5x16xbf16>
    %1 = vector.shape_cast %0 : vector<1x5x16xbf16> to vector<5x16xbf16>
    %c0_2 = arith.constant 0 : index
    %c0_3 = arith.constant 0 : index
    %c0_4 = arith.constant 0 : index
    %2 = vector.load %arg2[%c0_2, %c0_3, %c0_4] : memref<1x5x16xbf16, #tpu.memory_space<vmem>>, vector<1x5x16xbf16>
    %3 = vector.shape_cast %2 : vector<1x5x16xbf16> to vector<5x16xbf16>
    %c0_5 = arith.constant 0 : index
    %c0_6 = arith.constant 0 : index
    %c0_7 = arith.constant 0 : index
    %4 = vector.load %arg3[%c0_5, %c0_6, %c0_7] : memref<1x5x16xbf16, #tpu.memory_space<vmem>>, vector<1x5x16xbf16>
    %5 = vector.shape_cast %4 : vector<1x5x16xbf16> to vector<5x16xbf16>
    %6 = vector.extract_strided_slice %1 {offsets = [0, 0], sizes = [5, 8], strides = [1, 1]} : vector<5x16xbf16> to vector<5x8xbf16>
    %7 = vector.extract_strided_slice %3 {offsets = [0, 0], sizes = [5, 8], strides = [1, 1]} : vector<5x16xbf16> to vector<5x8xbf16>
    %8 = vector.extract_strided_slice %5 {offsets = [0, 0], sizes = [5, 8], strides = [1, 1]} : vector<5x16xbf16> to vector<5x8xbf16>
    %cst = arith.constant dense<0.000000e+00> : vector<5x5xf32>
    %9 = tpu.matmul %6, %7, %cst {dimension_numbers = #tpu.dot_dimension_numbers<[1], [1], [0], [0], [0, 0, 1, 0], [], []>} : vector<5x8xbf16>, vector<5x8xbf16>, vector<5x5xf32> -> vector<5x5xf32>
    %cst_8 = arith.constant 0.353553385 : f32
    %10 = vector.broadcast %cst_8 : f32 to vector<5x5xf32>
    %11 = arith.mulf %9, %10 : vector<5x5xf32>
    %cst_9 = arith.constant dense<0xFF800000> : vector<5xf32>
    %12 = vector.multi_reduction <maximumf>, %11, %cst_9 [1] : vector<5x5xf32> to vector<5xf32>
    %13 = vector.shape_cast %12 : vector<5xf32> to vector<5x1xf32>
    %14 = vector.broadcast %13 : vector<5x1xf32> to vector<5x5xf32>
    %15 = arith.subf %11, %14 : vector<5x5xf32>
    %16 = math.exp %15 : vector<5x5xf32>
    %cst_10 = arith.constant dense<0.000000e+00> : vector<5xf32>
    %17 = vector.multi_reduction <add>, %16, %cst_10 [1] : vector<5x5xf32> to vector<5xf32>
    %18 = vector.shape_cast %17 : vector<5xf32> to vector<5x1xf32>
    %19 = tpu.reciprocal %18 {approx = true} : vector<5x1xf32> -> vector<5x1xf32>
    %20 = vector.broadcast %19 : vector<5x1xf32> to vector<5x5xf32>
    %21 = arith.mulf %16, %20 : vector<5x5xf32>
    %22 = arith.truncf %21 : vector<5x5xf32> to vector<5x5xbf16>
    %cst_11 = arith.constant dense<0.000000e+00> : vector<5x8xf32>
    %23 = tpu.matmul %22, %8, %cst_11 {dimension_numbers = #tpu.dot_dimension_numbers<[1], [0], [0], [1], [0, 0, 1, 1], [], []>} : vector<5x5xbf16>, vector<5x8xbf16>, vector<5x8xf32> -> vector<5x8xf32>
    %24 = vector.extract_strided_slice %1 {offsets = [0, 8], sizes = [5, 8], strides = [1, 1]} : vector<5x16xbf16> to vector<5x8xbf16>
    %25 = vector.extract_strided_slice %3 {offsets = [0, 8], sizes = [5, 8], strides = [1, 1]} : vector<5x16xbf16> to vector<5x8xbf16>
    %26 = vector.extract_strided_slice %5 {offsets = [0, 8], sizes = [5, 8], strides = [1, 1]} : vector<5x16xbf16> to vector<5x8xbf16>
    %cst_12 = arith.constant dense<0.000000e+00> : vector<5x5xf32>
    %27 = tpu.matmul %24, %25, %cst_12 {dimension_numbers = #tpu.dot_dimension_numbers<[1], [1], [0], [0], [0, 0, 1, 0], [], []>} : vector<5x8xbf16>, vector<5x8xbf16>, vector<5x5xf32> -> vector<5x5xf32>
    %cst_13 = arith.constant 0.353553385 : f32
    %28 = vector.broadcast %cst_13 : f32 to vector<5x5xf32>
    %29 = arith.mulf %27, %28 : vector<5x5xf32>
    %cst_14 = arith.constant dense<0xFF800000> : vector<5xf32>
    %30 = vector.multi_reduction <maximumf>, %29, %cst_14 [1] : vector<5x5xf32> to vector<5xf32>
    %31 = vector.shape_cast %30 : vector<5xf32> to vector<5x1xf32>
    %32 = vector.broadcast %31 : vector<5x1xf32> to vector<5x5xf32>
    %33 = arith.subf %29, %32 : vector<5x5xf32>
    %34 = math.exp %33 : vector<5x5xf32>
    %cst_15 = arith.constant dense<0.000000e+00> : vector<5xf32>
    %35 = vector.multi_reduction <add>, %34, %cst_15 [1] : vector<5x5xf32> to vector<5xf32>
    %36 = vector.shape_cast %35 : vector<5xf32> to vector<5x1xf32>
    %37 = tpu.reciprocal %36 {approx = true} : vector<5x1xf32> -> vector<5x1xf32>
    %38 = vector.broadcast %37 : vector<5x1xf32> to vector<5x5xf32>
    %39 = arith.mulf %34, %38 : vector<5x5xf32>
    %40 = arith.truncf %39 : vector<5x5xf32> to vector<5x5xbf16>
    %cst_16 = arith.constant dense<0.000000e+00> : vector<5x8xf32>
    %41 = tpu.matmul %40, %26, %cst_16 {dimension_numbers = #tpu.dot_dimension_numbers<[1], [0], [0], [1], [0, 0, 1, 1], [], []>} : vector<5x5xbf16>, vector<5x8xbf16>, vector<5x8xf32> -> vector<5x8xf32>
    %42 = tpu.concatenate %23, %41 in 1 : vector<5x8xf32>, vector<5x8xf32> -> vector<5x16xf32>
    %43 = arith.truncf %42 : vector<5x16xf32> to vector<5x16xbf16>
    %c0_17 = arith.constant 0 : index
    %c0_18 = arith.constant 0 : index
    %c0_19 = arith.constant 0 : index
    %44 = vector.load %arg4[%c0_17, %c0_18, %c0_19] : memref<1x5x16xbf16, #tpu.memory_space<vmem>>, vector<1x5x16xbf16>
    %45 = vector.shape_cast %44 : vector<1x5x16xbf16> to vector<5x16xbf16>
    %46 = vector.shape_cast %43 : vector<5x16xbf16> to vector<1x5x16xbf16>
    tpu.vector_store %arg4[%c0_17, %c0_18, %c0_19], %46 {strides = array<i32>} : memref<1x5x16xbf16, #tpu.memory_space<vmem>>, vector<1x5x16xbf16>,
    return
  }
  func.func @transform_0(%arg0: i32) -> (i32, i32, i32) {
    %c0_i32 = arith.constant 0 : i32
    %c0_i32_0 = arith.constant 0 : i32
    %c0_i32_1 = arith.constant 0 : i32
    return %arg0, %c0_i32, %c0_i32_0 : i32, i32, i32
  }
  func.func @transform_1(%arg0: i32) -> (i32, i32, i32) {
    %c0_i32 = arith.constant 0 : i32
    %c0_i32_0 = arith.constant 0 : i32
    %c0_i32_1 = arith.constant 0 : i32
    return %arg0, %c0_i32, %c0_i32_0 : i32, i32, i32
  }
  func.func @transform_2(%arg0: i32) -> (i32, i32, i32) {
    %c0_i32 = arith.constant 0 : i32
    %c0_i32_0 = arith.constant 0 : i32
    %c0_i32_1 = arith.constant 0 : i32
    return %arg0, %c0_i32, %c0_i32_0 : i32, i32, i32
  }
  func.func @transform_3(%arg0: i32) -> (i32, i32, i32) {
    %c0_i32 = arith.constant 0 : i32
    %c0_i32_0 = arith.constant 0 : i32
    %c0_i32_1 = arith.constant 0 : i32
    return %arg0, %c0_i32, %c0_i32_0 : i32, i32, i32
  }
}

module attributes {stable_mosaic.version = 11 : i64} {
  func.func @_moe_matmul_kernel(%arg0: i32, %arg1: i32, %arg2: memref<10x16xbf16, #tpu.memory_space<vmem>>, %arg3: memref<1x10x16xbf16, #tpu.memory_space<vmem>>, %arg4: memref<1x16x32xbf16, #tpu.memory_space<vmem>>, %arg5: memref<10x32xf32, #tpu.memory_space<vmem>>, %arg6: memref<10x32xf32, #tpu.memory_space<vmem>>) attributes {dimension_semantics = [#tpu.dimension_semantics<parallel>, #tpu.dimension_semantics<arbitrary>], iteration_bounds = array<i64: 1, 4>, scalar_prefetch = 0 : i64, scratch_operands = 1 : i64, tpu.core_type = #tpu.core_type<tc>, window_params = [{transform_indices = @transform_0, window_bounds = array<i64: 10, 16>}, {transform_indices = @transform_1, window_bounds = array<i64: 1, 10, 16>}, {transform_indices = @transform_2, window_bounds = array<i64: 1, 16, 32>}, {transform_indices = @transform_3, window_bounds = array<i64: 10, 32>}]} {
    %c0_i32 = arith.constant 0 : i32
    %0 = arith.cmpi eq, %arg1, %c0_i32 : i32
    %1 = arith.extui %0 : i1 to i32
    %c0_i32_0 = arith.constant 0 : i32
    %2 = arith.cmpi ne, %1, %c0_i32_0 : i32
    scf.if %2 {
      %cst_13 = arith.constant 0.000000e+00 : f32
      %19 = vector.broadcast %cst_13 : f32 to vector<10x32xf32>
      %c0_14 = arith.constant 0 : index
      %c0_15 = arith.constant 0 : index
      %20 = vector.load %arg6[%c0_14, %c0_15] : memref<10x32xf32, #tpu.memory_space<vmem>>, vector<10x32xf32>
      tpu.vector_store %arg6[%c0_14, %c0_15], %19 {strides = array<i32>} : memref<10x32xf32, #tpu.memory_space<vmem>>, vector<10x32xf32>,
    } else {
    }
    %c0 = arith.constant 0 : index
    %c0_1 = arith.constant 0 : index
    %c0_2 = arith.constant 0 : index
    %3 = vector.load %arg3[%c0, %c0_1, %c0_2] : memref<1x10x16xbf16, #tpu.memory_space<vmem>>, vector<1x10x16xbf16>
    %4 = vector.shape_cast %3 : vector<1x10x16xbf16> to vector<10x16xbf16>
    %5 = arith.extf %4 : vector<10x16xbf16> to vector<10x16xf32>
    %c0_3 = arith.constant 0 : index
    %c0_4 = arith.constant 0 : index
    %6 = vector.load %arg2[%c0_3, %c0_4] : memref<10x16xbf16, #tpu.memory_space<vmem>>, vector<10x16xbf16>
    %7 = arith.extf %6 : vector<10x16xbf16> to vector<10x16xf32>
    %8 = arith.mulf %7, %5 : vector<10x16xf32>
    %9 = arith.truncf %8 : vector<10x16xf32> to vector<10x16xbf16>
    %c0_5 = arith.constant 0 : index
    %c0_6 = arith.constant 0 : index
    %10 = vector.load %arg6[%c0_5, %c0_6] : memref<10x32xf32, #tpu.memory_space<vmem>>, vector<10x32xf32>
    %c0_7 = arith.constant 0 : index
    %c0_8 = arith.constant 0 : index
    %c0_9 = arith.constant 0 : index
    %11 = vector.load %arg4[%c0_7, %c0_8, %c0_9] : memref<1x16x32xbf16, #tpu.memory_space<vmem>>, vector<1x16x32xbf16>
    %12 = vector.shape_cast %11 : vector<1x16x32xbf16> to vector<16x32xbf16>
    %cst = arith.constant dense<0.000000e+00> : vector<10x32xf32>
    %13 = tpu.matmul %9, %12, %cst {dimension_numbers = #tpu.dot_dimension_numbers<[1], [0], [0], [1], [0, 0, 1, 1], [], []>} : vector<10x16xbf16>, vector<16x32xbf16>, vector<10x32xf32> -> vector<10x32xf32>
    %14 = arith.addf %10, %13 : vector<10x32xf32>
    %c0_10 = arith.constant 0 : index
    %c0_11 = arith.constant 0 : index
    %15 = vector.load %arg6[%c0_10, %c0_11] : memref<10x32xf32, #tpu.memory_space<vmem>>, vector<10x32xf32>
    tpu.vector_store %arg6[%c0_10, %c0_11], %14 {strides = array<i32>} : memref<10x32xf32, #tpu.memory_space<vmem>>, vector<10x32xf32>,
    %c3_i32 = arith.constant 3 : i32
    %16 = arith.cmpi eq, %arg1, %c3_i32 : i32
    %17 = arith.extui %16 : i1 to i32
    %c0_i32_12 = arith.constant 0 : i32
    %18 = arith.cmpi ne, %17, %c0_i32_12 : i32
    scf.if %18 {
      %c0_13 = arith.constant 0 : index
      %c0_14 = arith.constant 0 : index
      %19 = vector.load %arg6[%c0_13, %c0_14] : memref<10x32xf32, #tpu.memory_space<vmem>>, vector<10x32xf32>
      %c0_15 = arith.constant 0 : index
      %c0_16 = arith.constant 0 : index
      %20 = vector.load %arg5[%c0_15, %c0_16] : memref<10x32xf32, #tpu.memory_space<vmem>>, vector<10x32xf32>
      tpu.vector_store %arg5[%c0_15, %c0_16], %19 {strides = array<i32>} : memref<10x32xf32, #tpu.memory_space<vmem>>, vector<10x32xf32>,
    } else {
    }
    return
  }
  func.func @transform_0(%arg0: i32, %arg1: i32) -> (i32, i32) {
    %c0_i32 = arith.constant 0 : i32
    %c0_i32_0 = arith.constant 0 : i32
    return %arg0, %c0_i32 : i32, i32
  }
  func.func @transform_1(%arg0: i32, %arg1: i32) -> (i32, i32, i32) {
    %c0_i32 = arith.constant 0 : i32
    %c0_i32_0 = arith.constant 0 : i32
    return %arg1, %arg0, %c0_i32 : i32, i32, i32
  }
  func.func @transform_2(%arg0: i32, %arg1: i32) -> (i32, i32, i32) {
    %c0_i32 = arith.constant 0 : i32
    %c0_i32_0 = arith.constant 0 : i32
    %c0_i32_1 = arith.constant 0 : i32
    return %arg1, %c0_i32, %c0_i32_0 : i32, i32, i32
  }
  func.func @transform_3(%arg0: i32, %arg1: i32) -> (i32, i32) {
    %c0_i32 = arith.constant 0 : i32
    %c0_i32_0 = arith.constant 0 : i32
    return %arg0, %c0_i32 : i32, i32
  }
}

module attributes {stable_mosaic.version = 11 : i64} {
  func.func @_ln_linear_kernel(%arg0: i32, %arg1: memref<10x32xf32, #tpu.memory_space<vmem>>, %arg2: memref<1x32xf32, #tpu.memory_space<vmem>>, %arg3: memref<1x32xf32, #tpu.memory_space<vmem>>, %arg4: memref<32x4xbf16, #tpu.memory_space<vmem>>, %arg5: memref<1x4xf32, #tpu.memory_space<vmem>>, %arg6: memref<10x32xbf16, #tpu.memory_space<vmem>>, %arg7: memref<10x4xf32, #tpu.memory_space<vmem>>) attributes {dimension_semantics = [#tpu.dimension_semantics<parallel>], iteration_bounds = array<i64: 1>, scalar_prefetch = 0 : i64, scratch_operands = 0 : i64, tpu.core_type = #tpu.core_type<tc>, window_params = [{transform_indices = @transform_0, window_bounds = array<i64: 10, 32>}, {pipeline_mode = #tpu.pipeline_mode<synchronous>, transform_indices = @transform_1, window_bounds = array<i64: 1, 32>}, {pipeline_mode = #tpu.pipeline_mode<synchronous>, transform_indices = @transform_2, window_bounds = array<i64: 1, 32>}, {pipeline_mode = #tpu.pipeline_mode<synchronous>, transform_indices = @transform_3, window_bounds = array<i64: 32, 4>}, {pipeline_mode = #tpu.pipeline_mode<synchronous>, transform_indices = @transform_4, window_bounds = array<i64: 1, 4>}, {transform_indices = @transform_5, window_bounds = array<i64: 10, 32>}, {transform_indices = @transform_6, window_bounds = array<i64: 10, 4>}]} {
    %c0 = arith.constant 0 : index
    %c0_0 = arith.constant 0 : index
    %0 = vector.load %arg1[%c0, %c0_0] : memref<10x32xf32, #tpu.memory_space<vmem>>, vector<10x32xf32>
    %c0_1 = arith.constant 0 : index
    %c0_2 = arith.constant 0 : index
    %1 = vector.load %arg2[%c0_1, %c0_2] : memref<1x32xf32, #tpu.memory_space<vmem>>, vector<1x32xf32>
    %c0_3 = arith.constant 0 : index
    %c0_4 = arith.constant 0 : index
    %2 = vector.load %arg3[%c0_3, %c0_4] : memref<1x32xf32, #tpu.memory_space<vmem>>, vector<1x32xf32>
    %cst = arith.constant dense<0.000000e+00> : vector<10xf32>
    %3 = vector.multi_reduction <add>, %0, %cst [1] : vector<10x32xf32> to vector<10xf32>
    %4 = vector.shape_cast %3 : vector<10xf32> to vector<10x1xf32>
    %cst_5 = arith.constant 3.200000e+01 : f32
    %5 = vector.broadcast %cst_5 : f32 to vector<10x1xf32>
    %6 = arith.divf %4, %5 : vector<10x1xf32>
    %7 = vector.broadcast %6 : vector<10x1xf32> to vector<10x32xf32>
    %8 = arith.subf %0, %7 : vector<10x32xf32>
    %9 = arith.mulf %8, %8 : vector<10x32xf32>
    %cst_6 = arith.constant dense<0.000000e+00> : vector<10xf32>
    %10 = vector.multi_reduction <add>, %9, %cst_6 [1] : vector<10x32xf32> to vector<10xf32>
    %11 = vector.shape_cast %10 : vector<10xf32> to vector<10x1xf32>
    %cst_7 = arith.constant 3.200000e+01 : f32
    %12 = vector.broadcast %cst_7 : f32 to vector<10x1xf32>
    %13 = arith.divf %11, %12 : vector<10x1xf32>
    %14 = vector.broadcast %6 : vector<10x1xf32> to vector<10x32xf32>
    %15 = arith.subf %0, %14 : vector<10x32xf32>
    %cst_8 = arith.constant 9.99999974E-6 : f32
    %16 = vector.broadcast %cst_8 : f32 to vector<10x1xf32>
    %17 = arith.addf %13, %16 : vector<10x1xf32>
    %18 = math.rsqrt %17 : vector<10x1xf32>
    %19 = vector.broadcast %18 : vector<10x1xf32> to vector<10x32xf32>
    %20 = arith.mulf %15, %19 : vector<10x32xf32>
    %21 = vector.broadcast %1 : vector<1x32xf32> to vector<10x32xf32>
    %22 = arith.mulf %20, %21 : vector<10x32xf32>
    %23 = vector.broadcast %2 : vector<1x32xf32> to vector<10x32xf32>
    %24 = arith.addf %22, %23 : vector<10x32xf32>
    %25 = arith.truncf %24 : vector<10x32xf32> to vector<10x32xbf16>
    %c0_9 = arith.constant 0 : index
    %c0_10 = arith.constant 0 : index
    %26 = vector.load %arg6[%c0_9, %c0_10] : memref<10x32xbf16, #tpu.memory_space<vmem>>, vector<10x32xbf16>
    tpu.vector_store %arg6[%c0_9, %c0_10], %25 {strides = array<i32>} : memref<10x32xbf16, #tpu.memory_space<vmem>>, vector<10x32xbf16>,
    %c0_11 = arith.constant 0 : index
    %c0_12 = arith.constant 0 : index
    %27 = vector.load %arg4[%c0_11, %c0_12] : memref<32x4xbf16, #tpu.memory_space<vmem>>, vector<32x4xbf16>
    %cst_13 = arith.constant dense<0.000000e+00> : vector<10x4xf32>
    %28 = tpu.matmul %25, %27, %cst_13 {dimension_numbers = #tpu.dot_dimension_numbers<[1], [0], [0], [1], [0, 0, 1, 1], [], []>} : vector<10x32xbf16>, vector<32x4xbf16>, vector<10x4xf32> -> vector<10x4xf32>
    %c0_14 = arith.constant 0 : index
    %c0_15 = arith.constant 0 : index
    %29 = vector.load %arg5[%c0_14, %c0_15] : memref<1x4xf32, #tpu.memory_space<vmem>>, vector<1x4xf32>
    %30 = vector.broadcast %29 : vector<1x4xf32> to vector<10x4xf32>
    %31 = arith.addf %28, %30 : vector<10x4xf32>
    %c0_16 = arith.constant 0 : index
    %c0_17 = arith.constant 0 : index
    %32 = vector.load %arg7[%c0_16, %c0_17] : memref<10x4xf32, #tpu.memory_space<vmem>>, vector<10x4xf32>
    tpu.vector_store %arg7[%c0_16, %c0_17], %31 {strides = array<i32>} : memref<10x4xf32, #tpu.memory_space<vmem>>, vector<10x4xf32>,
    return
  }
  func.func @transform_0(%arg0: i32) -> (i32, i32) {
    %c0_i32 = arith.constant 0 : i32
    %c0_i32_0 = arith.constant 0 : i32
    return %arg0, %c0_i32 : i32, i32
  }
  func.func @transform_1(%arg0: i32) -> (i32, i32) {
    %c0_i32 = arith.constant 0 : i32
    %c0_i32_0 = arith.constant 0 : i32
    %c0_i32_1 = arith.constant 0 : i32
    return %c0_i32, %c0_i32_0 : i32, i32
  }
  func.func @transform_2(%arg0: i32) -> (i32, i32) {
    %c0_i32 = arith.constant 0 : i32
    %c0_i32_0 = arith.constant 0 : i32
    %c0_i32_1 = arith.constant 0 : i32
    return %c0_i32, %c0_i32_0 : i32, i32
  }
  func.func @transform_3(%arg0: i32) -> (i32, i32) {
    %c0_i32 = arith.constant 0 : i32
    %c0_i32_0 = arith.constant 0 : i32
    %c0_i32_1 = arith.constant 0 : i32
    return %c0_i32, %c0_i32_0 : i32, i32
  }
  func.func @transform_4(%arg0: i32) -> (i32, i32) {
    %c0_i32 = arith.constant 0 : i32
    %c0_i32_0 = arith.constant 0 : i32
    %c0_i32_1 = arith.constant 0 : i32
    return %c0_i32, %c0_i32_0 : i32, i32
  }
  func.func @transform_5(%arg0: i32) -> (i32, i32) {
    %c0_i32 = arith.constant 0 : i32
    %c0_i32_0 = arith.constant 0 : i32
    return %arg0, %c0_i32 : i32, i32
  }
  func.func @transform_6(%arg0: i32) -> (i32, i32) {
    %c0_i32 = arith.constant 0 : i32
    %c0_i32_0 = arith.constant 0 : i32
    return %arg0, %c0_i32 : i32, i32
  }
}

module attributes {stable_mosaic.version = 11 : i64} {
  func.func @_moe_ffn_kernel(%arg0: i32, %arg1: i32, %arg2: memref<10x32xbf16, #tpu.memory_space<vmem>>, %arg3: memref<1x10x32xbf16, #tpu.memory_space<vmem>>, %arg4: memref<1x32x128xbf16, #tpu.memory_space<vmem>>, %arg5: memref<1x1x128xf32, #tpu.memory_space<vmem>>, %arg6: memref<1x128x32xbf16, #tpu.memory_space<vmem>>, %arg7: memref<1x1x32xf32, #tpu.memory_space<vmem>>, %arg8: memref<10x32xf32, #tpu.memory_space<vmem>>, %arg9: memref<10x32xf32, #tpu.memory_space<vmem>>) attributes {dimension_semantics = [#tpu.dimension_semantics<parallel>, #tpu.dimension_semantics<arbitrary>], iteration_bounds = array<i64: 1, 4>, scalar_prefetch = 0 : i64, scratch_operands = 1 : i64, tpu.core_type = #tpu.core_type<tc>, window_params = [{transform_indices = @transform_0, window_bounds = array<i64: 10, 32>}, {transform_indices = @transform_1, window_bounds = array<i64: 1, 10, 32>}, {transform_indices = @transform_2, window_bounds = array<i64: 1, 32, 128>}, {transform_indices = @transform_3, window_bounds = array<i64: 1, 1, 128>}, {transform_indices = @transform_4, window_bounds = array<i64: 1, 128, 32>}, {transform_indices = @transform_5, window_bounds = array<i64: 1, 1, 32>}, {transform_indices = @transform_6, window_bounds = array<i64: 10, 32>}]} {
    %c0_i32 = arith.constant 0 : i32
    %0 = arith.cmpi eq, %arg1, %c0_i32 : i32
    %1 = arith.extui %0 : i1 to i32
    %c0_i32_0 = arith.constant 0 : i32
    %2 = arith.cmpi ne, %1, %c0_i32_0 : i32
    scf.if %2 {
      %cst_38 = arith.constant 0.000000e+00 : f32
      %69 = vector.broadcast %cst_38 : f32 to vector<10x32xf32>
      %c0_39 = arith.constant 0 : index
      %c0_40 = arith.constant 0 : index
      %70 = vector.load %arg9[%c0_39, %c0_40] : memref<10x32xf32, #tpu.memory_space<vmem>>, vector<10x32xf32>
      tpu.vector_store %arg9[%c0_39, %c0_40], %69 {strides = array<i32>} : memref<10x32xf32, #tpu.memory_space<vmem>>, vector<10x32xf32>,
    } else {
    }
    %c0 = arith.constant 0 : index
    %c0_1 = arith.constant 0 : index
    %3 = vector.load %arg2[%c0, %c0_1] : memref<10x32xbf16, #tpu.memory_space<vmem>>, vector<10x32xbf16>
    %c0_2 = arith.constant 0 : index
    %c0_3 = arith.constant 0 : index
    %c0_4 = arith.constant 0 : index
    %4 = vector.load %arg4[%c0_2, %c0_3, %c0_4] : memref<1x32x128xbf16, #tpu.memory_space<vmem>>, vector<1x32x128xbf16>
    %5 = vector.shape_cast %4 : vector<1x32x128xbf16> to vector<32x128xbf16>
    %cst = arith.constant dense<0.000000e+00> : vector<10x128xf32>
    %6 = tpu.matmul %3, %5, %cst {dimension_numbers = #tpu.dot_dimension_numbers<[1], [0], [0], [1], [0, 0, 1, 1], [], []>} : vector<10x32xbf16>, vector<32x128xbf16>, vector<10x128xf32> -> vector<10x128xf32>
    %c0_5 = arith.constant 0 : index
    %c0_6 = arith.constant 0 : index
    %c0_7 = arith.constant 0 : index
    %7 = vector.load %arg5[%c0_5, %c0_6, %c0_7] : memref<1x1x128xf32, #tpu.memory_space<vmem>>, vector<1x1x128xf32>
    %8 = vector.shape_cast %7 : vector<1x1x128xf32> to vector<1x128xf32>
    %9 = vector.broadcast %8 : vector<1x128xf32> to vector<10x128xf32>
    %10 = arith.addf %6, %9 : vector<10x128xf32>
    %cst_8 = arith.constant 5.000000e-01 : f32
    %11 = vector.broadcast %cst_8 : f32 to vector<10x128xf32>
    %12 = arith.mulf %11, %10 : vector<10x128xf32>
    %cst_9 = arith.constant 0.707106769 : f32
    %13 = vector.broadcast %cst_9 : f32 to vector<10x128xf32>
    %14 = arith.mulf %10, %13 : vector<10x128xf32>
    %15 = math.absf %14 : vector<10x128xf32>
    %cst_10 = arith.constant 0.327591091 : f32
    %16 = vector.broadcast %cst_10 : f32 to vector<10x128xf32>
    %17 = arith.mulf %16, %15 : vector<10x128xf32>
    %cst_11 = arith.constant 1.000000e+00 : f32
    %18 = vector.broadcast %cst_11 : f32 to vector<10x128xf32>
    %19 = arith.addf %18, %17 : vector<10x128xf32>
    %cst_12 = arith.constant 1.000000e+00 : f32
    %20 = vector.broadcast %cst_12 : f32 to vector<10x128xf32>
    %21 = arith.divf %20, %19 : vector<10x128xf32>
    %cst_13 = arith.constant 1.06140542 : f32
    %22 = vector.broadcast %cst_13 : f32 to vector<10x128xf32>
    %23 = arith.mulf %22, %21 : vector<10x128xf32>
    %cst_14 = arith.constant -1.45315206 : f32
    %24 = vector.broadcast %cst_14 : f32 to vector<10x128xf32>
    %25 = arith.addf %23, %24 : vector<10x128xf32>
    %26 = arith.mulf %25, %21 : vector<10x128xf32>
    %cst_15 = arith.constant 1.42141378 : f32
    %27 = vector.broadcast %cst_15 : f32 to vector<10x128xf32>
    %28 = arith.addf %26, %27 : vector<10x128xf32>
    %29 = arith.mulf %28, %21 : vector<10x128xf32>
    %cst_16 = arith.constant -0.284496725 : f32
    %30 = vector.broadcast %cst_16 : f32 to vector<10x128xf32>
    %31 = arith.addf %29, %30 : vector<10x128xf32>
    %32 = arith.mulf %31, %21 : vector<10x128xf32>
    %cst_17 = arith.constant 0.254829586 : f32
    %33 = vector.broadcast %cst_17 : f32 to vector<10x128xf32>
    %34 = arith.addf %32, %33 : vector<10x128xf32>
    %35 = arith.mulf %34, %21 : vector<10x128xf32>
    %cst_18 = arith.constant 0.000000e+00 : f32
    %36 = vector.broadcast %cst_18 : f32 to vector<10x128xf32>
    %37 = arith.subf %36, %15 : vector<10x128xf32>
    %38 = arith.mulf %37, %15 : vector<10x128xf32>
    %39 = math.exp %38 : vector<10x128xf32>
    %40 = arith.mulf %35, %39 : vector<10x128xf32>
    %cst_19 = arith.constant 1.000000e+00 : f32
    %41 = vector.broadcast %cst_19 : f32 to vector<10x128xf32>
    %42 = arith.subf %41, %40 : vector<10x128xf32>
    %cst_20 = arith.constant 0.000000e+00 : f32
    %43 = vector.broadcast %cst_20 : f32 to vector<10x128xf32>
    %44 = arith.cmpf oge, %14, %43 : vector<10x128xf32>
    %cst_21 = arith.constant 0.000000e+00 : f32
    %45 = vector.broadcast %cst_21 : f32 to vector<10x128xf32>
    %46 = arith.subf %45, %42 : vector<10x128xf32>
    %47 = arith.select %44, %42, %46 : vector<10x128xi1>, vector<10x128xf32>
    %cst_22 = arith.constant 1.000000e+00 : f32
    %48 = vector.broadcast %cst_22 : f32 to vector<10x128xf32>
    %49 = arith.addf %48, %47 : vector<10x128xf32>
    %50 = arith.mulf %12, %49 : vector<10x128xf32>
    %51 = arith.truncf %50 : vector<10x128xf32> to vector<10x128xbf16>
    %c0_23 = arith.constant 0 : index
    %c0_24 = arith.constant 0 : index
    %c0_25 = arith.constant 0 : index
    %52 = vector.load %arg6[%c0_23, %c0_24, %c0_25] : memref<1x128x32xbf16, #tpu.memory_space<vmem>>, vector<1x128x32xbf16>
    %53 = vector.shape_cast %52 : vector<1x128x32xbf16> to vector<128x32xbf16>
    %cst_26 = arith.constant dense<0.000000e+00> : vector<10x32xf32>
    %54 = tpu.matmul %51, %53, %cst_26 {dimension_numbers = #tpu.dot_dimension_numbers<[1], [0], [0], [1], [0, 0, 1, 1], [], []>} : vector<10x128xbf16>, vector<128x32xbf16>, vector<10x32xf32> -> vector<10x32xf32>
    %c0_27 = arith.constant 0 : index
    %c0_28 = arith.constant 0 : index
    %c0_29 = arith.constant 0 : index
    %55 = vector.load %arg7[%c0_27, %c0_28, %c0_29] : memref<1x1x32xf32, #tpu.memory_space<vmem>>, vector<1x1x32xf32>
    %56 = vector.shape_cast %55 : vector<1x1x32xf32> to vector<1x32xf32>
    %57 = vector.broadcast %56 : vector<1x32xf32> to vector<10x32xf32>
    %58 = arith.addf %54, %57 : vector<10x32xf32>
    %c0_30 = arith.constant 0 : index
    %c0_31 = arith.constant 0 : index
    %59 = vector.load %arg9[%c0_30, %c0_31] : memref<10x32xf32, #tpu.memory_space<vmem>>, vector<10x32xf32>
    %c0_32 = arith.constant 0 : index
    %c0_33 = arith.constant 0 : index
    %c0_34 = arith.constant 0 : index
    %60 = vector.load %arg3[%c0_32, %c0_33, %c0_34] : memref<1x10x32xbf16, #tpu.memory_space<vmem>>, vector<1x10x32xbf16>
    %61 = vector.shape_cast %60 : vector<1x10x32xbf16> to vector<10x32xbf16>
    %62 = arith.extf %61 : vector<10x32xbf16> to vector<10x32xf32>
    %63 = arith.mulf %62, %58 : vector<10x32xf32>
    %64 = arith.addf %59, %63 : vector<10x32xf32>
    %c0_35 = arith.constant 0 : index
    %c0_36 = arith.constant 0 : index
    %65 = vector.load %arg9[%c0_35, %c0_36] : memref<10x32xf32, #tpu.memory_space<vmem>>, vector<10x32xf32>
    tpu.vector_store %arg9[%c0_35, %c0_36], %64 {strides = array<i32>} : memref<10x32xf32, #tpu.memory_space<vmem>>, vector<10x32xf32>,
    %c3_i32 = arith.constant 3 : i32
    %66 = arith.cmpi eq, %arg1, %c3_i32 : i32
    %67 = arith.extui %66 : i1 to i32
    %c0_i32_37 = arith.constant 0 : i32
    %68 = arith.cmpi ne, %67, %c0_i32_37 : i32
    scf.if %68 {
      %c0_38 = arith.constant 0 : index
      %c0_39 = arith.constant 0 : index
      %69 = vector.load %arg9[%c0_38, %c0_39] : memref<10x32xf32, #tpu.memory_space<vmem>>, vector<10x32xf32>
      %c0_40 = arith.constant 0 : index
      %c0_41 = arith.constant 0 : index
      %70 = vector.load %arg8[%c0_40, %c0_41] : memref<10x32xf32, #tpu.memory_space<vmem>>, vector<10x32xf32>
      tpu.vector_store %arg8[%c0_40, %c0_41], %69 {strides = array<i32>} : memref<10x32xf32, #tpu.memory_space<vmem>>, vector<10x32xf32>,
    } else {
    }
    return
  }
  func.func @transform_0(%arg0: i32, %arg1: i32) -> (i32, i32) {
    %c0_i32 = arith.constant 0 : i32
    %c0_i32_0 = arith.constant 0 : i32
    return %arg0, %c0_i32 : i32, i32
  }
  func.func @transform_1(%arg0: i32, %arg1: i32) -> (i32, i32, i32) {
    %c0_i32 = arith.constant 0 : i32
    %c0_i32_0 = arith.constant 0 : i32
    return %arg1, %arg0, %c0_i32 : i32, i32, i32
  }
  func.func @transform_2(%arg0: i32, %arg1: i32) -> (i32, i32, i32) {
    %c0_i32 = arith.constant 0 : i32
    %c0_i32_0 = arith.constant 0 : i32
    %c0_i32_1 = arith.constant 0 : i32
    return %arg1, %c0_i32, %c0_i32_0 : i32, i32, i32
  }
  func.func @transform_3(%arg0: i32, %arg1: i32) -> (i32, i32, i32) {
    %c0_i32 = arith.constant 0 : i32
    %c0_i32_0 = arith.constant 0 : i32
    %c0_i32_1 = arith.constant 0 : i32
    return %arg1, %c0_i32, %c0_i32_0 : i32, i32, i32
  }
  func.func @transform_4(%arg0: i32, %arg1: i32) -> (i32, i32, i32) {
    %c0_i32 = arith.constant 0 : i32
    %c0_i32_0 = arith.constant 0 : i32
    %c0_i32_1 = arith.constant 0 : i32
    return %arg1, %c0_i32, %c0_i32_0 : i32, i32, i32
  }
  func.func @transform_5(%arg0: i32, %arg1: i32) -> (i32, i32, i32) {
    %c0_i32 = arith.constant 0 : i32
    %c0_i32_0 = arith.constant 0 : i32
    %c0_i32_1 = arith.constant 0 : i32
    return %arg1, %c0_i32, %c0_i32_0 : i32, i32, i32
  }
  func.func @transform_6(%arg0: i32, %arg1: i32) -> (i32, i32) {
    %c0_i32 = arith.constant 0 : i32
    %c0_i32_0 = arith.constant 0 : i32
    return %arg0, %c0_i32 : i32, i32
  }
}

module attributes {stable_mosaic.version = 11 : i64} {
  func.func @_ln_linear_kernel(%arg0: i32, %arg1: memref<2x32xf32, #tpu.memory_space<vmem>>, %arg2: memref<1x32xf32, #tpu.memory_space<vmem>>, %arg3: memref<1x32xf32, #tpu.memory_space<vmem>>, %arg4: memref<32x10xbf16, #tpu.memory_space<vmem>>, %arg5: memref<1x10xf32, #tpu.memory_space<vmem>>, %arg6: memref<2x32xbf16, #tpu.memory_space<vmem>>, %arg7: memref<2x10xf32, #tpu.memory_space<vmem>>) attributes {dimension_semantics = [#tpu.dimension_semantics<parallel>], iteration_bounds = array<i64: 1>, scalar_prefetch = 0 : i64, scratch_operands = 0 : i64, tpu.core_type = #tpu.core_type<tc>, window_params = [{transform_indices = @transform_0, window_bounds = array<i64: 2, 32>}, {pipeline_mode = #tpu.pipeline_mode<synchronous>, transform_indices = @transform_1, window_bounds = array<i64: 1, 32>}, {pipeline_mode = #tpu.pipeline_mode<synchronous>, transform_indices = @transform_2, window_bounds = array<i64: 1, 32>}, {pipeline_mode = #tpu.pipeline_mode<synchronous>, transform_indices = @transform_3, window_bounds = array<i64: 32, 10>}, {pipeline_mode = #tpu.pipeline_mode<synchronous>, transform_indices = @transform_4, window_bounds = array<i64: 1, 10>}, {transform_indices = @transform_5, window_bounds = array<i64: 2, 32>}, {transform_indices = @transform_6, window_bounds = array<i64: 2, 10>}]} {
    %c0 = arith.constant 0 : index
    %c0_0 = arith.constant 0 : index
    %0 = vector.load %arg1[%c0, %c0_0] : memref<2x32xf32, #tpu.memory_space<vmem>>, vector<2x32xf32>
    %c0_1 = arith.constant 0 : index
    %c0_2 = arith.constant 0 : index
    %1 = vector.load %arg2[%c0_1, %c0_2] : memref<1x32xf32, #tpu.memory_space<vmem>>, vector<1x32xf32>
    %c0_3 = arith.constant 0 : index
    %c0_4 = arith.constant 0 : index
    %2 = vector.load %arg3[%c0_3, %c0_4] : memref<1x32xf32, #tpu.memory_space<vmem>>, vector<1x32xf32>
    %cst = arith.constant dense<0.000000e+00> : vector<2xf32>
    %3 = vector.multi_reduction <add>, %0, %cst [1] : vector<2x32xf32> to vector<2xf32>
    %4 = vector.shape_cast %3 : vector<2xf32> to vector<2x1xf32>
    %cst_5 = arith.constant 3.200000e+01 : f32
    %5 = vector.broadcast %cst_5 : f32 to vector<2x1xf32>
    %6 = arith.divf %4, %5 : vector<2x1xf32>
    %7 = vector.broadcast %6 : vector<2x1xf32> to vector<2x32xf32>
    %8 = arith.subf %0, %7 : vector<2x32xf32>
    %9 = arith.mulf %8, %8 : vector<2x32xf32>
    %cst_6 = arith.constant dense<0.000000e+00> : vector<2xf32>
    %10 = vector.multi_reduction <add>, %9, %cst_6 [1] : vector<2x32xf32> to vector<2xf32>
    %11 = vector.shape_cast %10 : vector<2xf32> to vector<2x1xf32>
    %cst_7 = arith.constant 3.200000e+01 : f32
    %12 = vector.broadcast %cst_7 : f32 to vector<2x1xf32>
    %13 = arith.divf %11, %12 : vector<2x1xf32>
    %14 = vector.broadcast %6 : vector<2x1xf32> to vector<2x32xf32>
    %15 = arith.subf %0, %14 : vector<2x32xf32>
    %cst_8 = arith.constant 9.99999974E-6 : f32
    %16 = vector.broadcast %cst_8 : f32 to vector<2x1xf32>
    %17 = arith.addf %13, %16 : vector<2x1xf32>
    %18 = math.rsqrt %17 : vector<2x1xf32>
    %19 = vector.broadcast %18 : vector<2x1xf32> to vector<2x32xf32>
    %20 = arith.mulf %15, %19 : vector<2x32xf32>
    %21 = vector.broadcast %1 : vector<1x32xf32> to vector<2x32xf32>
    %22 = arith.mulf %20, %21 : vector<2x32xf32>
    %23 = vector.broadcast %2 : vector<1x32xf32> to vector<2x32xf32>
    %24 = arith.addf %22, %23 : vector<2x32xf32>
    %25 = arith.truncf %24 : vector<2x32xf32> to vector<2x32xbf16>
    %c0_9 = arith.constant 0 : index
    %c0_10 = arith.constant 0 : index
    %26 = vector.load %arg6[%c0_9, %c0_10] : memref<2x32xbf16, #tpu.memory_space<vmem>>, vector<2x32xbf16>
    tpu.vector_store %arg6[%c0_9, %c0_10], %25 {strides = array<i32>} : memref<2x32xbf16, #tpu.memory_space<vmem>>, vector<2x32xbf16>,
    %c0_11 = arith.constant 0 : index
    %c0_12 = arith.constant 0 : index
    %27 = vector.load %arg4[%c0_11, %c0_12] : memref<32x10xbf16, #tpu.memory_space<vmem>>, vector<32x10xbf16>
    %cst_13 = arith.constant dense<0.000000e+00> : vector<2x10xf32>
    %28 = tpu.matmul %25, %27, %cst_13 {dimension_numbers = #tpu.dot_dimension_numbers<[1], [0], [0], [1], [0, 0, 1, 1], [], []>} : vector<2x32xbf16>, vector<32x10xbf16>, vector<2x10xf32> -> vector<2x10xf32>
    %c0_14 = arith.constant 0 : index
    %c0_15 = arith.constant 0 : index
    %29 = vector.load %arg5[%c0_14, %c0_15] : memref<1x10xf32, #tpu.memory_space<vmem>>, vector<1x10xf32>
    %30 = vector.broadcast %29 : vector<1x10xf32> to vector<2x10xf32>
    %31 = arith.addf %28, %30 : vector<2x10xf32>
    %c0_16 = arith.constant 0 : index
    %c0_17 = arith.constant 0 : index
    %32 = vector.load %arg7[%c0_16, %c0_17] : memref<2x10xf32, #tpu.memory_space<vmem>>, vector<2x10xf32>
    tpu.vector_store %arg7[%c0_16, %c0_17], %31 {strides = array<i32>} : memref<2x10xf32, #tpu.memory_space<vmem>>, vector<2x10xf32>,
    return
  }
  func.func @transform_0(%arg0: i32) -> (i32, i32) {
    %c0_i32 = arith.constant 0 : i32
    %c0_i32_0 = arith.constant 0 : i32
    return %arg0, %c0_i32 : i32, i32
  }
  func.func @transform_1(%arg0: i32) -> (i32, i32) {
    %c0_i32 = arith.constant 0 : i32
    %c0_i32_0 = arith.constant 0 : i32
    %c0_i32_1 = arith.constant 0 : i32
    return %c0_i32, %c0_i32_0 : i32, i32
  }
  func.func @transform_2(%arg0: i32) -> (i32, i32) {
    %c0_i32 = arith.constant 0 : i32
    %c0_i32_0 = arith.constant 0 : i32
    %c0_i32_1 = arith.constant 0 : i32
    return %c0_i32, %c0_i32_0 : i32, i32
  }
  func.func @transform_3(%arg0: i32) -> (i32, i32) {
    %c0_i32 = arith.constant 0 : i32
    %c0_i32_0 = arith.constant 0 : i32
    %c0_i32_1 = arith.constant 0 : i32
    return %c0_i32, %c0_i32_0 : i32, i32
  }
  func.func @transform_4(%arg0: i32) -> (i32, i32) {
    %c0_i32 = arith.constant 0 : i32
    %c0_i32_0 = arith.constant 0 : i32
    %c0_i32_1 = arith.constant 0 : i32
    return %c0_i32, %c0_i32_0 : i32, i32
  }
  func.func @transform_5(%arg0: i32) -> (i32, i32) {
    %c0_i32 = arith.constant 0 : i32
    %c0_i32_0 = arith.constant 0 : i32
    return %arg0, %c0_i32 : i32, i32
  }
  func.func @transform_6(%arg0: i32) -> (i32, i32) {
    %c0_i32 = arith.constant 0 : i32
    %c0_i32_0 = arith.constant 0 : i32
    return %arg0, %c0_i32 : i32, i32
  }
}

</mosaic_0001>

<llo_original>
// kernel: vit_moe_forward.16
$region0: #{vit_moe_forward.16}
  #allocation0 [shape = 'u32[]', space=smem, size = 0x4, offset = 0x4, fixed_abs, tag = 'smem constant byte address 0x4 - core index']
  #allocation1 [shape = 'u32[72,128]{1,0:T(1,128)}', space=vmem, size = 0x9000, scoped, tag = 'internal scratch']
  #allocation2 [shape = 'f32[10,16]{1,0:T(8,128)}', space=vmem, size = 0x2000, scoped, tag = 'scratch operand']
  %s0 = inlined_call_operand.vmem [shape: bf16[10,32], index: 0, kind: input, shape index: {}]
  %s1 = inlined_call_operand.vmem [shape: bf16[4,10,16], index: 1, kind: input, shape index: {}]
  %s2 = inlined_call_operand.vmem [shape: bf16[4,32,16], index: 2, kind: input, shape index: {}]
  %s3 = inlined_call_operand.vmem [shape: bf16[10,16], index: 3, kind: output, shape index: {}]
  %s4 = sld [smem:[#allocation0]]
  $region53: #{vit_moe_forward.16} parent=0
    _
  %s6 = ssub.s32 1, %s4
  %s7 = scalar_select 0, %s6, %s4
  loop: start=0, step=1, limit=6
  $region2: #{vit_moe_forward.16} parent=0 // loop_pre_header
    _
  $region3: #{vit_moe_forward.16} parent=0 // loop_header
    %s9 = sphi 0, %s13
    %p10 = scmp.ge.s32.totalorder %s9, 6
    %s16 = sphi 0, %s28
    %s17 = sphi 0, %s24
    %s18 = sphi 0, %s16
    %s19 = sphi 0, %s17
    %s20 = sphi 0, %s18
    %s21 = sphi 0, %s19
    %s31 = sphi 0, %s33
    %s34 = sphi 0, %s31
    %s35 = sphi 0, %s34
    %s51 = sphi 0, %s35
    %s59 = sphi 0, %s61
    %s62 = sphi 0, %s59
    %s63 = sphi 0, %s62
    %s79 = sphi 0, %s63
    %s85 = sphi 0, %s87
    %s88 = sphi 0, %s85
    %s89 = sphi 0, %s88
    %s105 = sphi 0, %s89
    %s111 = sphi 0, %s113
    %s114 = sphi 0, %s111
    %s115 = sphi 0, %s114
    %s131 = sphi 0, %s115
  $region4: #{vit_moe_forward.16} parent=0 // loop_header_branch
    %12 = sbr.rel (%p10) target = $region8
  $region5: #{vit_moe_forward.16} parent=0 // loop_body
    %s14 = ssub.s32 %s9, 1
    %s15 = ssub.s32 %s9, 2
    %s22 = sadd.s32 1, %s17
    %p23 = scmp.ge.s32.totalorder %s22, 4
    %s24 = scalar_select %p23, 0, %s22
    %s25 = sadd.s32 1, %s16
    %s26 = scalar_select %p23, %s25, %s16
    %p27 = scmp.ge.s32.totalorder %s26, 1
    %s28 = scalar_select %p27, 0, %s26
    %s29 = ssub.s32 %s16, %s28
    %p30 = scmp.eq.s32.totalorder %s29, 0
    %s32 = sadd.s32 %s31, 1
    %s33 = scalar_select %p30, %s31, %s32
    %p36 = pneg %p30
    %p37 = scmp.eq.s32.totalorder %s9, 3
    %p38 = por %p36, %p37
    %p39 = scmp.ne.s32.totalorder %s31, %s34
    %p40 = scmp.eq.s32.totalorder %s9, 0
    %p41 = por %p39, %p40
    %p42 = scmp.ne.s32.totalorder %s31, %s34
    %p43 = scmp.eq.s32.totalorder %s14, 3
    %p44 = por %p42, %p43
    %p45 = scmp.ne.s32.totalorder %s34, %s35
    %p46 = scmp.eq.s32.totalorder %s14, 0
    %p47 = por %p45, %p46
    %p48 = scmp.ne.s32.totalorder %s34, %s35
    %p49 = scmp.eq.s32.totalorder %s15, 3
    %p50 = por %p48, %p49
    %p52 = scmp.ne.s32.totalorder %s35, %s51
    %p53 = scmp.eq.s32.totalorder %s15, 0
    %p54 = por %p52, %p53
    %s55 = ssub.s32 %s17, %s24
    %s56 = ssub.s32 %s16, %s28
    %s57 = sor.u32 %s55, %s56
    %p58 = scmp.eq.s32.totalorder %s57, 0
    %s60 = sadd.s32 %s59, 1
    %s61 = scalar_select %p58, %s59, %s60
    %p64 = pneg %p58
    %p65 = scmp.eq.s32.totalorder %s9, 3
    %p66 = por %p64, %p65
    %p67 = scmp.ne.s32.totalorder %s59, %s62
    %p68 = scmp.eq.s32.totalorder %s9, 0
    %p69 = por %p67, %p68
    %p70 = scmp.ne.s32.totalorder %s59, %s62
    %p71 = scmp.eq.s32.totalorder %s14, 3
    %p72 = por %p70, %p71
    %p73 = scmp.ne.s32.totalorder %s62, %s63
    %p74 = scmp.eq.s32.totalorder %s14, 0
    %p75 = por %p73, %p74
    %p76 = scmp.ne.s32.totalorder %s62, %s63
    %p77 = scmp.eq.s32.totalorder %s15, 3
    %p78 = por %p76, %p77
    %p80 = scmp.ne.s32.totalorder %s63, %s79
    %p81 = scmp.eq.s32.totalorder %s15, 0
    %p82 = por %p80, %p81
    %s83 = ssub.s32 %s17, %s24
    %p84 = scmp.eq.s32.totalorder %s83, 0
    %s86 = sadd.s32 %s85, 1
    %s87 = scalar_select %p84, %s85, %s86
    %p90 = pneg %p84
    %p91 = scmp.eq.s32.totalorder %s9, 3
    %p92 = por %p90, %p91
    %p93 = scmp.ne.s32.totalorder %s85, %s88
    %p94 = scmp.eq.s32.totalorder %s9, 0
    %p95 = por %p93, %p94
    %p96 = scmp.ne.s32.totalorder %s85, %s88
    %p97 = scmp.eq.s32.totalorder %s14, 3
    %p98 = por %p96, %p97
    %p99 = scmp.ne.s32.totalorder %s88, %s89
    %p100 = scmp.eq.s32.totalorder %s14, 0
    %p101 = por %p99, %p100
    %p102 = scmp.ne.s32.totalorder %s88, %s89
    %p103 = scmp.eq.s32.totalorder %s15, 3
    %p104 = por %p102, %p103
    %p106 = scmp.ne.s32.totalorder %s89, %s105
    %p107 = scmp.eq.s32.totalorder %s15, 0
    %p108 = por %p106, %p107
    %s109 = ssub.s32 %s16, %s28
    %p110 = scmp.eq.s32.totalorder %s109, 0
    %s112 = sadd.s32 %s111, 1
    %s113 = scalar_select %p110, %s111, %s112
    %p116 = pneg %p110
    %p117 = scmp.eq.s32.totalorder %s9, 3
    %p118 = por %p116, %p117
    %p119 = scmp.ne.s32.totalorder %s111, %s114
    %p120 = scmp.eq.s32.totalorder %s9, 0
    %p121 = por %p119, %p120
    %p122 = scmp.ne.s32.totalorder %s111, %s114
    %p123 = scmp.eq.s32.totalorder %s14, 3
    %p124 = por %p122, %p123
    %p125 = scmp.ne.s32.totalorder %s114, %s115
    %p126 = scmp.eq.s32.totalorder %s14, 0
    %p127 = por %p125, %p126
    %p128 = scmp.ne.s32.totalorder %s114, %s115
    %p129 = scmp.eq.s32.totalorder %s15, 3
    %p130 = por %p128, %p129
    %p132 = scmp.ne.s32.totalorder %s115, %s131
    %p133 = scmp.eq.s32.totalorder %s15, 0
    %p134 = por %p132, %p133
    %p135 = scmp.le.s32.totalorder 1, %s9
    %p136 = scmp.lt.s32.totalorder %s9, 5
    %p137 = pnand %p135, %p136
    %p138 = pneg %p137
    // Predicated region
    $region9: #{vit_moe_forward.16} parent=5 // pred_check
      _
    $region10: #{vit_moe_forward.16} parent=5 // pred_check_branch
      %140 = sbr.rel (%p137) target = $region12
    $region11: #{vit_moe_forward.16} parent=5 // pred_region
      %s141 = ssub.s32 %s9, 1
      // Predicated region
      $region13: #{vit_moe_forward.16} parent=11 // pred_check
        %p142 = pneg %p47
      $region14: #{vit_moe_forward.16} parent=11 // pred_check_branch
        %144 = sbr.rel (%p142) target = $region16
      $region15: #{vit_moe_forward.16} parent=11 // pred_region
        %s145 = smul.u32 2, %s18
        %p146 = scmp.lt.s32.totalorder %s145, 1
        %s147 = scalar_select %p146, %s145, 1
        %s148 = smul.addr %s147, 4
        %s149 = scalar_lea.vmem %s0, %s148
        %s150 = smul.u32 2, %s18
      $region16: #{vit_moe_forward.16} parent=11 // pred_fallthru
        _
    $region12: #{vit_moe_forward.16} parent=5 // pred_fallthru
      _
    %p151 = scmp.lt.s32.totalorder %s9, 4
    // Predicated region
    $region17: #{vit_moe_forward.16} parent=5 // pred_check
      %p152 = pneg %p151
    $region18: #{vit_moe_forward.16} parent=5 // pred_check_branch
      %154 = sbr.rel (%p152) target = $region20
    $region19: #{vit_moe_forward.16} parent=5 // pred_region
      // Predicated region
      $region21: #{vit_moe_forward.16} parent=19 // pred_check
        %p155 = pneg %p69
      $region22: #{vit_moe_forward.16} parent=19 // pred_check_branch
        %157 = sbr.rel (%p155) target = $region24
      $region23: #{vit_moe_forward.16} parent=19 // pred_region
        %s158 = smul.u32 2, %s16
        %p159 = scmp.lt.s32.totalorder %s17, 3
        %s160 = scalar_select %p159, %s17, 3
        %p161 = scmp.lt.s32.totalorder %s158, 1
        %s162 = scalar_select %p161, %s158, 1
        %s163 = smul.addr %s160, 2
        %s164 = sadd.s32 %s162, %s163
        %s165 = smul.addr %s164, 4
        %s166 = scalar_lea.vmem %s1, %s165
        %s167 = smul.u32 2, %s16
      $region24: #{vit_moe_forward.16} parent=19 // pred_fallthru
        _
      // Predicated region
      $region25: #{vit_moe_forward.16} parent=19 // pred_check
        %p168 = pneg %p95
      $region26: #{vit_moe_forward.16} parent=19 // pred_check_branch
        %170 = sbr.rel (%p168) target = $region28
      $region27: #{vit_moe_forward.16} parent=19 // pred_region
        %p171 = scmp.lt.s32.totalorder %s17, 3
        %s172 = scalar_select %p171, %s17, 3
        %s173 = smul.addr %s172, 4
        %s174 = smul.addr %s173, 4
        %s175 = scalar_lea.vmem %s2, %s174
      $region28: #{vit_moe_forward.16} parent=19 // pred_fallthru
        _
    $region20: #{vit_moe_forward.16} parent=5 // pred_fallthru
      _
    %p176 = scmp.le.s32.totalorder 1, %s9
    %p177 = scmp.lt.s32.totalorder %s9, 5
    %p178 = pnand %p176, %p177
    %p179 = pneg %p178
    // Predicated region
    $region29: #{vit_moe_forward.16} parent=5 // pred_check
      _
    $region30: #{vit_moe_forward.16} parent=5 // pred_check_branch
      %181 = sbr.rel (%p178) target = $region32
    $region31: #{vit_moe_forward.16} parent=5 // pred_region
      %s182 = ssub.s32 %s9, 1
      %s183 = smul.u32 2, %s18
      %p184 = scmp.lt.s32.totalorder %s183, 1
      %s185 = scalar_select %p184, %s183, 1
      %s186 = smul.addr %s185, 4
      %s187 = scalar_lea.vmem %s0, %s186
      %p188 = pneg %p47
      %p189 = pneg %p44
      %s190 = smul.u32 2, %s18
      %p191 = scmp.lt.s32.totalorder %s19, 3
      %s192 = scalar_select %p191, %s19, 3
      %p193 = scmp.lt.s32.totalorder %s190, 1
      %s194 = scalar_select %p193, %s190, 1
      %s195 = smul.addr %s192, 2
      %s196 = sadd.s32 %s194, %s195
      %s197 = smul.addr %s196, 4
      %s198 = scalar_lea.vmem %s1, %s197
      %p199 = pneg %p75
      %p200 = pneg %p72
      %p201 = scmp.lt.s32.totalorder %s19, 3
      %s202 = scalar_select %p201, %s19, 3
      %s203 = smul.addr %s202, 4
      %s204 = smul.addr %s203, 4
      %s205 = scalar_lea.vmem %s2, %s204
      %p206 = pneg %p101
      %p207 = pneg %p98
      %p208 = pneg %p127
      %p209 = pneg %p124
      %s210 = smul.u32 2, %s18
      %p211 = scmp.lt.s32.totalorder %s210, 1
      %s212 = scalar_select %p211, %s210, 1
      %s213 = smul.addr %s212, 4
      %s214 = scalar_lea.vmem %s3, %s213
      %s215 = smul.u32 2, %s18
      %p216 = scmp.lt.s32.totalorder %s215, 1
      %s217 = scalar_select %p216, %s215, 1
      %s218 = smul.addr %s217, 4
      %s219 = scalar_lea.vmem %s0, %s218
      %s220 = smul.u32 2, %s18
      %s221 = smul.u32 2, %s18
      %p222 = scmp.lt.s32.totalorder %s19, 3
      %s223 = scalar_select %p222, %s19, 3
      %p224 = scmp.lt.s32.totalorder %s221, 1
      %s225 = scalar_select %p224, %s221, 1
      %s226 = smul.addr %s223, 2
      %s227 = sadd.s32 %s225, %s226
      %s228 = smul.addr %s227, 4
      %s229 = scalar_lea.vmem %s1, %s228
      %s230 = smul.u32 2, %s18
      %p231 = scmp.lt.s32.totalorder %s19, 3
      %s232 = scalar_select %p231, %s19, 3
      %s233 = smul.addr %s232, 4
      %s234 = smul.addr %s233, 4
      %s235 = scalar_lea.vmem %s2, %s234
      %s236 = smul.u32 2, %s18
      %p237 = scmp.lt.s32.totalorder %s236, 1
      %s238 = scalar_select %p237, %s236, 1
      %s239 = smul.addr %s238, 4
      %s240 = scalar_lea.vmem %s3, %s239
      %s241 = smul.u32 2, %s18
      %p243 = scmp.eq.s32.totalorder %s19, 0
      // Predicated region
      $region33: #{vit_moe_forward.16} parent=31 // pred_check
        %p244 = pneg %p243
      $region34: #{vit_moe_forward.16} parent=31 // pred_check_branch
        %246 = sbr.rel (%p244) target = $region36
      $region35: #{vit_moe_forward.16} parent=31 // pred_region
        %vm247 = vcmask 130048
        %248 = vst.msk [vmem:[#allocation2] sm:$0xff] %vm247, 0.0
        %vm249 = vcmask 123904
        %250 = vst.msk [vmem:[#allocation2 + $0x8] sm:$0x3] %vm249, 0.0
      $region36: #{vit_moe_forward.16} parent=31 // pred_fallthru
        _
      %v251 = vld [vmem:[%s229] sm:$0xf]
      %v252 = vld [vmem:[%s229 + $0x4] sm:$0x1]
      %v253 = vunpack.c.l.bf16 %v251
      %v254 = vunpack.c.l.bf16 %v252
      %v255 = vld [vmem:[%s219] sm:$0xf]
      %v256 = vld [vmem:[%s219 + $0x4] sm:$0x1]
      %v257 = vld [vmem:[%s235] sm:$0xf]
      %v258 = vld [vmem:[%s235 + $0x4] sm:$0xf]
      %v259 = vld [vmem:[%s235 + $0x8] sm:$0xf]
      %v260 = vld [vmem:[%s235 + $0xc] sm:$0xf]
      %v263 = vunpack.c.l.b16 %v255
      %v264 = vunpack.c.l.b16 %v256
      %v265 = vpack.c.b16 %v264, %v263
      %v270 = vunpack.c.l.b16 %v257
      %v271 = vunpack.c.l.b16 %v258
      %v272 = vunpack.c.l.b16 %v259
      %v273 = vunpack.c.l.b16 %v260
      %v274 = vpack.c.b16 %v271, %v270
      %v275 = vpack.c.b16 %v273, %v272
      %vm278 = vcmask 261120
      %v280 = vsel %vm278, %v265, 0
      %282 = vmatpush.bf16.msra.mxu0 0
      %283 = vmatpush.bf16.msra.mxu0 0
      %284 = vmatpush.bf16.msra.mxu0 0
      %285 = vmatpush.bf16.msra.mxu0 0
      %286 = vmatpush.bf16.msra.mxu0 0
      %287 = vmatpush.bf16.msra.mxu0 0
      %288 = vmatpush.bf16.msra.mxu0 %v275
      %289 = vmatpush.bf16.msra.mxu0 %v274
      %290 = vmatmul.bf16.gmra.mxu0 %v280
      %v291 = vpop.f32.mrf.mxu0
      %v292 = vadd.f32 0.0, %v291
      %v293 = vpop.f32.mrf.mxu0
      %v294 = vadd.f32 0.0, %v293
      %295 = vdwg.mxu0
      %v296 = vld [vmem:[#allocation2] sm:$0xff]
      %v297 = vld [vmem:[#allocation2 + $0x8] sm:$0x3]
      %v298 = vmul.f32 %v253, %v292
      %v299 = vmul.f32 %v254, %v294
      %v300 = vadd.f32 %v296, %v298
      %v301 = vadd.f32 %v297, %v299
      %vm302 = vcmask 130048
      %303 = vst.msk [vmem:[#allocation2] sm:$0xff] %vm302, %v300
      %vm304 = vcmask 123904
      %305 = vst.msk [vmem:[#allocation2 + $0x8] sm:$0x3] %vm304, %v301
      %p306 = scmp.eq.s32.totalorder %s19, 3
      // Predicated region
      $region37: #{vit_moe_forward.16} parent=31 // pred_check
        %p307 = pneg %p306
      $region38: #{vit_moe_forward.16} parent=31 // pred_check_branch
        %309 = sbr.rel (%p307) target = $region40
      $region39: #{vit_moe_forward.16} parent=31 // pred_region
        %v310 = vld [vmem:[#allocation2] sm:$0xff]
        %v311 = vld [vmem:[#allocation2 + $0x8] sm:$0x3]
        %v312 = vpack.c.bf16 %v310, %v310
        %v313 = vpack.c.bf16 %v311, %v311
        %vm314 = vcmask 125952
        %315 = vst.msk [vmem:[%s240] sm:$0xf] %vm314, %v312
        %vm316 = vcmask 122880
        %317 = vst.msk [vmem:[%s240 + $0x4] sm:$0x1] %vm316, %v313
      $region40: #{vit_moe_forward.16} parent=31 // pred_fallthru
        _
      %s318 = smul.u32 2, %s18
      %p319 = scmp.lt.s32.totalorder %s318, 1
      %s320 = scalar_select %p319, %s318, 1
      %s321 = smul.addr %s320, 4
      %s322 = scalar_lea.vmem %s3, %s321
      // Predicated region
      $region41: #{vit_moe_forward.16} parent=31 // pred_check
        %p323 = pneg %p124
      $region42: #{vit_moe_forward.16} parent=31 // pred_check_branch
        %325 = sbr.rel (%p323) target = $region44
      $region43: #{vit_moe_forward.16} parent=31 // pred_region
        %s326 = smul.u32 2, %s18
      $region44: #{vit_moe_forward.16} parent=31 // pred_fallthru
        _
      // Predicated region
      $region45: #{vit_moe_forward.16} parent=31 // pred_check
        %p327 = pneg %p124
      $region46: #{vit_moe_forward.16} parent=31 // pred_check_branch
        %329 = sbr.rel (%p327) target = $region48
      $region47: #{vit_moe_forward.16} parent=31 // pred_region
        %s330 = smul.u32 2, %s18
        %p331 = scmp.lt.s32.totalorder %s330, 1
        %s332 = scalar_select %p331, %s330, 1
        %s333 = smul.addr %s332, 4
        %s334 = scalar_lea.vmem %s3, %s333
      $region48: #{vit_moe_forward.16} parent=31 // pred_fallthru
        _
    $region32: #{vit_moe_forward.16} parent=5 // pred_fallthru
      _
    %p335 = scmp.le.s32.totalorder 2, %s9
    // Predicated region
    $region49: #{vit_moe_forward.16} parent=5 // pred_check
      %p336 = pneg %p335
    $region50: #{vit_moe_forward.16} parent=5 // pred_check_branch
      %338 = sbr.rel (%p336) target = $region52
    $region51: #{vit_moe_forward.16} parent=5 // pred_region
      %s339 = ssub.s32 %s9, 2
    $region52: #{vit_moe_forward.16} parent=5 // pred_fallthru
      _
  $region6: #{vit_moe_forward.16} parent=0 // loop_footer
    %s13 = sadd.s32 1, %s9
  $region7: #{vit_moe_forward.16} parent=0 // loop_footer_branch
    %8 = sbr.rel target = $region3
  $region8: #{vit_moe_forward.16} parent=0 // loop_exit
    _

// kernel: vit_moe_forward.15
$region0: #{vit_moe_forward.15}
  #allocation0 [shape = 'u32[]', space=smem, size = 0x4, offset = 0x4, fixed_abs, tag = 'smem constant byte address 0x4 - core index']
  #allocation1 [shape = 'u32[72,128]{1,0:T(1,128)}', space=vmem, size = 0x9000, scoped, tag = 'internal scratch']
  %s0 = inlined_call_operand.vmem [shape: f32[10,32], index: 0, kind: input, shape index: {}]
  %s1 = inlined_call_operand.vmem [shape: f32[1,32], index: 1, kind: input, shape index: {}]
  %s2 = inlined_call_operand.vmem [shape: f32[1,32], index: 2, kind: input, shape index: {}]
  %s3 = inlined_call_operand.vmem [shape: bf16[32,40], index: 3, kind: input, shape index: {}]
  %s4 = inlined_call_operand.vmem [shape: f32[1,40], index: 4, kind: input, shape index: {}]
  %s5 = inlined_call_operand.vmem [shape: bf16[10,32], index: 5, kind: output, shape index: {0}]
  %s6 = inlined_call_operand.vmem [shape: bf16[10,40], index: 6, kind: output, shape index: {1}]
  %7 = xla_tuple %s5, %s6
  %s8 = sld [smem:[#allocation0]]
  $region38: #{vit_moe_forward.15} parent=0
    _
  %s10 = ssub.s32 1, %s8
  %s11 = scalar_select 0, %s10, %s8
  // Predicated region
  $region2: #{vit_moe_forward.15} parent=0 // pred_check
    _
  $region3: #{vit_moe_forward.15} parent=0 // pred_check_branch
    %13 = sbr.rel (0) target = $region5
  $region4: #{vit_moe_forward.15} parent=0 // pred_region
    _
  $region5: #{vit_moe_forward.15} parent=0 // pred_fallthru
    _
  // Predicated region
  $region6: #{vit_moe_forward.15} parent=0 // pred_check
    _
  $region7: #{vit_moe_forward.15} parent=0 // pred_check_branch
    %15 = sbr.rel (0) target = $region9
  $region8: #{vit_moe_forward.15} parent=0 // pred_region
    _
  $region9: #{vit_moe_forward.15} parent=0 // pred_fallthru
    _
  // Predicated region
  $region10: #{vit_moe_forward.15} parent=0 // pred_check
    _
  $region11: #{vit_moe_forward.15} parent=0 // pred_check_branch
    %17 = sbr.rel (0) target = $region13
  $region12: #{vit_moe_forward.15} parent=0 // pred_region
    _
  $region13: #{vit_moe_forward.15} parent=0 // pred_fallthru
    _
  // Predicated region
  $region14: #{vit_moe_forward.15} parent=0 // pred_check
    _
  $region15: #{vit_moe_forward.15} parent=0 // pred_check_branch
    %19 = sbr.rel (0) target = $region17
  $region16: #{vit_moe_forward.15} parent=0 // pred_region
    _
  $region17: #{vit_moe_forward.15} parent=0 // pred_fallthru
    _
  // Predicated region
  $region18: #{vit_moe_forward.15} parent=0 // pred_check
    _
  $region19: #{vit_moe_forward.15} parent=0 // pred_check_branch
    %21 = sbr.rel (0) target = $region21
  $region20: #{vit_moe_forward.15} parent=0 // pred_region
    _
  $region21: #{vit_moe_forward.15} parent=0 // pred_fallthru
    _
  %v23 = vld [vmem:[%s0] sm:$0xff]
  %v24 = vld [vmem:[%s0 + $0x8] sm:$0x3]
  %v25 = vld [vmem:[%s1] sm:$0x1]
  %v26 = vld [vmem:[%s2] sm:$0x1]
  %vm27 = vcmask 261120
  %v28 = vsel %vm27, %v23, 0.0
  %29 = vadd.xlane.f32.xlu0 %v28
  %v30 = vpop.xlane.xlu0 %29
  %vm31 = vcmask 254976
  %v32 = vsel %vm31, %v24, 0.0
  %33 = vadd.xlane.f32.xlu0 %v32
  %v34 = vpop.xlane.xlu0 %33
  %v35 = vrcp.pop 32.0
  %v36 = vmul.f32 32.0, %v35
  %v37 = vsub.f32 1.0, %v36
  %v38 = vmul.f32 %v35, %v37
  %v39 = vadd.f32 %v35, %v38
  %vm40 = vweird.f32 %v35
  %v41 = vsel %vm40, %v35, %v39
  %v42 = vmul.f32 %v30, %v41
  %v43 = vmul.f32 %v34, %v41
  %v44 = vsub.f32 %v23, %v42
  %v45 = vsub.f32 %v24, %v43
  %v46 = vmul.f32 %v44, %v44
  %v47 = vmul.f32 %v45, %v45
  %v48 = vsel %vm27, %v46, 0.0
  %49 = vadd.xlane.f32.xlu0 %v48
  %v50 = vpop.xlane.xlu0 %49
  %v51 = vsel %vm31, %v47, 0.0
  %52 = vadd.xlane.f32.xlu0 %v51
  %v53 = vpop.xlane.xlu0 %52
  %v54 = vmul.f32 %v50, %v41
  %v55 = vmul.f32 %v53, %v41
  %v56 = vadd.f32 %v54, 1e-05
  %v57 = vadd.f32 %v55, 1e-05
  %v58 = vrsqrt.pop %v56
  %v59 = vmul.f32 %v58, %v56
  %v60 = vmul.f32 %v59, %v58
  %v61 = vmul.f32 0.5, %v60
  %v62 = vsub.f32 1.5, %v61
  %v63 = vmul.f32 %v58, %v62
  %vm64 = vweird.f32 %v56
  %vm65 = vweird.f32 %v58
  %vm66 = vmor %vm64, %vm65
  %v67 = vsel %vm66, %v58, %v63
  %v68 = vrsqrt.pop %v57
  %v69 = vmul.f32 %v68, %v57
  %v70 = vmul.f32 %v69, %v68
  %v71 = vmul.f32 0.5, %v70
  %v72 = vsub.f32 1.5, %v71
  %v73 = vmul.f32 %v68, %v72
  %vm74 = vweird.f32 %v57
  %vm75 = vweird.f32 %v68
  %vm76 = vmor %vm74, %vm75
  %v77 = vsel %vm76, %v68, %v73
  %v78 = vmul.f32 %v44, %v67
  %v79 = vmul.f32 %v45, %v77
  %v81 = vperm.slane %v25, 0
  %v83 = vmul.f32 %v78, %v81
  %v84 = vmul.f32 %v79, %v81
  %v86 = vperm.slane %v26, 0
  %v88 = vadd.f32 %v83, %v86
  %v89 = vadd.f32 %v84, %v86
  %v90 = vpack.c.bf16 %v88, %v88
  %v91 = vpack.c.bf16 %v89, %v89
  %vm92 = vcmask 257024
  %93 = vst.msk [vmem:[%s5] sm:$0xf] %vm92, %v90
  %vm94 = vcmask 253952
  %95 = vst.msk [vmem:[%s5 + $0x4] sm:$0x1] %vm94, %v91
  %v96 = vld [vmem:[%s3] sm:$0xf]
  %v97 = vld [vmem:[%s3 + $0x4] sm:$0xf]
  %v98 = vld [vmem:[%s3 + $0x8] sm:$0xf]
  %v99 = vld [vmem:[%s3 + $0xc] sm:$0xf]
  %v100 = vld [vmem:[%s4] sm:$0x1]
  %v102 = vperm.slane %v100, 0
  %v106 = vunpack.c.l.b16 %v90
  %v107 = vunpack.c.l.b16 %v91
  %v108 = vpack.c.b16 %v107, %v106
  %v113 = vunpack.c.l.b16 %v96
  %v114 = vunpack.c.l.b16 %v97
  %v115 = vunpack.c.l.b16 %v98
  %v116 = vunpack.c.l.b16 %v99
  %v117 = vpack.c.b16 %v114, %v113
  %v118 = vpack.c.b16 %v116, %v115
  %v122 = vsel %vm27, %v108, 0
  %124 = vmatpush.bf16.msra.mxu0 0
  %125 = vmatpush.bf16.msra.mxu0 0
  %126 = vmatpush.bf16.msra.mxu0 0
  %127 = vmatpush.bf16.msra.mxu0 0
  %128 = vmatpush.bf16.msra.mxu0 0
  %129 = vmatpush.bf16.msra.mxu0 0
  %130 = vmatpush.bf16.msra.mxu0 %v118
  %131 = vmatpush.bf16.msra.mxu0 %v117
  %132 = vmatmul.bf16.gmra.mxu0 %v122
  %v133 = vpop.f32.mrf.mxu0
  %v134 = vadd.f32 %v102, %v133
  %v135 = vpop.f32.mrf.mxu0
  %v136 = vadd.f32 %v102, %v135
  %137 = vdwg.mxu0
  %v138 = vpack.c.bf16 %v134, %v134
  %v139 = vpack.c.bf16 %v136, %v136
  %vm140 = vcmask 322560
  %141 = vst.msk [vmem:[%s6] sm:$0xf] %vm140, %v138
  %vm142 = vcmask 319488
  %143 = vst.msk [vmem:[%s6 + $0x4] sm:$0x1] %vm142, %v139
  // Predicated region
  $region22: #{vit_moe_forward.15} parent=0 // pred_check
    _
  $region23: #{vit_moe_forward.15} parent=0 // pred_check_branch
    %145 = sbr.rel (0) target = $region25
  $region24: #{vit_moe_forward.15} parent=0 // pred_region
    _
  $region25: #{vit_moe_forward.15} parent=0 // pred_fallthru
    _
  // Predicated region
  $region26: #{vit_moe_forward.15} parent=0 // pred_check
    _
  $region27: #{vit_moe_forward.15} parent=0 // pred_check_branch
    %147 = sbr.rel (0) target = $region29
  $region28: #{vit_moe_forward.15} parent=0 // pred_region
    _
  $region29: #{vit_moe_forward.15} parent=0 // pred_fallthru
    _
  // Predicated region
  $region30: #{vit_moe_forward.15} parent=0 // pred_check
    _
  $region31: #{vit_moe_forward.15} parent=0 // pred_check_branch
    %149 = sbr.rel (0) target = $region33
  $region32: #{vit_moe_forward.15} parent=0 // pred_region
    _
  $region33: #{vit_moe_forward.15} parent=0 // pred_fallthru
    _
  // Predicated region
  $region34: #{vit_moe_forward.15} parent=0 // pred_check
    _
  $region35: #{vit_moe_forward.15} parent=0 // pred_check_branch
    %151 = sbr.rel (0) target = $region37
  $region36: #{vit_moe_forward.15} parent=0 // pred_region
    _
  $region37: #{vit_moe_forward.15} parent=0 // pred_fallthru
    _

// kernel: vit_moe_forward.14
$region0: #{vit_moe_forward.14}
  #allocation0 [shape = 'u32[]', space=smem, size = 0x4, offset = 0x4, fixed_abs, tag = 'smem constant byte address 0x4 - core index']
  #allocation1 [shape = 'u32[72,128]{1,0:T(1,128)}', space=vmem, size = 0x9000, scoped, tag = 'internal scratch']
  %s0 = inlined_call_operand.vmem [shape: f32[8,192], index: 0, kind: input, shape index: {}]
  %s1 = inlined_call_operand.vmem [shape: f32[1,192], index: 1, kind: input, shape index: {}]
  %s2 = inlined_call_operand.vmem [shape: f32[1,192], index: 2, kind: input, shape index: {}]
  %s3 = inlined_call_operand.vmem [shape: bf16[192,32], index: 3, kind: input, shape index: {}]
  %s4 = inlined_call_operand.vmem [shape: f32[1,32], index: 4, kind: input, shape index: {}]
  %s5 = inlined_call_operand.vmem [shape: f32[1,32], index: 5, kind: input, shape index: {}]
  %s6 = inlined_call_operand.vmem [shape: f32[1,32], index: 6, kind: input, shape index: {}]
  %s7 = inlined_call_operand.vmem [shape: f32[8,32], index: 7, kind: output, shape index: {}]
  %s8 = sld [smem:[#allocation0]]
  $region38: #{vit_moe_forward.14} parent=0
    _
  %s10 = ssub.s32 1, %s8
  %s11 = scalar_select 0, %s10, %s8
  // Predicated region
  $region2: #{vit_moe_forward.14} parent=0 // pred_check
    _
  $region3: #{vit_moe_forward.14} parent=0 // pred_check_branch
    %13 = sbr.rel (0) target = $region5
  $region4: #{vit_moe_forward.14} parent=0 // pred_region
    _
  $region5: #{vit_moe_forward.14} parent=0 // pred_fallthru
    _
  // Predicated region
  $region6: #{vit_moe_forward.14} parent=0 // pred_check
    _
  $region7: #{vit_moe_forward.14} parent=0 // pred_check_branch
    %15 = sbr.rel (0) target = $region9
  $region8: #{vit_moe_forward.14} parent=0 // pred_region
    _
  $region9: #{vit_moe_forward.14} parent=0 // pred_fallthru
    _
  // Predicated region
  $region10: #{vit_moe_forward.14} parent=0 // pred_check
    _
  $region11: #{vit_moe_forward.14} parent=0 // pred_check_branch
    %17 = sbr.rel (0) target = $region13
  $region12: #{vit_moe_forward.14} parent=0 // pred_region
    _
  $region13: #{vit_moe_forward.14} parent=0 // pred_fallthru
    _
  // Predicated region
  $region14: #{vit_moe_forward.14} parent=0 // pred_check
    _
  $region15: #{vit_moe_forward.14} parent=0 // pred_check_branch
    %19 = sbr.rel (0) target = $region17
  $region16: #{vit_moe_forward.14} parent=0 // pred_region
    _
  $region17: #{vit_moe_forward.14} parent=0 // pred_fallthru
    _
  // Predicated region
  $region18: #{vit_moe_forward.14} parent=0 // pred_check
    _
  $region19: #{vit_moe_forward.14} parent=0 // pred_check_branch
    %21 = sbr.rel (0) target = $region21
  $region20: #{vit_moe_forward.14} parent=0 // pred_region
    _
  $region21: #{vit_moe_forward.14} parent=0 // pred_fallthru
    _
  // Predicated region
  $region22: #{vit_moe_forward.14} parent=0 // pred_check
    _
  $region23: #{vit_moe_forward.14} parent=0 // pred_check_branch
    %23 = sbr.rel (0) target = $region25
  $region24: #{vit_moe_forward.14} parent=0 // pred_region
    _
  $region25: #{vit_moe_forward.14} parent=0 // pred_fallthru
    _
  // Predicated region
  $region26: #{vit_moe_forward.14} parent=0 // pred_check
    _
  $region27: #{vit_moe_forward.14} parent=0 // pred_check_branch
    %25 = sbr.rel (0) target = $region29
  $region28: #{vit_moe_forward.14} parent=0 // pred_region
    _
  $region29: #{vit_moe_forward.14} parent=0 // pred_fallthru
    _
  %v27 = vld [vmem:[%s0] sm:$0xff]
  %v28 = vld [vmem:[%s0 + $0x8] sm:$0xff]
  %v29 = vld [vmem:[%s1] sm:$0x3]
  %v30 = vld [vmem:[%s2] sm:$0x3]
  %vm31 = vcmask 523264
  %v32 = vsel %vm31, %v28, 0.0
  %v33 = vadd.f32 %v27, %v32
  %34 = vadd.xlane.f32.xlu0 %v33
  %v35 = vpop.xlane.xlu0 %34
  %v36 = vrcp.pop 192.0
  %v37 = vmul.f32 192.0, %v36
  %v38 = vsub.f32 1.0, %v37
  %v39 = vmul.f32 %v36, %v38
  %v40 = vadd.f32 %v36, %v39
  %vm41 = vweird.f32 %v36
  %v42 = vsel %vm41, %v36, %v40
  %v43 = vmul.f32 %v35, %v42
  %v44 = vsub.f32 %v27, %v43
  %v45 = vsub.f32 %v28, %v43
  %v46 = vmul.f32 %v44, %v44
  %v47 = vmul.f32 %v45, %v45
  %v48 = vsel %vm31, %v47, 0.0
  %v49 = vadd.f32 %v46, %v48
  %50 = vadd.xlane.f32.xlu0 %v49
  %v51 = vpop.xlane.xlu0 %50
  %v52 = vmul.f32 %v51, %v42
  %v53 = vadd.f32 %v52, 1e-05
  %v54 = vrsqrt.pop %v53
  %v55 = vmul.f32 %v54, %v53
  %v56 = vmul.f32 %v55, %v54
  %v57 = vmul.f32 0.5, %v56
  %v58 = vsub.f32 1.5, %v57
  %v59 = vmul.f32 %v54, %v58
  %vm60 = vweird.f32 %v53
  %vm61 = vweird.f32 %v54
  %vm62 = vmor %vm60, %vm61
  %v63 = vsel %vm62, %v54, %v59
  %v64 = vmul.f32 %v44, %v63
  %v65 = vmul.f32 %v45, %v63
  %v67 = vperm.slane %v29, 0
  %v68 = vperm.slane %v29, 1
  %v71 = vmul.f32 %v64, %v67
  %v72 = vmul.f32 %v65, %v68
  %v74 = vperm.slane %v30, 0
  %v75 = vperm.slane %v30, 1
  %v78 = vadd.f32 %v71, %v74
  %v79 = vadd.f32 %v72, %v75
  %v80 = vpack.c.bf16 %v78, %v78
  %v81 = vpack.c.bf16 %v79, %v79
  %v82 = vld [vmem:[%s3] sm:$0xf]
  %v83 = vld [vmem:[%s3 + $0x4] sm:$0xf]
  %v84 = vld [vmem:[%s3 + $0x8] sm:$0xf]
  %v85 = vld [vmem:[%s3 + $0xc] sm:$0xf]
  %v86 = vld [vmem:[%s3 + $0x10] sm:$0xf]
  %v87 = vld [vmem:[%s3 + $0x14] sm:$0xf]
  %v88 = vld [vmem:[%s3 + $0x18] sm:$0xf]
  %v89 = vld [vmem:[%s3 + $0x1c] sm:$0xf]
  %v90 = vld [vmem:[%s3 + $0x20] sm:$0xf]
  %v91 = vld [vmem:[%s3 + $0x24] sm:$0xf]
  %v92 = vld [vmem:[%s3 + $0x28] sm:$0xf]
  %v93 = vld [vmem:[%s3 + $0x2c] sm:$0xf]
  %v94 = vld [vmem:[%s3 + $0x30] sm:$0xf]
  %v95 = vld [vmem:[%s3 + $0x34] sm:$0xf]
  %v96 = vld [vmem:[%s3 + $0x38] sm:$0xf]
  %v97 = vld [vmem:[%s3 + $0x3c] sm:$0xf]
  %v98 = vld [vmem:[%s3 + $0x40] sm:$0xf]
  %v99 = vld [vmem:[%s3 + $0x44] sm:$0xf]
  %v100 = vld [vmem:[%s3 + $0x48] sm:$0xf]
  %v101 = vld [vmem:[%s3 + $0x4c] sm:$0xf]
  %v102 = vld [vmem:[%s3 + $0x50] sm:$0xf]
  %v103 = vld [vmem:[%s3 + $0x54] sm:$0xf]
  %v104 = vld [vmem:[%s3 + $0x58] sm:$0xf]
  %v105 = vld [vmem:[%s3 + $0x5c] sm:$0xf]
  %v106 = vld [vmem:[%s4] sm:$0x1]
  %v108 = vperm.slane %v106, 0
  %v134 = vunpack.c.l.b16 %v82
  %v135 = vunpack.c.l.b16 %v83
  %v136 = vunpack.c.l.b16 %v84
  %v137 = vunpack.c.l.b16 %v85
  %v138 = vunpack.c.l.b16 %v86
  %v139 = vunpack.c.l.b16 %v87
  %v140 = vunpack.c.l.b16 %v88
  %v141 = vunpack.c.l.b16 %v89
  %v142 = vunpack.c.l.b16 %v90
  %v143 = vunpack.c.l.b16 %v91
  %v144 = vunpack.c.l.b16 %v92
  %v145 = vunpack.c.l.b16 %v93
  %v146 = vunpack.c.l.b16 %v94
  %v147 = vunpack.c.l.b16 %v95
  %v148 = vunpack.c.l.b16 %v96
  %v149 = vunpack.c.l.b16 %v97
  %v150 = vunpack.c.l.b16 %v98
  %v151 = vunpack.c.l.b16 %v99
  %v152 = vunpack.c.l.b16 %v100
  %v153 = vunpack.c.l.b16 %v101
  %v154 = vunpack.c.l.b16 %v102
  %v155 = vunpack.c.l.b16 %v103
  %v156 = vunpack.c.l.b16 %v104
  %v157 = vunpack.c.l.b16 %v105
  %v158 = vpack.c.b16 %v135, %v134
  %v159 = vpack.c.b16 %v137, %v136
  %v160 = vpack.c.b16 %v139, %v138
  %v161 = vpack.c.b16 %v141, %v140
  %v162 = vpack.c.b16 %v143, %v142
  %v163 = vpack.c.b16 %v145, %v144
  %v164 = vpack.c.b16 %v147, %v146
  %v165 = vpack.c.b16 %v149, %v148
  %v166 = vpack.c.b16 %v151, %v150
  %v167 = vpack.c.b16 %v153, %v152
  %v168 = vpack.c.b16 %v155, %v154
  %v169 = vpack.c.b16 %v157, %v156
  %v183 = vsel %vm31, %v81, 0
  %185 = vmatpush.bf16.msra.mxu0 %v165
  %186 = vmatpush.bf16.msra.mxu0 %v164
  %187 = vmatpush.bf16.msra.mxu0 %v163
  %188 = vmatpush.bf16.msra.mxu0 %v162
  %189 = vmatpush.bf16.msra.mxu0 %v161
  %190 = vmatpush.bf16.msra.mxu0 %v160
  %191 = vmatpush.bf16.msra.mxu0 %v159
  %192 = vmatpush.bf16.msra.mxu0 %v158
  %193 = vmatmul.bf16.gmra.mxu0 %v80
  %v194 = vpop.f32.mrf.mxu0
  %v195 = vadd.f32 %v108, %v194
  %v196 = vpop.f32.mrf.mxu0
  %197 = vdwg.mxu0
  %198 = vmatpush.bf16.msra.mxu0 0
  %199 = vmatpush.bf16.msra.mxu0 0
  %200 = vmatpush.bf16.msra.mxu0 0
  %201 = vmatpush.bf16.msra.mxu0 0
  %202 = vmatpush.bf16.msra.mxu0 %v169
  %203 = vmatpush.bf16.msra.mxu0 %v168
  %204 = vmatpush.bf16.msra.mxu0 %v167
  %205 = vmatpush.bf16.msra.mxu0 %v166
  %206 = vmatmul.bf16.gmra.mxu0 %v183
  %v207 = vpop.f32.mrf.mxu0
  %v208 = vadd.f32 %v195, %v207
  %v209 = vpop.f32.mrf.mxu0
  %210 = vdwg.mxu0
  %v211 = vld [vmem:[%s5] sm:$0x1]
  %v212 = vld [vmem:[%s6] sm:$0x1]
  %vm213 = vcmask 261120
  %v214 = vsel %vm213, %v208, 0.0
  %215 = vadd.xlane.f32.xlu0 %v214
  %v216 = vpop.xlane.xlu0 %215
  %v217 = vrcp.pop 32.0
  %v218 = vmul.f32 32.0, %v217
  %v219 = vsub.f32 1.0, %v218
  %v220 = vmul.f32 %v217, %v219
  %v221 = vadd.f32 %v217, %v220
  %vm222 = vweird.f32 %v217
  %v223 = vsel %vm222, %v217, %v221
  %v224 = vmul.f32 %v216, %v223
  %v225 = vsub.f32 %v208, %v224
  %v226 = vmul.f32 %v225, %v225
  %v227 = vsel %vm213, %v226, 0.0
  %228 = vadd.xlane.f32.xlu0 %v227
  %v229 = vpop.xlane.xlu0 %228
  %v230 = vmul.f32 %v229, %v223
  %v231 = vadd.f32 %v230, 1e-05
  %v232 = vrsqrt.pop %v231
  %v233 = vmul.f32 %v232, %v231
  %v234 = vmul.f32 %v233, %v232
  %v235 = vmul.f32 0.5, %v234
  %v236 = vsub.f32 1.5, %v235
  %v237 = vmul.f32 %v232, %v236
  %vm238 = vweird.f32 %v231
  %vm239 = vweird.f32 %v232
  %vm240 = vmor %vm238, %vm239
  %v241 = vsel %vm240, %v232, %v237
  %v242 = vmul.f32 %v225, %v241
  %v244 = vperm.slane %v211, 0
  %v246 = vmul.f32 %v242, %v244
  %v248 = vperm.slane %v212, 0
  %v250 = vadd.f32 %v246, %v248
  %251 = vst.msk [vmem:[%s7] sm:$0xff] %vm213, %v250
  // Predicated region
  $region30: #{vit_moe_forward.14} parent=0 // pred_check
    _
  $region31: #{vit_moe_forward.14} parent=0 // pred_check_branch
    %253 = sbr.rel (0) target = $region33
  $region32: #{vit_moe_forward.14} parent=0 // pred_region
    _
  $region33: #{vit_moe_forward.14} parent=0 // pred_fallthru
    _
  // Predicated region
  $region34: #{vit_moe_forward.14} parent=0 // pred_check
    _
  $region35: #{vit_moe_forward.14} parent=0 // pred_check_branch
    %255 = sbr.rel (0) target = $region37
  $region36: #{vit_moe_forward.14} parent=0 // pred_region
    _
  $region37: #{vit_moe_forward.14} parent=0 // pred_fallthru
    _

// kernel: vit_moe_forward.17
$region0: #{vit_moe_forward.17}
  #allocation0 [shape = 'u32[]', space=smem, size = 0x4, offset = 0x4, fixed_abs, tag = 'smem constant byte address 0x4 - core index']
  #allocation1 [shape = 'u32[72,128]{1,0:T(1,128)}', space=vmem, size = 0x9000, scoped, tag = 'internal scratch']
  %s0 = inlined_call_operand.vmem [shape: bf16[2,5,16], index: 0, kind: input, shape index: {}]
  %s1 = inlined_call_operand.vmem [shape: bf16[2,5,16], index: 1, kind: input, shape index: {}]
  %s2 = inlined_call_operand.vmem [shape: bf16[2,5,16], index: 2, kind: input, shape index: {}]
  %s3 = inlined_call_operand.vmem [shape: bf16[2,5,16], index: 3, kind: output, shape index: {}]
  %s4 = sld [smem:[#allocation0]]
  $region45: #{vit_moe_forward.17} parent=0
    _
  %s6 = ssub.s32 1, %s4
  %s7 = scalar_select 0, %s6, %s4
  loop: start=0, step=1, limit=4
  $region2: #{vit_moe_forward.17} parent=0 // loop_pre_header
    _
  $region3: #{vit_moe_forward.17} parent=0 // loop_header
    %s9 = sphi 0, %s13
    %p10 = scmp.ge.s32.totalorder %s9, 4
    %s19 = sphi 0, %s21
    %s22 = sphi 0, %s19
    %s23 = sphi 0, %s22
    %s39 = sphi 0, %s23
    %s45 = sphi 0, %s47
    %s48 = sphi 0, %s45
    %s49 = sphi 0, %s48
    %s65 = sphi 0, %s49
    %s71 = sphi 0, %s73
    %s74 = sphi 0, %s71
    %s75 = sphi 0, %s74
    %s91 = sphi 0, %s75
    %s97 = sphi 0, %s99
    %s100 = sphi 0, %s97
    %s101 = sphi 0, %s100
    %s117 = sphi 0, %s101
  $region4: #{vit_moe_forward.17} parent=0 // loop_header_branch
    %12 = sbr.rel (%p10) target = $region8
  $region5: #{vit_moe_forward.17} parent=0 // loop_body
    %s14 = ssub.s32 %s9, 1
    %s15 = ssub.s32 %s9, 2
    %s16 = sadd.s32 %s9, 1
    %s17 = ssub.s32 %s9, %s16
    %p18 = scmp.eq.s32.totalorder %s17, 0
    %s20 = sadd.s32 %s19, 1
    %s21 = scalar_select %p18, %s19, %s20
    %p24 = pneg %p18
    %p25 = scmp.eq.s32.totalorder %s9, 1
    %p26 = por %p24, %p25
    %p27 = scmp.ne.s32.totalorder %s19, %s22
    %p28 = scmp.eq.s32.totalorder %s9, 0
    %p29 = por %p27, %p28
    %p30 = scmp.ne.s32.totalorder %s19, %s22
    %p31 = scmp.eq.s32.totalorder %s14, 1
    %p32 = por %p30, %p31
    %p33 = scmp.ne.s32.totalorder %s22, %s23
    %p34 = scmp.eq.s32.totalorder %s14, 0
    %p35 = por %p33, %p34
    %p36 = scmp.ne.s32.totalorder %s22, %s23
    %p37 = scmp.eq.s32.totalorder %s15, 1
    %p38 = por %p36, %p37
    %p40 = scmp.ne.s32.totalorder %s23, %s39
    %p41 = scmp.eq.s32.totalorder %s15, 0
    %p42 = por %p40, %p41
    %s43 = ssub.s32 %s9, %s16
    %p44 = scmp.eq.s32.totalorder %s43, 0
    %s46 = sadd.s32 %s45, 1
    %s47 = scalar_select %p44, %s45, %s46
    %p50 = pneg %p44
    %p51 = scmp.eq.s32.totalorder %s9, 1
    %p52 = por %p50, %p51
    %p53 = scmp.ne.s32.totalorder %s45, %s48
    %p54 = scmp.eq.s32.totalorder %s9, 0
    %p55 = por %p53, %p54
    %p56 = scmp.ne.s32.totalorder %s45, %s48
    %p57 = scmp.eq.s32.totalorder %s14, 1
    %p58 = por %p56, %p57
    %p59 = scmp.ne.s32.totalorder %s48, %s49
    %p60 = scmp.eq.s32.totalorder %s14, 0
    %p61 = por %p59, %p60
    %p62 = scmp.ne.s32.totalorder %s48, %s49
    %p63 = scmp.eq.s32.totalorder %s15, 1
    %p64 = por %p62, %p63
    %p66 = scmp.ne.s32.totalorder %s49, %s65
    %p67 = scmp.eq.s32.totalorder %s15, 0
    %p68 = por %p66, %p67
    %s69 = ssub.s32 %s9, %s16
    %p70 = scmp.eq.s32.totalorder %s69, 0
    %s72 = sadd.s32 %s71, 1
    %s73 = scalar_select %p70, %s71, %s72
    %p76 = pneg %p70
    %p77 = scmp.eq.s32.totalorder %s9, 1
    %p78 = por %p76, %p77
    %p79 = scmp.ne.s32.totalorder %s71, %s74
    %p80 = scmp.eq.s32.totalorder %s9, 0
    %p81 = por %p79, %p80
    %p82 = scmp.ne.s32.totalorder %s71, %s74
    %p83 = scmp.eq.s32.totalorder %s14, 1
    %p84 = por %p82, %p83
    %p85 = scmp.ne.s32.totalorder %s74, %s75
    %p86 = scmp.eq.s32.totalorder %s14, 0
    %p87 = por %p85, %p86
    %p88 = scmp.ne.s32.totalorder %s74, %s75
    %p89 = scmp.eq.s32.totalorder %s15, 1
    %p90 = por %p88, %p89
    %p92 = scmp.ne.s32.totalorder %s75, %s91
    %p93 = scmp.eq.s32.totalorder %s15, 0
    %p94 = por %p92, %p93
    %s95 = ssub.s32 %s9, %s16
    %p96 = scmp.eq.s32.totalorder %s95, 0
    %s98 = sadd.s32 %s97, 1
    %s99 = scalar_select %p96, %s97, %s98
    %p102 = pneg %p96
    %p103 = scmp.eq.s32.totalorder %s9, 1
    %p104 = por %p102, %p103
    %p105 = scmp.ne.s32.totalorder %s97, %s100
    %p106 = scmp.eq.s32.totalorder %s9, 0
    %p107 = por %p105, %p106
    %p108 = scmp.ne.s32.totalorder %s97, %s100
    %p109 = scmp.eq.s32.totalorder %s14, 1
    %p110 = por %p108, %p109
    %p111 = scmp.ne.s32.totalorder %s100, %s101
    %p112 = scmp.eq.s32.totalorder %s14, 0
    %p113 = por %p111, %p112
    %p114 = scmp.ne.s32.totalorder %s100, %s101
    %p115 = scmp.eq.s32.totalorder %s15, 1
    %p116 = por %p114, %p115
    %p118 = scmp.ne.s32.totalorder %s101, %s117
    %p119 = scmp.eq.s32.totalorder %s15, 0
    %p120 = por %p118, %p119
    %p121 = scmp.le.s32.totalorder 1, %s9
    %p122 = scmp.lt.s32.totalorder %s9, 3
    %p123 = pnand %p121, %p122
    %p124 = pneg %p123
    // Predicated region
    $region9: #{vit_moe_forward.17} parent=5 // pred_check
      _
    $region10: #{vit_moe_forward.17} parent=5 // pred_check_branch
      %126 = sbr.rel (%p123) target = $region12
    $region11: #{vit_moe_forward.17} parent=5 // pred_region
      %s127 = ssub.s32 %s9, 1
    $region12: #{vit_moe_forward.17} parent=5 // pred_fallthru
      _
    %p128 = scmp.lt.s32.totalorder %s9, 2
    // Predicated region
    $region13: #{vit_moe_forward.17} parent=5 // pred_check
      %p129 = pneg %p128
    $region14: #{vit_moe_forward.17} parent=5 // pred_check_branch
      %131 = sbr.rel (%p129) target = $region16
    $region15: #{vit_moe_forward.17} parent=5 // pred_region
      // Predicated region
      $region17: #{vit_moe_forward.17} parent=15 // pred_check
        %p132 = pneg %p29
      $region18: #{vit_moe_forward.17} parent=15 // pred_check_branch
        %134 = sbr.rel (%p132) target = $region20
      $region19: #{vit_moe_forward.17} parent=15 // pred_region
        %p135 = scmp.lt.s32.totalorder %s9, 1
        %s136 = scalar_select %p135, %s9, 1
        %s137 = smul.addr %s136, 4
        %s138 = scalar_lea.vmem %s0, %s137
      $region20: #{vit_moe_forward.17} parent=15 // pred_fallthru
        _
      // Predicated region
      $region21: #{vit_moe_forward.17} parent=15 // pred_check
        %p139 = pneg %p55
      $region22: #{vit_moe_forward.17} parent=15 // pred_check_branch
        %141 = sbr.rel (%p139) target = $region24
      $region23: #{vit_moe_forward.17} parent=15 // pred_region
        %p142 = scmp.lt.s32.totalorder %s9, 1
        %s143 = scalar_select %p142, %s9, 1
        %s144 = smul.addr %s143, 4
        %s145 = scalar_lea.vmem %s1, %s144
      $region24: #{vit_moe_forward.17} parent=15 // pred_fallthru
        _
      // Predicated region
      $region25: #{vit_moe_forward.17} parent=15 // pred_check
        %p146 = pneg %p81
      $region26: #{vit_moe_forward.17} parent=15 // pred_check_branch
        %148 = sbr.rel (%p146) target = $region28
      $region27: #{vit_moe_forward.17} parent=15 // pred_region
        %p149 = scmp.lt.s32.totalorder %s9, 1
        %s150 = scalar_select %p149, %s9, 1
        %s151 = smul.addr %s150, 4
        %s152 = scalar_lea.vmem %s2, %s151
      $region28: #{vit_moe_forward.17} parent=15 // pred_fallthru
        _
    $region16: #{vit_moe_forward.17} parent=5 // pred_fallthru
      _
    %p153 = scmp.le.s32.totalorder 1, %s9
    %p154 = scmp.lt.s32.totalorder %s9, 3
    %p155 = pnand %p153, %p154
    %p156 = pneg %p155
    // Predicated region
    $region29: #{vit_moe_forward.17} parent=5 // pred_check
      _
    $region30: #{vit_moe_forward.17} parent=5 // pred_check_branch
      %158 = sbr.rel (%p155) target = $region32
    $region31: #{vit_moe_forward.17} parent=5 // pred_region
      %s159 = ssub.s32 %s9, 1
      %p160 = scmp.lt.s32.totalorder %s14, 1
      %s161 = scalar_select %p160, %s14, 1
      %s162 = smul.addr %s161, 4
      %s163 = scalar_lea.vmem %s0, %s162
      %p164 = pneg %p35
      %p165 = pneg %p32
      %p166 = scmp.lt.s32.totalorder %s14, 1
      %s167 = scalar_select %p166, %s14, 1
      %s168 = smul.addr %s167, 4
      %s169 = scalar_lea.vmem %s1, %s168
      %p170 = pneg %p61
      %p171 = pneg %p58
      %p172 = scmp.lt.s32.totalorder %s14, 1
      %s173 = scalar_select %p172, %s14, 1
      %s174 = smul.addr %s173, 4
      %s175 = scalar_lea.vmem %s2, %s174
      %p176 = pneg %p87
      %p177 = pneg %p84
      %p178 = pneg %p113
      %p179 = pneg %p110
      %p180 = scmp.lt.s32.totalorder %s14, 1
      %s181 = scalar_select %p180, %s14, 1
      %s182 = smul.addr %s181, 4
      %s183 = scalar_lea.vmem %s3, %s182
      %p184 = scmp.lt.s32.totalorder %s14, 1
      %s185 = scalar_select %p184, %s14, 1
      %s186 = smul.addr %s185, 4
      %s187 = scalar_lea.vmem %s0, %s186
      %p188 = scmp.lt.s32.totalorder %s14, 1
      %s189 = scalar_select %p188, %s14, 1
      %s190 = smul.addr %s189, 4
      %s191 = scalar_lea.vmem %s1, %s190
      %p192 = scmp.lt.s32.totalorder %s14, 1
      %s193 = scalar_select %p192, %s14, 1
      %s194 = smul.addr %s193, 4
      %s195 = scalar_lea.vmem %s2, %s194
      %p196 = scmp.lt.s32.totalorder %s14, 1
      %s197 = scalar_select %p196, %s14, 1
      %s198 = smul.addr %s197, 4
      %s199 = scalar_lea.vmem %s3, %s198
      %v201 = vld [vmem:[%s187] sm:$0x7]
      %v202 = vld [vmem:[%s191] sm:$0x7]
      %v203 = vld [vmem:[%s195] sm:$0x7]
      %vm204 = vcmask 64512
      %v206 = vsel %vm204, %v201, 0
      %v209 = vsel %vm204, %v202, 0
      %211 = vmatpush.bf16.xpose.msra.mxu0 0
      %212 = vmatpush.bf16.xpose.msra.mxu0 0
      %213 = vmatpush.bf16.xpose.msra.mxu0 0
      %214 = vmatpush.bf16.xpose.msra.mxu0 0
      %215 = vmatpush.bf16.xpose.msra.mxu0 0
      %216 = vmatpush.bf16.xpose.msra.mxu0 0
      %217 = vmatpush.bf16.xpose.msra.mxu0 0
      %218 = vmatpush.bf16.xpose.msra.mxu0 %v209
      %219 = vmatmul.bf16.gmra.mxu0 %v206
      %v220 = vpop.f32.mrf.mxu0
      %v221 = vadd.f32 0.0, %v220
      %v222 = vpop.f32.mrf.mxu0
      %223 = vdwg.mxu0
      %v224 = vmul.f32 %v221, 0.35355338
      %vm225 = vcmask 36864
      %v226 = vsel %vm225, %v224, -inf
      %227 = vmax.xlane.f32.xlu0 %v226
      %v228 = vpop.xlane.xlu0 %227
      %v229 = vsub.f32 %v224, %v228
      %v230 = vmul.f32 %v229, 1.442695
      %v231 = vpow.pop %v230
      %v232 = vsel %vm225, %v231, 0.0
      %233 = vadd.xlane.f32.xlu0 %v232
      %v234 = vpop.xlane.xlu0 %233
      %v235 = vrcp.pop %v234
      %v236 = vmul.f32 %v231, %v235
      %v237 = vpack.c.bf16 %v236, %v236
      %vm238 = vcmask 39936
      %v240 = vsel %vm238, %v237, 0
      %vm242 = vcmask 1041408
      %vm243 = vcmask 1042432
      %v244 = vsel %vm242, 4294967295, 65535
      %v245 = vsel %vm243, %v244, 0
      %v247 = vand.u32 %v203, %v245
      %249 = vmatpush.bf16.msra.mxu0 0
      %250 = vmatpush.bf16.msra.mxu0 0
      %251 = vmatpush.bf16.msra.mxu0 0
      %252 = vmatpush.bf16.msra.mxu0 0
      %253 = vmatpush.bf16.msra.mxu0 0
      %254 = vmatpush.bf16.msra.mxu0 0
      %255 = vmatpush.bf16.msra.mxu0 0
      %256 = vmatpush.bf16.msra.mxu0 %v247
      %257 = vmatmul.bf16.gmra.mxu0 %v240
      %v258 = vpop.f32.mrf.mxu0
      %v259 = vadd.f32 0.0, %v258
      %v260 = vpop.f32.mrf.mxu0
      %261 = vdwg.mxu0
      %v263 = vunpack.c.l.b16 %v201
      %v264 = vpack.c.b16 %v263, %v263
      %265 = vrot.lane.b32.xlu0 %v264, 120
      %v266 = vpop.permute.xlu0 %265
      %v268 = vunpack.c.l.b16 %v202
      %v269 = vpack.c.b16 %v268, %v268
      %270 = vrot.lane.b32.xlu0 %v269, 120
      %v271 = vpop.permute.xlu0 %270
      %v273 = vsel %vm204, %v266, 0
      %v276 = vsel %vm204, %v271, 0
      %278 = vmatpush.bf16.xpose.msra.mxu0 0
      %279 = vmatpush.bf16.xpose.msra.mxu0 0
      %280 = vmatpush.bf16.xpose.msra.mxu0 0
      %281 = vmatpush.bf16.xpose.msra.mxu0 0
      %282 = vmatpush.bf16.xpose.msra.mxu0 0
      %283 = vmatpush.bf16.xpose.msra.mxu0 0
      %284 = vmatpush.bf16.xpose.msra.mxu0 0
      %285 = vmatpush.bf16.xpose.msra.mxu0 %v276
      %286 = vmatmul.bf16.gmra.mxu0 %v273
      %v287 = vpop.f32.mrf.mxu0
      %v288 = vadd.f32 0.0, %v287
      %v289 = vpop.f32.mrf.mxu0
      %290 = vdwg.mxu0
      %v291 = vmul.f32 %v288, 0.35355338
      %v292 = vsel %vm225, %v291, -inf
      %293 = vmax.xlane.f32.xlu0 %v292
      %v294 = vpop.xlane.xlu0 %293
      %v295 = vsub.f32 %v291, %v294
      %v296 = vmul.f32 %v295, 1.442695
      %v297 = vpow.pop %v296
      %v298 = vsel %vm225, %v297, 0.0
      %299 = vadd.xlane.f32.xlu0 %v298
      %v300 = vpop.xlane.xlu0 %299
      %v301 = vrcp.pop %v300
      %v302 = vmul.f32 %v297, %v301
      %v303 = vpack.c.bf16 %v302, %v302
      %v305 = vunpack.c.l.b16 %v203
      %v306 = vpack.c.b16 %v305, %v305
      %307 = vrot.lane.b32.xlu0 %v306, 120
      %v308 = vpop.permute.xlu0 %307
      %v310 = vsel %vm238, %v303, 0
      %v313 = vand.u32 %v308, %v245
      %315 = vmatpush.bf16.msra.mxu0 0
      %316 = vmatpush.bf16.msra.mxu0 0
      %317 = vmatpush.bf16.msra.mxu0 0
      %318 = vmatpush.bf16.msra.mxu0 0
      %319 = vmatpush.bf16.msra.mxu0 0
      %320 = vmatpush.bf16.msra.mxu0 0
      %321 = vmatpush.bf16.msra.mxu0 0
      %322 = vmatpush.bf16.msra.mxu0 %v313
      %323 = vmatmul.bf16.gmra.mxu0 %v310
      %v324 = vpop.f32.mrf.mxu0
      %v325 = vadd.f32 0.0, %v324
      %v326 = vpop.f32.mrf.mxu0
      %327 = vdwg.mxu0
      %329 = vrot.lane.b32.xlu0 %v325, 8
      %v330 = vpop.permute.xlu0 %329
      %v332 = vsel %vm204, %v259, %v330
      %v333 = vpack.c.bf16 %v332, %v332
      %vm334 = vcmask 124928
      %vm335 = vsmask.f32 2304
      %vm336 = vmand %vm334, %vm335
      %v337 = vld [vmem:[%s199] sm:$0x7]
      %v338 = vsel %vm336, %v333, %v337
      %339 = vst [vmem:[%s199] sm:$0x7] %v338
      %p340 = scmp.lt.s32.totalorder %s14, 1
      %s341 = scalar_select %p340, %s14, 1
      %s342 = smul.addr %s341, 4
      %s343 = scalar_lea.vmem %s3, %s342
      // Predicated region
      $region33: #{vit_moe_forward.17} parent=31 // pred_check
        %p344 = pneg %p110
      $region34: #{vit_moe_forward.17} parent=31 // pred_check_branch
        %346 = sbr.rel (%p344) target = $region36
      $region35: #{vit_moe_forward.17} parent=31 // pred_region
        _
      $region36: #{vit_moe_forward.17} parent=31 // pred_fallthru
        _
    $region32: #{vit_moe_forward.17} parent=5 // pred_fallthru
      _
    %p347 = scmp.le.s32.totalorder 2, %s9
    // Predicated region
    $region37: #{vit_moe_forward.17} parent=5 // pred_check
      %p348 = pneg %p347
    $region38: #{vit_moe_forward.17} parent=5 // pred_check_branch
      %350 = sbr.rel (%p348) target = $region40
    $region39: #{vit_moe_forward.17} parent=5 // pred_region
      %s351 = ssub.s32 %s9, 2
      // Predicated region
      $region41: #{vit_moe_forward.17} parent=39 // pred_check
        %p352 = pneg %p116
      $region42: #{vit_moe_forward.17} parent=39 // pred_check_branch
        %354 = sbr.rel (%p352) target = $region44
      $region43: #{vit_moe_forward.17} parent=39 // pred_region
        %p355 = scmp.lt.s32.totalorder %s15, 1
        %s356 = scalar_select %p355, %s15, 1
        %s357 = smul.addr %s356, 4
        %s358 = scalar_lea.vmem %s3, %s357
      $region44: #{vit_moe_forward.17} parent=39 // pred_fallthru
        _
    $region40: #{vit_moe_forward.17} parent=5 // pred_fallthru
      _
  $region6: #{vit_moe_forward.17} parent=0 // loop_footer
    %s13 = sadd.s32 1, %s9
  $region7: #{vit_moe_forward.17} parent=0 // loop_footer_branch
    %8 = sbr.rel target = $region3
  $region8: #{vit_moe_forward.17} parent=0 // loop_exit
    _

// kernel: vit_moe_forward.18
$region0: #{vit_moe_forward.18}
  #allocation0 [shape = 'u32[]', space=smem, size = 0x4, offset = 0x4, fixed_abs, tag = 'smem constant byte address 0x4 - core index']
  #allocation1 [shape = 'u32[72,128]{1,0:T(1,128)}', space=vmem, size = 0x9000, scoped, tag = 'internal scratch']
  #allocation2 [shape = 'f32[10,32]{1,0:T(8,128)}', space=vmem, size = 0x2000, scoped, tag = 'scratch operand']
  %s0 = inlined_call_operand.vmem [shape: bf16[10,16], index: 0, kind: input, shape index: {}]
  %s1 = inlined_call_operand.vmem [shape: bf16[4,10,16], index: 1, kind: input, shape index: {}]
  %s2 = inlined_call_operand.vmem [shape: bf16[4,16,32], index: 2, kind: input, shape index: {}]
  %s3 = inlined_call_operand.vmem [shape: f32[10,32], index: 3, kind: output, shape index: {}]
  %s4 = sld [smem:[#allocation0]]
  $region53: #{vit_moe_forward.18} parent=0
    _
  %s6 = ssub.s32 1, %s4
  %s7 = scalar_select 0, %s6, %s4
  loop: start=0, step=1, limit=6
  $region2: #{vit_moe_forward.18} parent=0 // loop_pre_header
    _
  $region3: #{vit_moe_forward.18} parent=0 // loop_header
    %s9 = sphi 0, %s13
    %p10 = scmp.ge.s32.totalorder %s9, 6
    %s16 = sphi 0, %s28
    %s17 = sphi 0, %s24
    %s18 = sphi 0, %s16
    %s19 = sphi 0, %s17
    %s20 = sphi 0, %s18
    %s21 = sphi 0, %s19
    %s31 = sphi 0, %s33
    %s34 = sphi 0, %s31
    %s35 = sphi 0, %s34
    %s51 = sphi 0, %s35
    %s59 = sphi 0, %s61
    %s62 = sphi 0, %s59
    %s63 = sphi 0, %s62
    %s79 = sphi 0, %s63
    %s85 = sphi 0, %s87
    %s88 = sphi 0, %s85
    %s89 = sphi 0, %s88
    %s105 = sphi 0, %s89
    %s111 = sphi 0, %s113
    %s114 = sphi 0, %s111
    %s115 = sphi 0, %s114
    %s131 = sphi 0, %s115
  $region4: #{vit_moe_forward.18} parent=0 // loop_header_branch
    %12 = sbr.rel (%p10) target = $region8
  $region5: #{vit_moe_forward.18} parent=0 // loop_body
    %s14 = ssub.s32 %s9, 1
    %s15 = ssub.s32 %s9, 2
    %s22 = sadd.s32 1, %s17
    %p23 = scmp.ge.s32.totalorder %s22, 4
    %s24 = scalar_select %p23, 0, %s22
    %s25 = sadd.s32 1, %s16
    %s26 = scalar_select %p23, %s25, %s16
    %p27 = scmp.ge.s32.totalorder %s26, 1
    %s28 = scalar_select %p27, 0, %s26
    %s29 = ssub.s32 %s16, %s28
    %p30 = scmp.eq.s32.totalorder %s29, 0
    %s32 = sadd.s32 %s31, 1
    %s33 = scalar_select %p30, %s31, %s32
    %p36 = pneg %p30
    %p37 = scmp.eq.s32.totalorder %s9, 3
    %p38 = por %p36, %p37
    %p39 = scmp.ne.s32.totalorder %s31, %s34
    %p40 = scmp.eq.s32.totalorder %s9, 0
    %p41 = por %p39, %p40
    %p42 = scmp.ne.s32.totalorder %s31, %s34
    %p43 = scmp.eq.s32.totalorder %s14, 3
    %p44 = por %p42, %p43
    %p45 = scmp.ne.s32.totalorder %s34, %s35
    %p46 = scmp.eq.s32.totalorder %s14, 0
    %p47 = por %p45, %p46
    %p48 = scmp.ne.s32.totalorder %s34, %s35
    %p49 = scmp.eq.s32.totalorder %s15, 3
    %p50 = por %p48, %p49
    %p52 = scmp.ne.s32.totalorder %s35, %s51
    %p53 = scmp.eq.s32.totalorder %s15, 0
    %p54 = por %p52, %p53
    %s55 = ssub.s32 %s17, %s24
    %s56 = ssub.s32 %s16, %s28
    %s57 = sor.u32 %s55, %s56
    %p58 = scmp.eq.s32.totalorder %s57, 0
    %s60 = sadd.s32 %s59, 1
    %s61 = scalar_select %p58, %s59, %s60
    %p64 = pneg %p58
    %p65 = scmp.eq.s32.totalorder %s9, 3
    %p66 = por %p64, %p65
    %p67 = scmp.ne.s32.totalorder %s59, %s62
    %p68 = scmp.eq.s32.totalorder %s9, 0
    %p69 = por %p67, %p68
    %p70 = scmp.ne.s32.totalorder %s59, %s62
    %p71 = scmp.eq.s32.totalorder %s14, 3
    %p72 = por %p70, %p71
    %p73 = scmp.ne.s32.totalorder %s62, %s63
    %p74 = scmp.eq.s32.totalorder %s14, 0
    %p75 = por %p73, %p74
    %p76 = scmp.ne.s32.totalorder %s62, %s63
    %p77 = scmp.eq.s32.totalorder %s15, 3
    %p78 = por %p76, %p77
    %p80 = scmp.ne.s32.totalorder %s63, %s79
    %p81 = scmp.eq.s32.totalorder %s15, 0
    %p82 = por %p80, %p81
    %s83 = ssub.s32 %s17, %s24
    %p84 = scmp.eq.s32.totalorder %s83, 0
    %s86 = sadd.s32 %s85, 1
    %s87 = scalar_select %p84, %s85, %s86
    %p90 = pneg %p84
    %p91 = scmp.eq.s32.totalorder %s9, 3
    %p92 = por %p90, %p91
    %p93 = scmp.ne.s32.totalorder %s85, %s88
    %p94 = scmp.eq.s32.totalorder %s9, 0
    %p95 = por %p93, %p94
    %p96 = scmp.ne.s32.totalorder %s85, %s88
    %p97 = scmp.eq.s32.totalorder %s14, 3
    %p98 = por %p96, %p97
    %p99 = scmp.ne.s32.totalorder %s88, %s89
    %p100 = scmp.eq.s32.totalorder %s14, 0
    %p101 = por %p99, %p100
    %p102 = scmp.ne.s32.totalorder %s88, %s89
    %p103 = scmp.eq.s32.totalorder %s15, 3
    %p104 = por %p102, %p103
    %p106 = scmp.ne.s32.totalorder %s89, %s105
    %p107 = scmp.eq.s32.totalorder %s15, 0
    %p108 = por %p106, %p107
    %s109 = ssub.s32 %s16, %s28
    %p110 = scmp.eq.s32.totalorder %s109, 0
    %s112 = sadd.s32 %s111, 1
    %s113 = scalar_select %p110, %s111, %s112
    %p116 = pneg %p110
    %p117 = scmp.eq.s32.totalorder %s9, 3
    %p118 = por %p116, %p117
    %p119 = scmp.ne.s32.totalorder %s111, %s114
    %p120 = scmp.eq.s32.totalorder %s9, 0
    %p121 = por %p119, %p120
    %p122 = scmp.ne.s32.totalorder %s111, %s114
    %p123 = scmp.eq.s32.totalorder %s14, 3
    %p124 = por %p122, %p123
    %p125 = scmp.ne.s32.totalorder %s114, %s115
    %p126 = scmp.eq.s32.totalorder %s14, 0
    %p127 = por %p125, %p126
    %p128 = scmp.ne.s32.totalorder %s114, %s115
    %p129 = scmp.eq.s32.totalorder %s15, 3
    %p130 = por %p128, %p129
    %p132 = scmp.ne.s32.totalorder %s115, %s131
    %p133 = scmp.eq.s32.totalorder %s15, 0
    %p134 = por %p132, %p133
    %p135 = scmp.le.s32.totalorder 1, %s9
    %p136 = scmp.lt.s32.totalorder %s9, 5
    %p137 = pnand %p135, %p136
    %p138 = pneg %p137
    // Predicated region
    $region9: #{vit_moe_forward.18} parent=5 // pred_check
      _
    $region10: #{vit_moe_forward.18} parent=5 // pred_check_branch
      %140 = sbr.rel (%p137) target = $region12
    $region11: #{vit_moe_forward.18} parent=5 // pred_region
      %s141 = ssub.s32 %s9, 1
      // Predicated region
      $region13: #{vit_moe_forward.18} parent=11 // pred_check
        %p142 = pneg %p47
      $region14: #{vit_moe_forward.18} parent=11 // pred_check_branch
        %144 = sbr.rel (%p142) target = $region16
      $region15: #{vit_moe_forward.18} parent=11 // pred_region
        %s145 = smul.u32 2, %s18
        %p146 = scmp.lt.s32.totalorder %s145, 1
        %s147 = scalar_select %p146, %s145, 1
        %s148 = smul.addr %s147, 4
        %s149 = scalar_lea.vmem %s0, %s148
        %s150 = smul.u32 2, %s18
      $region16: #{vit_moe_forward.18} parent=11 // pred_fallthru
        _
    $region12: #{vit_moe_forward.18} parent=5 // pred_fallthru
      _
    %p151 = scmp.lt.s32.totalorder %s9, 4
    // Predicated region
    $region17: #{vit_moe_forward.18} parent=5 // pred_check
      %p152 = pneg %p151
    $region18: #{vit_moe_forward.18} parent=5 // pred_check_branch
      %154 = sbr.rel (%p152) target = $region20
    $region19: #{vit_moe_forward.18} parent=5 // pred_region
      // Predicated region
      $region21: #{vit_moe_forward.18} parent=19 // pred_check
        %p155 = pneg %p69
      $region22: #{vit_moe_forward.18} parent=19 // pred_check_branch
        %157 = sbr.rel (%p155) target = $region24
      $region23: #{vit_moe_forward.18} parent=19 // pred_region
        %s158 = smul.u32 2, %s16
        %p159 = scmp.lt.s32.totalorder %s17, 3
        %s160 = scalar_select %p159, %s17, 3
        %p161 = scmp.lt.s32.totalorder %s158, 1
        %s162 = scalar_select %p161, %s158, 1
        %s163 = smul.addr %s160, 2
        %s164 = sadd.s32 %s162, %s163
        %s165 = smul.addr %s164, 4
        %s166 = scalar_lea.vmem %s1, %s165
        %s167 = smul.u32 2, %s16
      $region24: #{vit_moe_forward.18} parent=19 // pred_fallthru
        _
      // Predicated region
      $region25: #{vit_moe_forward.18} parent=19 // pred_check
        %p168 = pneg %p95
      $region26: #{vit_moe_forward.18} parent=19 // pred_check_branch
        %170 = sbr.rel (%p168) target = $region28
      $region27: #{vit_moe_forward.18} parent=19 // pred_region
        %p171 = scmp.lt.s32.totalorder %s17, 3
        %s172 = scalar_select %p171, %s17, 3
        %s173 = smul.addr %s172, 2
        %s174 = smul.addr %s173, 4
        %s175 = scalar_lea.vmem %s2, %s174
      $region28: #{vit_moe_forward.18} parent=19 // pred_fallthru
        _
    $region20: #{vit_moe_forward.18} parent=5 // pred_fallthru
      _
    %p176 = scmp.le.s32.totalorder 1, %s9
    %p177 = scmp.lt.s32.totalorder %s9, 5
    %p178 = pnand %p176, %p177
    %p179 = pneg %p178
    // Predicated region
    $region29: #{vit_moe_forward.18} parent=5 // pred_check
      _
    $region30: #{vit_moe_forward.18} parent=5 // pred_check_branch
      %181 = sbr.rel (%p178) target = $region32
    $region31: #{vit_moe_forward.18} parent=5 // pred_region
      %s182 = ssub.s32 %s9, 1
      %s183 = smul.u32 2, %s18
      %p184 = scmp.lt.s32.totalorder %s183, 1
      %s185 = scalar_select %p184, %s183, 1
      %s186 = smul.addr %s185, 4
      %s187 = scalar_lea.vmem %s0, %s186
      %p188 = pneg %p47
      %p189 = pneg %p44
      %s190 = smul.u32 2, %s18
      %p191 = scmp.lt.s32.totalorder %s19, 3
      %s192 = scalar_select %p191, %s19, 3
      %p193 = scmp.lt.s32.totalorder %s190, 1
      %s194 = scalar_select %p193, %s190, 1
      %s195 = smul.addr %s192, 2
      %s196 = sadd.s32 %s194, %s195
      %s197 = smul.addr %s196, 4
      %s198 = scalar_lea.vmem %s1, %s197
      %p199 = pneg %p75
      %p200 = pneg %p72
      %p201 = scmp.lt.s32.totalorder %s19, 3
      %s202 = scalar_select %p201, %s19, 3
      %s203 = smul.addr %s202, 2
      %s204 = smul.addr %s203, 4
      %s205 = scalar_lea.vmem %s2, %s204
      %p206 = pneg %p101
      %p207 = pneg %p98
      %p208 = pneg %p127
      %p209 = pneg %p124
      %s210 = smul.u32 2, %s18
      %p211 = scmp.lt.s32.totalorder %s210, 1
      %s212 = scalar_select %p211, %s210, 1
      %s213 = smul.addr %s212, 8
      %s214 = scalar_lea.vmem %s3, %s213
      %s215 = smul.u32 2, %s18
      %p216 = scmp.lt.s32.totalorder %s215, 1
      %s217 = scalar_select %p216, %s215, 1
      %s218 = smul.addr %s217, 4
      %s219 = scalar_lea.vmem %s0, %s218
      %s220 = smul.u32 2, %s18
      %s221 = smul.u32 2, %s18
      %p222 = scmp.lt.s32.totalorder %s19, 3
      %s223 = scalar_select %p222, %s19, 3
      %p224 = scmp.lt.s32.totalorder %s221, 1
      %s225 = scalar_select %p224, %s221, 1
      %s226 = smul.addr %s223, 2
      %s227 = sadd.s32 %s225, %s226
      %s228 = smul.addr %s227, 4
      %s229 = scalar_lea.vmem %s1, %s228
      %s230 = smul.u32 2, %s18
      %p231 = scmp.lt.s32.totalorder %s19, 3
      %s232 = scalar_select %p231, %s19, 3
      %s233 = smul.addr %s232, 2
      %s234 = smul.addr %s233, 4
      %s235 = scalar_lea.vmem %s2, %s234
      %s236 = smul.u32 2, %s18
      %p237 = scmp.lt.s32.totalorder %s236, 1
      %s238 = scalar_select %p237, %s236, 1
      %s239 = smul.addr %s238, 8
      %s240 = scalar_lea.vmem %s3, %s239
      %s241 = smul.u32 2, %s18
      %p243 = scmp.eq.s32.totalorder %s19, 0
      // Predicated region
      $region33: #{vit_moe_forward.18} parent=31 // pred_check
        %p244 = pneg %p243
      $region34: #{vit_moe_forward.18} parent=31 // pred_check_branch
        %246 = sbr.rel (%p244) target = $region36
      $region35: #{vit_moe_forward.18} parent=31 // pred_region
        %vm247 = vcmask 261120
        %248 = vst.msk [vmem:[#allocation2] sm:$0xff] %vm247, 0.0
        %vm249 = vcmask 254976
        %250 = vst.msk [vmem:[#allocation2 + $0x8] sm:$0x3] %vm249, 0.0
      $region36: #{vit_moe_forward.18} parent=31 // pred_fallthru
        _
      %v251 = vld [vmem:[%s229] sm:$0xf]
      %v252 = vld [vmem:[%s229 + $0x4] sm:$0x1]
      %v253 = vunpack.c.l.bf16 %v251
      %v254 = vunpack.c.l.bf16 %v252
      %v255 = vld [vmem:[%s219] sm:$0xf]
      %v256 = vld [vmem:[%s219 + $0x4] sm:$0x1]
      %v257 = vunpack.c.l.bf16 %v255
      %v258 = vunpack.c.l.bf16 %v256
      %v259 = vmul.f32 %v257, %v253
      %v260 = vmul.f32 %v258, %v254
      %v261 = vpack.c.bf16 %v260, %v259
      %v262 = vld [vmem:[#allocation2] sm:$0xff]
      %v263 = vld [vmem:[#allocation2 + $0x8] sm:$0x3]
      %v264 = vld [vmem:[%s235] sm:$0xf]
      %v265 = vld [vmem:[%s235 + $0x4] sm:$0xf]
      %v268 = vunpack.c.l.b16 %v264
      %v269 = vunpack.c.l.b16 %v265
      %v270 = vpack.c.b16 %v269, %v268
      %vm272 = vcmask 130048
      %v274 = vsel %vm272, %v261, 0
      %276 = vmatpush.bf16.msra.mxu0 0
      %277 = vmatpush.bf16.msra.mxu0 0
      %278 = vmatpush.bf16.msra.mxu0 0
      %279 = vmatpush.bf16.msra.mxu0 0
      %280 = vmatpush.bf16.msra.mxu0 0
      %281 = vmatpush.bf16.msra.mxu0 0
      %282 = vmatpush.bf16.msra.mxu0 0
      %283 = vmatpush.bf16.msra.mxu0 %v270
      %284 = vmatmul.bf16.gmra.mxu0 %v274
      %v285 = vpop.f32.mrf.mxu0
      %v286 = vadd.f32 0.0, %v285
      %v287 = vpop.f32.mrf.mxu0
      %v288 = vadd.f32 0.0, %v287
      %289 = vdwg.mxu0
      %v290 = vadd.f32 %v262, %v286
      %v291 = vadd.f32 %v263, %v288
      %vm292 = vcmask 261120
      %293 = vst.msk [vmem:[#allocation2] sm:$0xff] %vm292, %v290
      %vm294 = vcmask 254976
      %295 = vst.msk [vmem:[#allocation2 + $0x8] sm:$0x3] %vm294, %v291
      %p296 = scmp.eq.s32.totalorder %s19, 3
      // Predicated region
      $region37: #{vit_moe_forward.18} parent=31 // pred_check
        %p297 = pneg %p296
      $region38: #{vit_moe_forward.18} parent=31 // pred_check_branch
        %299 = sbr.rel (%p297) target = $region40
      $region39: #{vit_moe_forward.18} parent=31 // pred_region
        %v300 = vld [vmem:[#allocation2] sm:$0xff]
        %v301 = vld [vmem:[#allocation2 + $0x8] sm:$0x3]
        %302 = vst.msk [vmem:[%s240] sm:$0xff] %vm292, %v300
        %303 = vst.msk [vmem:[%s240 + $0x8] sm:$0x3] %vm294, %v301
      $region40: #{vit_moe_forward.18} parent=31 // pred_fallthru
        _
      %s304 = smul.u32 2, %s18
      %p305 = scmp.lt.s32.totalorder %s304, 1
      %s306 = scalar_select %p305, %s304, 1
      %s307 = smul.addr %s306, 8
      %s308 = scalar_lea.vmem %s3, %s307
      // Predicated region
      $region41: #{vit_moe_forward.18} parent=31 // pred_check
        %p309 = pneg %p124
      $region42: #{vit_moe_forward.18} parent=31 // pred_check_branch
        %311 = sbr.rel (%p309) target = $region44
      $region43: #{vit_moe_forward.18} parent=31 // pred_region
        %s312 = smul.u32 2, %s18
      $region44: #{vit_moe_forward.18} parent=31 // pred_fallthru
        _
      // Predicated region
      $region45: #{vit_moe_forward.18} parent=31 // pred_check
        %p313 = pneg %p124
      $region46: #{vit_moe_forward.18} parent=31 // pred_check_branch
        %315 = sbr.rel (%p313) target = $region48
      $region47: #{vit_moe_forward.18} parent=31 // pred_region
        %s316 = smul.u32 2, %s18
        %p317 = scmp.lt.s32.totalorder %s316, 1
        %s318 = scalar_select %p317, %s316, 1
        %s319 = smul.addr %s318, 8
        %s320 = scalar_lea.vmem %s3, %s319
      $region48: #{vit_moe_forward.18} parent=31 // pred_fallthru
        _
    $region32: #{vit_moe_forward.18} parent=5 // pred_fallthru
      _
    %p321 = scmp.le.s32.totalorder 2, %s9
    // Predicated region
    $region49: #{vit_moe_forward.18} parent=5 // pred_check
      %p322 = pneg %p321
    $region50: #{vit_moe_forward.18} parent=5 // pred_check_branch
      %324 = sbr.rel (%p322) target = $region52
    $region51: #{vit_moe_forward.18} parent=5 // pred_region
      %s325 = ssub.s32 %s9, 2
    $region52: #{vit_moe_forward.18} parent=5 // pred_fallthru
      _
  $region6: #{vit_moe_forward.18} parent=0 // loop_footer
    %s13 = sadd.s32 1, %s9
  $region7: #{vit_moe_forward.18} parent=0 // loop_footer_branch
    %8 = sbr.rel target = $region3
  $region8: #{vit_moe_forward.18} parent=0 // loop_exit
    _

// kernel: vit_moe_forward.19
$region0: #{vit_moe_forward.19}
  #allocation0 [shape = 'u32[]', space=smem, size = 0x4, offset = 0x4, fixed_abs, tag = 'smem constant byte address 0x4 - core index']
  #allocation1 [shape = 'u32[72,128]{1,0:T(1,128)}', space=vmem, size = 0x9000, scoped, tag = 'internal scratch']
  %s0 = inlined_call_operand.vmem [shape: f32[10,32], index: 0, kind: input, shape index: {}]
  %s1 = inlined_call_operand.vmem [shape: f32[1,32], index: 1, kind: input, shape index: {}]
  %s2 = inlined_call_operand.vmem [shape: f32[1,32], index: 2, kind: input, shape index: {}]
  %s3 = inlined_call_operand.vmem [shape: bf16[32,4], index: 3, kind: input, shape index: {}]
  %s4 = inlined_call_operand.vmem [shape: f32[1,4], index: 4, kind: input, shape index: {}]
  %s5 = inlined_call_operand.vmem [shape: bf16[10,32], index: 5, kind: output, shape index: {0}]
  %s6 = inlined_call_operand.vmem [shape: f32[10,4], index: 6, kind: output, shape index: {1}]
  %7 = xla_tuple %s5, %s6
  %s8 = sld [smem:[#allocation0]]
  $region38: #{vit_moe_forward.19} parent=0
    _
  %s10 = ssub.s32 1, %s8
  %s11 = scalar_select 0, %s10, %s8
  // Predicated region
  $region2: #{vit_moe_forward.19} parent=0 // pred_check
    _
  $region3: #{vit_moe_forward.19} parent=0 // pred_check_branch
    %13 = sbr.rel (0) target = $region5
  $region4: #{vit_moe_forward.19} parent=0 // pred_region
    _
  $region5: #{vit_moe_forward.19} parent=0 // pred_fallthru
    _
  // Predicated region
  $region6: #{vit_moe_forward.19} parent=0 // pred_check
    _
  $region7: #{vit_moe_forward.19} parent=0 // pred_check_branch
    %15 = sbr.rel (0) target = $region9
  $region8: #{vit_moe_forward.19} parent=0 // pred_region
    _
  $region9: #{vit_moe_forward.19} parent=0 // pred_fallthru
    _
  // Predicated region
  $region10: #{vit_moe_forward.19} parent=0 // pred_check
    _
  $region11: #{vit_moe_forward.19} parent=0 // pred_check_branch
    %17 = sbr.rel (0) target = $region13
  $region12: #{vit_moe_forward.19} parent=0 // pred_region
    _
  $region13: #{vit_moe_forward.19} parent=0 // pred_fallthru
    _
  // Predicated region
  $region14: #{vit_moe_forward.19} parent=0 // pred_check
    _
  $region15: #{vit_moe_forward.19} parent=0 // pred_check_branch
    %19 = sbr.rel (0) target = $region17
  $region16: #{vit_moe_forward.19} parent=0 // pred_region
    _
  $region17: #{vit_moe_forward.19} parent=0 // pred_fallthru
    _
  // Predicated region
  $region18: #{vit_moe_forward.19} parent=0 // pred_check
    _
  $region19: #{vit_moe_forward.19} parent=0 // pred_check_branch
    %21 = sbr.rel (0) target = $region21
  $region20: #{vit_moe_forward.19} parent=0 // pred_region
    _
  $region21: #{vit_moe_forward.19} parent=0 // pred_fallthru
    _
  %v23 = vld [vmem:[%s0] sm:$0xff]
  %v24 = vld [vmem:[%s0 + $0x8] sm:$0x3]
  %v25 = vld [vmem:[%s1] sm:$0x1]
  %v26 = vld [vmem:[%s2] sm:$0x1]
  %vm27 = vcmask 261120
  %v28 = vsel %vm27, %v23, 0.0
  %29 = vadd.xlane.f32.xlu0 %v28
  %v30 = vpop.xlane.xlu0 %29
  %vm31 = vcmask 254976
  %v32 = vsel %vm31, %v24, 0.0
  %33 = vadd.xlane.f32.xlu0 %v32
  %v34 = vpop.xlane.xlu0 %33
  %v35 = vrcp.pop 32.0
  %v36 = vmul.f32 32.0, %v35
  %v37 = vsub.f32 1.0, %v36
  %v38 = vmul.f32 %v35, %v37
  %v39 = vadd.f32 %v35, %v38
  %vm40 = vweird.f32 %v35
  %v41 = vsel %vm40, %v35, %v39
  %v42 = vmul.f32 %v30, %v41
  %v43 = vmul.f32 %v34, %v41
  %v44 = vsub.f32 %v23, %v42
  %v45 = vsub.f32 %v24, %v43
  %v46 = vmul.f32 %v44, %v44
  %v47 = vmul.f32 %v45, %v45
  %v48 = vsel %vm27, %v46, 0.0
  %49 = vadd.xlane.f32.xlu0 %v48
  %v50 = vpop.xlane.xlu0 %49
  %v51 = vsel %vm31, %v47, 0.0
  %52 = vadd.xlane.f32.xlu0 %v51
  %v53 = vpop.xlane.xlu0 %52
  %v54 = vmul.f32 %v50, %v41
  %v55 = vmul.f32 %v53, %v41
  %v56 = vadd.f32 %v54, 1e-05
  %v57 = vadd.f32 %v55, 1e-05
  %v58 = vrsqrt.pop %v56
  %v59 = vmul.f32 %v58, %v56
  %v60 = vmul.f32 %v59, %v58
  %v61 = vmul.f32 0.5, %v60
  %v62 = vsub.f32 1.5, %v61
  %v63 = vmul.f32 %v58, %v62
  %vm64 = vweird.f32 %v56
  %vm65 = vweird.f32 %v58
  %vm66 = vmor %vm64, %vm65
  %v67 = vsel %vm66, %v58, %v63
  %v68 = vrsqrt.pop %v57
  %v69 = vmul.f32 %v68, %v57
  %v70 = vmul.f32 %v69, %v68
  %v71 = vmul.f32 0.5, %v70
  %v72 = vsub.f32 1.5, %v71
  %v73 = vmul.f32 %v68, %v72
  %vm74 = vweird.f32 %v57
  %vm75 = vweird.f32 %v68
  %vm76 = vmor %vm74, %vm75
  %v77 = vsel %vm76, %v68, %v73
  %v78 = vmul.f32 %v44, %v67
  %v79 = vmul.f32 %v45, %v77
  %v81 = vperm.slane %v25, 0
  %v83 = vmul.f32 %v78, %v81
  %v84 = vmul.f32 %v79, %v81
  %v86 = vperm.slane %v26, 0
  %v88 = vadd.f32 %v83, %v86
  %v89 = vadd.f32 %v84, %v86
  %v90 = vpack.c.bf16 %v88, %v88
  %v91 = vpack.c.bf16 %v89, %v89
  %vm92 = vcmask 257024
  %93 = vst.msk [vmem:[%s5] sm:$0xf] %vm92, %v90
  %vm94 = vcmask 253952
  %95 = vst.msk [vmem:[%s5 + $0x4] sm:$0x1] %vm94, %v91
  %v96 = vld [vmem:[%s3] sm:$0xf]
  %v97 = vld [vmem:[%s3 + $0x4] sm:$0xf]
  %v98 = vld [vmem:[%s3 + $0x8] sm:$0xf]
  %v99 = vld [vmem:[%s3 + $0xc] sm:$0xf]
  %v100 = vld [vmem:[%s4] sm:$0x1]
  %v102 = vperm.slane %v100, 0
  %v106 = vunpack.c.l.b16 %v90
  %v107 = vunpack.c.l.b16 %v91
  %v108 = vpack.c.b16 %v107, %v106
  %v113 = vunpack.c.l.b16 %v96
  %v114 = vunpack.c.l.b16 %v97
  %v115 = vunpack.c.l.b16 %v98
  %v116 = vunpack.c.l.b16 %v99
  %v117 = vpack.c.b16 %v114, %v113
  %v118 = vpack.c.b16 %v116, %v115
  %v122 = vsel %vm27, %v108, 0
  %124 = vmatpush.bf16.msra.mxu0 0
  %125 = vmatpush.bf16.msra.mxu0 0
  %126 = vmatpush.bf16.msra.mxu0 0
  %127 = vmatpush.bf16.msra.mxu0 0
  %128 = vmatpush.bf16.msra.mxu0 0
  %129 = vmatpush.bf16.msra.mxu0 0
  %130 = vmatpush.bf16.msra.mxu0 %v118
  %131 = vmatpush.bf16.msra.mxu0 %v117
  %132 = vmatmul.bf16.gmra.mxu0 %v122
  %v133 = vpop.f32.mrf.mxu0
  %v134 = vadd.f32 %v102, %v133
  %v135 = vpop.f32.mrf.mxu0
  %v136 = vadd.f32 %v102, %v135
  %137 = vdwg.mxu0
  %vm138 = vcmask 31744
  %139 = vst.msk [vmem:[%s6] sm:$0xff] %vm138, %v134
  %vm140 = vcmask 25600
  %141 = vst.msk [vmem:[%s6 + $0x8] sm:$0x3] %vm140, %v136
  // Predicated region
  $region22: #{vit_moe_forward.19} parent=0 // pred_check
    _
  $region23: #{vit_moe_forward.19} parent=0 // pred_check_branch
    %143 = sbr.rel (0) target = $region25
  $region24: #{vit_moe_forward.19} parent=0 // pred_region
    _
  $region25: #{vit_moe_forward.19} parent=0 // pred_fallthru
    _
  // Predicated region
  $region26: #{vit_moe_forward.19} parent=0 // pred_check
    _
  $region27: #{vit_moe_forward.19} parent=0 // pred_check_branch
    %145 = sbr.rel (0) target = $region29
  $region28: #{vit_moe_forward.19} parent=0 // pred_region
    _
  $region29: #{vit_moe_forward.19} parent=0 // pred_fallthru
    _
  // Predicated region
  $region30: #{vit_moe_forward.19} parent=0 // pred_check
    _
  $region31: #{vit_moe_forward.19} parent=0 // pred_check_branch
    %147 = sbr.rel (0) target = $region33
  $region32: #{vit_moe_forward.19} parent=0 // pred_region
    _
  $region33: #{vit_moe_forward.19} parent=0 // pred_fallthru
    _
  // Predicated region
  $region34: #{vit_moe_forward.19} parent=0 // pred_check
    _
  $region35: #{vit_moe_forward.19} parent=0 // pred_check_branch
    %149 = sbr.rel (0) target = $region37
  $region36: #{vit_moe_forward.19} parent=0 // pred_region
    _
  $region37: #{vit_moe_forward.19} parent=0 // pred_fallthru
    _

// kernel: vit_moe_forward.20
$region0: #{vit_moe_forward.20}
  #allocation0 [shape = 'u32[]', space=smem, size = 0x4, offset = 0x4, fixed_abs, tag = 'smem constant byte address 0x4 - core index']
  #allocation1 [shape = 'u32[72,128]{1,0:T(1,128)}', space=vmem, size = 0x9000, scoped, tag = 'internal scratch']
  #allocation2 [shape = 'f32[10,32]{1,0:T(8,128)}', space=vmem, size = 0x2000, scoped, tag = 'scratch operand']
  %s0 = inlined_call_operand.vmem [shape: bf16[10,32], index: 0, kind: input, shape index: {}]
  %s1 = inlined_call_operand.vmem [shape: bf16[4,10,32], index: 1, kind: input, shape index: {}]
  %s2 = inlined_call_operand.vmem [shape: bf16[4,32,128], index: 2, kind: input, shape index: {}]
  %s3 = inlined_call_operand.vmem [shape: f32[4,1,128], index: 3, kind: input, shape index: {}]
  %s4 = inlined_call_operand.vmem [shape: bf16[4,128,32], index: 4, kind: input, shape index: {}]
  %s5 = inlined_call_operand.vmem [shape: f32[4,1,32], index: 5, kind: input, shape index: {}]
  %s6 = inlined_call_operand.vmem [shape: f32[10,32], index: 6, kind: output, shape index: {}]
  %s7 = sld [smem:[#allocation0]]
  $region65: #{vit_moe_forward.20} parent=0
    _
  %s9 = ssub.s32 1, %s7
  %s10 = scalar_select 0, %s9, %s7
  loop: start=0, step=1, limit=6
  $region2: #{vit_moe_forward.20} parent=0 // loop_pre_header
    _
  $region3: #{vit_moe_forward.20} parent=0 // loop_header
    %s12 = sphi 0, %s16
    %p13 = scmp.ge.s32.totalorder %s12, 6
    %s19 = sphi 0, %s31
    %s20 = sphi 0, %s27
    %s21 = sphi 0, %s19
    %s22 = sphi 0, %s20
    %s23 = sphi 0, %s21
    %s24 = sphi 0, %s22
    %s34 = sphi 0, %s36
    %s37 = sphi 0, %s34
    %s38 = sphi 0, %s37
    %s54 = sphi 0, %s38
    %s62 = sphi 0, %s64
    %s65 = sphi 0, %s62
    %s66 = sphi 0, %s65
    %s82 = sphi 0, %s66
    %s88 = sphi 0, %s90
    %s91 = sphi 0, %s88
    %s92 = sphi 0, %s91
    %s108 = sphi 0, %s92
    %s114 = sphi 0, %s116
    %s117 = sphi 0, %s114
    %s118 = sphi 0, %s117
    %s134 = sphi 0, %s118
    %s140 = sphi 0, %s142
    %s143 = sphi 0, %s140
    %s144 = sphi 0, %s143
    %s160 = sphi 0, %s144
    %s166 = sphi 0, %s168
    %s169 = sphi 0, %s166
    %s170 = sphi 0, %s169
    %s186 = sphi 0, %s170
    %s192 = sphi 0, %s194
    %s195 = sphi 0, %s192
    %s196 = sphi 0, %s195
    %s212 = sphi 0, %s196
  $region4: #{vit_moe_forward.20} parent=0 // loop_header_branch
    %15 = sbr.rel (%p13) target = $region8
  $region5: #{vit_moe_forward.20} parent=0 // loop_body
    %s17 = ssub.s32 %s12, 1
    %s18 = ssub.s32 %s12, 2
    %s25 = sadd.s32 1, %s20
    %p26 = scmp.ge.s32.totalorder %s25, 4
    %s27 = scalar_select %p26, 0, %s25
    %s28 = sadd.s32 1, %s19
    %s29 = scalar_select %p26, %s28, %s19
    %p30 = scmp.ge.s32.totalorder %s29, 1
    %s31 = scalar_select %p30, 0, %s29
    %s32 = ssub.s32 %s19, %s31
    %p33 = scmp.eq.s32.totalorder %s32, 0
    %s35 = sadd.s32 %s34, 1
    %s36 = scalar_select %p33, %s34, %s35
    %p39 = pneg %p33
    %p40 = scmp.eq.s32.totalorder %s12, 3
    %p41 = por %p39, %p40
    %p42 = scmp.ne.s32.totalorder %s34, %s37
    %p43 = scmp.eq.s32.totalorder %s12, 0
    %p44 = por %p42, %p43
    %p45 = scmp.ne.s32.totalorder %s34, %s37
    %p46 = scmp.eq.s32.totalorder %s17, 3
    %p47 = por %p45, %p46
    %p48 = scmp.ne.s32.totalorder %s37, %s38
    %p49 = scmp.eq.s32.totalorder %s17, 0
    %p50 = por %p48, %p49
    %p51 = scmp.ne.s32.totalorder %s37, %s38
    %p52 = scmp.eq.s32.totalorder %s18, 3
    %p53 = por %p51, %p52
    %p55 = scmp.ne.s32.totalorder %s38, %s54
    %p56 = scmp.eq.s32.totalorder %s18, 0
    %p57 = por %p55, %p56
    %s58 = ssub.s32 %s20, %s27
    %s59 = ssub.s32 %s19, %s31
    %s60 = sor.u32 %s58, %s59
    %p61 = scmp.eq.s32.totalorder %s60, 0
    %s63 = sadd.s32 %s62, 1
    %s64 = scalar_select %p61, %s62, %s63
    %p67 = pneg %p61
    %p68 = scmp.eq.s32.totalorder %s12, 3
    %p69 = por %p67, %p68
    %p70 = scmp.ne.s32.totalorder %s62, %s65
    %p71 = scmp.eq.s32.totalorder %s12, 0
    %p72 = por %p70, %p71
    %p73 = scmp.ne.s32.totalorder %s62, %s65
    %p74 = scmp.eq.s32.totalorder %s17, 3
    %p75 = por %p73, %p74
    %p76 = scmp.ne.s32.totalorder %s65, %s66
    %p77 = scmp.eq.s32.totalorder %s17, 0
    %p78 = por %p76, %p77
    %p79 = scmp.ne.s32.totalorder %s65, %s66
    %p80 = scmp.eq.s32.totalorder %s18, 3
    %p81 = por %p79, %p80
    %p83 = scmp.ne.s32.totalorder %s66, %s82
    %p84 = scmp.eq.s32.totalorder %s18, 0
    %p85 = por %p83, %p84
    %s86 = ssub.s32 %s20, %s27
    %p87 = scmp.eq.s32.totalorder %s86, 0
    %s89 = sadd.s32 %s88, 1
    %s90 = scalar_select %p87, %s88, %s89
    %p93 = pneg %p87
    %p94 = scmp.eq.s32.totalorder %s12, 3
    %p95 = por %p93, %p94
    %p96 = scmp.ne.s32.totalorder %s88, %s91
    %p97 = scmp.eq.s32.totalorder %s12, 0
    %p98 = por %p96, %p97
    %p99 = scmp.ne.s32.totalorder %s88, %s91
    %p100 = scmp.eq.s32.totalorder %s17, 3
    %p101 = por %p99, %p100
    %p102 = scmp.ne.s32.totalorder %s91, %s92
    %p103 = scmp.eq.s32.totalorder %s17, 0
    %p104 = por %p102, %p103
    %p105 = scmp.ne.s32.totalorder %s91, %s92
    %p106 = scmp.eq.s32.totalorder %s18, 3
    %p107 = por %p105, %p106
    %p109 = scmp.ne.s32.totalorder %s92, %s108
    %p110 = scmp.eq.s32.totalorder %s18, 0
    %p111 = por %p109, %p110
    %s112 = ssub.s32 %s20, %s27
    %p113 = scmp.eq.s32.totalorder %s112, 0
    %s115 = sadd.s32 %s114, 1
    %s116 = scalar_select %p113, %s114, %s115
    %p119 = pneg %p113
    %p120 = scmp.eq.s32.totalorder %s12, 3
    %p121 = por %p119, %p120
    %p122 = scmp.ne.s32.totalorder %s114, %s117
    %p123 = scmp.eq.s32.totalorder %s12, 0
    %p124 = por %p122, %p123
    %p125 = scmp.ne.s32.totalorder %s114, %s117
    %p126 = scmp.eq.s32.totalorder %s17, 3
    %p127 = por %p125, %p126
    %p128 = scmp.ne.s32.totalorder %s117, %s118
    %p129 = scmp.eq.s32.totalorder %s17, 0
    %p130 = por %p128, %p129
    %p131 = scmp.ne.s32.totalorder %s117, %s118
    %p132 = scmp.eq.s32.totalorder %s18, 3
    %p133 = por %p131, %p132
    %p135 = scmp.ne.s32.totalorder %s118, %s134
    %p136 = scmp.eq.s32.totalorder %s18, 0
    %p137 = por %p135, %p136
    %s138 = ssub.s32 %s20, %s27
    %p139 = scmp.eq.s32.totalorder %s138, 0
    %s141 = sadd.s32 %s140, 1
    %s142 = scalar_select %p139, %s140, %s141
    %p145 = pneg %p139
    %p146 = scmp.eq.s32.totalorder %s12, 3
    %p147 = por %p145, %p146
    %p148 = scmp.ne.s32.totalorder %s140, %s143
    %p149 = scmp.eq.s32.totalorder %s12, 0
    %p150 = por %p148, %p149
    %p151 = scmp.ne.s32.totalorder %s140, %s143
    %p152 = scmp.eq.s32.totalorder %s17, 3
    %p153 = por %p151, %p152
    %p154 = scmp.ne.s32.totalorder %s143, %s144
    %p155 = scmp.eq.s32.totalorder %s17, 0
    %p156 = por %p154, %p155
    %p157 = scmp.ne.s32.totalorder %s143, %s144
    %p158 = scmp.eq.s32.totalorder %s18, 3
    %p159 = por %p157, %p158
    %p161 = scmp.ne.s32.totalorder %s144, %s160
    %p162 = scmp.eq.s32.totalorder %s18, 0
    %p163 = por %p161, %p162
    %s164 = ssub.s32 %s20, %s27
    %p165 = scmp.eq.s32.totalorder %s164, 0
    %s167 = sadd.s32 %s166, 1
    %s168 = scalar_select %p165, %s166, %s167
    %p171 = pneg %p165
    %p172 = scmp.eq.s32.totalorder %s12, 3
    %p173 = por %p171, %p172
    %p174 = scmp.ne.s32.totalorder %s166, %s169
    %p175 = scmp.eq.s32.totalorder %s12, 0
    %p176 = por %p174, %p175
    %p177 = scmp.ne.s32.totalorder %s166, %s169
    %p178 = scmp.eq.s32.totalorder %s17, 3
    %p179 = por %p177, %p178
    %p180 = scmp.ne.s32.totalorder %s169, %s170
    %p181 = scmp.eq.s32.totalorder %s17, 0
    %p182 = por %p180, %p181
    %p183 = scmp.ne.s32.totalorder %s169, %s170
    %p184 = scmp.eq.s32.totalorder %s18, 3
    %p185 = por %p183, %p184
    %p187 = scmp.ne.s32.totalorder %s170, %s186
    %p188 = scmp.eq.s32.totalorder %s18, 0
    %p189 = por %p187, %p188
    %s190 = ssub.s32 %s19, %s31
    %p191 = scmp.eq.s32.totalorder %s190, 0
    %s193 = sadd.s32 %s192, 1
    %s194 = scalar_select %p191, %s192, %s193
    %p197 = pneg %p191
    %p198 = scmp.eq.s32.totalorder %s12, 3
    %p199 = por %p197, %p198
    %p200 = scmp.ne.s32.totalorder %s192, %s195
    %p201 = scmp.eq.s32.totalorder %s12, 0
    %p202 = por %p200, %p201
    %p203 = scmp.ne.s32.totalorder %s192, %s195
    %p204 = scmp.eq.s32.totalorder %s17, 3
    %p205 = por %p203, %p204
    %p206 = scmp.ne.s32.totalorder %s195, %s196
    %p207 = scmp.eq.s32.totalorder %s17, 0
    %p208 = por %p206, %p207
    %p209 = scmp.ne.s32.totalorder %s195, %s196
    %p210 = scmp.eq.s32.totalorder %s18, 3
    %p211 = por %p209, %p210
    %p213 = scmp.ne.s32.totalorder %s196, %s212
    %p214 = scmp.eq.s32.totalorder %s18, 0
    %p215 = por %p213, %p214
    %p216 = scmp.le.s32.totalorder 1, %s12
    %p217 = scmp.lt.s32.totalorder %s12, 5
    %p218 = pnand %p216, %p217
    %p219 = pneg %p218
    // Predicated region
    $region9: #{vit_moe_forward.20} parent=5 // pred_check
      _
    $region10: #{vit_moe_forward.20} parent=5 // pred_check_branch
      %221 = sbr.rel (%p218) target = $region12
    $region11: #{vit_moe_forward.20} parent=5 // pred_region
      %s222 = ssub.s32 %s12, 1
      // Predicated region
      $region13: #{vit_moe_forward.20} parent=11 // pred_check
        %p223 = pneg %p50
      $region14: #{vit_moe_forward.20} parent=11 // pred_check_branch
        %225 = sbr.rel (%p223) target = $region16
      $region15: #{vit_moe_forward.20} parent=11 // pred_region
        %s226 = smul.u32 2, %s21
        %p227 = scmp.lt.s32.totalorder %s226, 1
        %s228 = scalar_select %p227, %s226, 1
        %s229 = smul.addr %s228, 4
        %s230 = scalar_lea.vmem %s0, %s229
        %s231 = smul.u32 2, %s21
      $region16: #{vit_moe_forward.20} parent=11 // pred_fallthru
        _
    $region12: #{vit_moe_forward.20} parent=5 // pred_fallthru
      _
    %p232 = scmp.lt.s32.totalorder %s12, 4
    // Predicated region
    $region17: #{vit_moe_forward.20} parent=5 // pred_check
      %p233 = pneg %p232
    $region18: #{vit_moe_forward.20} parent=5 // pred_check_branch
      %235 = sbr.rel (%p233) target = $region20
    $region19: #{vit_moe_forward.20} parent=5 // pred_region
      // Predicated region
      $region21: #{vit_moe_forward.20} parent=19 // pred_check
        %p236 = pneg %p72
      $region22: #{vit_moe_forward.20} parent=19 // pred_check_branch
        %238 = sbr.rel (%p236) target = $region24
      $region23: #{vit_moe_forward.20} parent=19 // pred_region
        %s239 = smul.u32 2, %s19
        %p240 = scmp.lt.s32.totalorder %s20, 3
        %s241 = scalar_select %p240, %s20, 3
        %p242 = scmp.lt.s32.totalorder %s239, 1
        %s243 = scalar_select %p242, %s239, 1
        %s244 = smul.addr %s241, 2
        %s245 = sadd.s32 %s243, %s244
        %s246 = smul.addr %s245, 4
        %s247 = scalar_lea.vmem %s1, %s246
        %s248 = smul.u32 2, %s19
      $region24: #{vit_moe_forward.20} parent=19 // pred_fallthru
        _
      // Predicated region
      $region25: #{vit_moe_forward.20} parent=19 // pred_check
        %p249 = pneg %p98
      $region26: #{vit_moe_forward.20} parent=19 // pred_check_branch
        %251 = sbr.rel (%p249) target = $region28
      $region27: #{vit_moe_forward.20} parent=19 // pred_region
        %p252 = scmp.lt.s32.totalorder %s20, 3
        %s253 = scalar_select %p252, %s20, 3
        %s254 = smul.addr %s253, 4
        %s255 = smul.addr %s254, 4
        %s256 = scalar_lea.vmem %s2, %s255
      $region28: #{vit_moe_forward.20} parent=19 // pred_fallthru
        _
      // Predicated region
      $region29: #{vit_moe_forward.20} parent=19 // pred_check
        %p257 = pneg %p124
      $region30: #{vit_moe_forward.20} parent=19 // pred_check_branch
        %259 = sbr.rel (%p257) target = $region32
      $region31: #{vit_moe_forward.20} parent=19 // pred_region
        %p260 = scmp.lt.s32.totalorder %s20, 3
        %s261 = scalar_select %p260, %s20, 3
        %s262 = scalar_lea.vmem %s3, %s261
      $region32: #{vit_moe_forward.20} parent=19 // pred_fallthru
        _
      // Predicated region
      $region33: #{vit_moe_forward.20} parent=19 // pred_check
        %p263 = pneg %p150
      $region34: #{vit_moe_forward.20} parent=19 // pred_check_branch
        %265 = sbr.rel (%p263) target = $region36
      $region35: #{vit_moe_forward.20} parent=19 // pred_region
        %p266 = scmp.lt.s32.totalorder %s20, 3
        %s267 = scalar_select %p266, %s20, 3
        %s268 = smul.addr %s267, 16
        %s269 = smul.addr %s268, 4
        %s270 = scalar_lea.vmem %s4, %s269
      $region36: #{vit_moe_forward.20} parent=19 // pred_fallthru
        _
      // Predicated region
      $region37: #{vit_moe_forward.20} parent=19 // pred_check
        %p271 = pneg %p176
      $region38: #{vit_moe_forward.20} parent=19 // pred_check_branch
        %273 = sbr.rel (%p271) target = $region40
      $region39: #{vit_moe_forward.20} parent=19 // pred_region
        %p274 = scmp.lt.s32.totalorder %s20, 3
        %s275 = scalar_select %p274, %s20, 3
        %s276 = scalar_lea.vmem %s5, %s275
      $region40: #{vit_moe_forward.20} parent=19 // pred_fallthru
        _
    $region20: #{vit_moe_forward.20} parent=5 // pred_fallthru
      _
    %p277 = scmp.le.s32.totalorder 1, %s12
    %p278 = scmp.lt.s32.totalorder %s12, 5
    %p279 = pnand %p277, %p278
    %p280 = pneg %p279
    // Predicated region
    $region41: #{vit_moe_forward.20} parent=5 // pred_check
      _
    $region42: #{vit_moe_forward.20} parent=5 // pred_check_branch
      %282 = sbr.rel (%p279) target = $region44
    $region43: #{vit_moe_forward.20} parent=5 // pred_region
      %s283 = ssub.s32 %s12, 1
      %s284 = smul.u32 2, %s21
      %p285 = scmp.lt.s32.totalorder %s284, 1
      %s286 = scalar_select %p285, %s284, 1
      %s287 = smul.addr %s286, 4
      %s288 = scalar_lea.vmem %s0, %s287
      %p289 = pneg %p50
      %p290 = pneg %p47
      %s291 = smul.u32 2, %s21
      %p292 = scmp.lt.s32.totalorder %s22, 3
      %s293 = scalar_select %p292, %s22, 3
      %p294 = scmp.lt.s32.totalorder %s291, 1
      %s295 = scalar_select %p294, %s291, 1
      %s296 = smul.addr %s293, 2
      %s297 = sadd.s32 %s295, %s296
      %s298 = smul.addr %s297, 4
      %s299 = scalar_lea.vmem %s1, %s298
      %p300 = pneg %p78
      %p301 = pneg %p75
      %p302 = scmp.lt.s32.totalorder %s22, 3
      %s303 = scalar_select %p302, %s22, 3
      %s304 = smul.addr %s303, 4
      %s305 = smul.addr %s304, 4
      %s306 = scalar_lea.vmem %s2, %s305
      %p307 = pneg %p104
      %p308 = pneg %p101
      %p309 = scmp.lt.s32.totalorder %s22, 3
      %s310 = scalar_select %p309, %s22, 3
      %s311 = scalar_lea.vmem %s3, %s310
      %p312 = pneg %p130
      %p313 = pneg %p127
      %p314 = scmp.lt.s32.totalorder %s22, 3
      %s315 = scalar_select %p314, %s22, 3
      %s316 = smul.addr %s315, 16
      %s317 = smul.addr %s316, 4
      %s318 = scalar_lea.vmem %s4, %s317
      %p319 = pneg %p156
      %p320 = pneg %p153
      %p321 = scmp.lt.s32.totalorder %s22, 3
      %s322 = scalar_select %p321, %s22, 3
      %s323 = scalar_lea.vmem %s5, %s322
      %p324 = pneg %p182
      %p325 = pneg %p179
      %p326 = pneg %p208
      %p327 = pneg %p205
      %s328 = smul.u32 2, %s21
      %p329 = scmp.lt.s32.totalorder %s328, 1
      %s330 = scalar_select %p329, %s328, 1
      %s331 = smul.addr %s330, 8
      %s332 = scalar_lea.vmem %s6, %s331
      %s333 = smul.u32 2, %s21
      %p334 = scmp.lt.s32.totalorder %s333, 1
      %s335 = scalar_select %p334, %s333, 1
      %s336 = smul.addr %s335, 4
      %s337 = scalar_lea.vmem %s0, %s336
      %s338 = smul.u32 2, %s21
      %s339 = smul.u32 2, %s21
      %p340 = scmp.lt.s32.totalorder %s22, 3
      %s341 = scalar_select %p340, %s22, 3
      %p342 = scmp.lt.s32.totalorder %s339, 1
      %s343 = scalar_select %p342, %s339, 1
      %s344 = smul.addr %s341, 2
      %s345 = sadd.s32 %s343, %s344
      %s346 = smul.addr %s345, 4
      %s347 = scalar_lea.vmem %s1, %s346
      %s348 = smul.u32 2, %s21
      %p349 = scmp.lt.s32.totalorder %s22, 3
      %s350 = scalar_select %p349, %s22, 3
      %s351 = smul.addr %s350, 4
      %s352 = smul.addr %s351, 4
      %s353 = scalar_lea.vmem %s2, %s352
      %p354 = scmp.lt.s32.totalorder %s22, 3
      %s355 = scalar_select %p354, %s22, 3
      %s356 = scalar_lea.vmem %s3, %s355
      %p357 = scmp.lt.s32.totalorder %s22, 3
      %s358 = scalar_select %p357, %s22, 3
      %s359 = smul.addr %s358, 16
      %s360 = smul.addr %s359, 4
      %s361 = scalar_lea.vmem %s4, %s360
      %p362 = scmp.lt.s32.totalorder %s22, 3
      %s363 = scalar_select %p362, %s22, 3
      %s364 = scalar_lea.vmem %s5, %s363
      %s365 = smul.u32 2, %s21
      %p366 = scmp.lt.s32.totalorder %s365, 1
      %s367 = scalar_select %p366, %s365, 1
      %s368 = smul.addr %s367, 8
      %s369 = scalar_lea.vmem %s6, %s368
      %s370 = smul.u32 2, %s21
      %p372 = scmp.eq.s32.totalorder %s22, 0
      // Predicated region
      $region45: #{vit_moe_forward.20} parent=43 // pred_check
        %p373 = pneg %p372
      $region46: #{vit_moe_forward.20} parent=43 // pred_check_branch
        %375 = sbr.rel (%p373) target = $region48
      $region47: #{vit_moe_forward.20} parent=43 // pred_region
        %vm376 = vcmask 261120
        %377 = vst.msk [vmem:[#allocation2] sm:$0xff] %vm376, 0.0
        %vm378 = vcmask 254976
        %379 = vst.msk [vmem:[#allocation2 + $0x8] sm:$0x3] %vm378, 0.0
      $region48: #{vit_moe_forward.20} parent=43 // pred_fallthru
        _
      %v380 = vld [vmem:[%s337] sm:$0xf]
      %v381 = vld [vmem:[%s337 + $0x4] sm:$0x1]
      %v382 = vld [vmem:[%s353] sm:$0xf]
      %v383 = vld [vmem:[%s353 + $0x4] sm:$0xf]
      %v384 = vld [vmem:[%s353 + $0x8] sm:$0xf]
      %v385 = vld [vmem:[%s353 + $0xc] sm:$0xf]
      %v386 = vld [vmem:[%s356] sm:$0x1]
      %v388 = vperm.slane %v386, 0
      %v392 = vunpack.c.l.b16 %v380
      %v393 = vunpack.c.l.b16 %v381
      %v394 = vpack.c.b16 %v393, %v392
      %v399 = vunpack.c.l.b16 %v382
      %v400 = vunpack.c.l.b16 %v383
      %v401 = vunpack.c.l.b16 %v384
      %v402 = vunpack.c.l.b16 %v385
      %v403 = vpack.c.b16 %v400, %v399
      %v404 = vpack.c.b16 %v402, %v401
      %vm407 = vcmask 261120
      %v409 = vsel %vm407, %v394, 0
      %411 = vmatpush.bf16.msra.mxu0 0
      %412 = vmatpush.bf16.msra.mxu0 0
      %413 = vmatpush.bf16.msra.mxu0 0
      %414 = vmatpush.bf16.msra.mxu0 0
      %415 = vmatpush.bf16.msra.mxu0 0
      %416 = vmatpush.bf16.msra.mxu0 0
      %417 = vmatpush.bf16.msra.mxu0 %v404
      %418 = vmatpush.bf16.msra.mxu0 %v403
      %419 = vmatmul.bf16.gmra.mxu0 %v409
      %v420 = vpop.f32.mrf.mxu0
      %v421 = vadd.f32 %v388, %v420
      %v422 = vpop.f32.mrf.mxu0
      %v423 = vadd.f32 %v388, %v422
      %424 = vdwg.mxu0
      %v425 = vmul.f32 %v421, 0.5
      %v426 = vmul.f32 %v423, 0.5
      %v427 = vmul.f32 %v421, 0.70710677
      %v428 = vmul.f32 %v423, 0.70710677
      %v429 = vand.u32 2147483647, %v427
      %v430 = vand.u32 2147483647, %v428
      %v431 = vmul.f32 %v429, 0.3275911
      %v432 = vmul.f32 %v430, 0.3275911
      %v433 = vadd.f32 %v431, 1.0
      %v434 = vadd.f32 %v432, 1.0
      %v435 = vrcp.pop %v433
      %v436 = vmul.f32 %v433, %v435
      %v437 = vsub.f32 1.0, %v436
      %v438 = vmul.f32 %v435, %v437
      %v439 = vadd.f32 %v435, %v438
      %vm440 = vweird.f32 %v433
      %vm441 = vweird.f32 %v435
      %vm442 = vmor %vm440, %vm441
      %v443 = vsel %vm442, %v435, %v439
      %v444 = vand.u32 2147483647, %v433
      %vm445 = vcmp.eq.f32.partialorder %v444, 8.507059e+37
      %v446 = vand.u32 %v433, 2147483648
      %v447 = vor.u32 1.1754944e-38, %v446
      %v448 = vsel %vm445, %v447, %v443
      %v449 = vmul.f32 1.0, %v448
      %v450 = vrcp.pop %v434
      %v451 = vmul.f32 %v434, %v450
      %v452 = vsub.f32 1.0, %v451
      %v453 = vmul.f32 %v450, %v452
      %v454 = vadd.f32 %v450, %v453
      %vm455 = vweird.f32 %v434
      %vm456 = vweird.f32 %v450
      %vm457 = vmor %vm455, %vm456
      %v458 = vsel %vm457, %v450, %v454
      %v459 = vand.u32 2147483647, %v434
      %vm460 = vcmp.eq.f32.partialorder %v459, 8.507059e+37
      %v461 = vand.u32 %v434, 2147483648
      %v462 = vor.u32 1.1754944e-38, %v461
      %v463 = vsel %vm460, %v462, %v458
      %v464 = vmul.f32 1.0, %v463
      %v465 = vmul.f32 %v449, 1.0614054
      %v466 = vmul.f32 %v464, 1.0614054
      %v467 = vadd.f32 %v465, -1.4531521
      %v468 = vadd.f32 %v466, -1.4531521
      %v469 = vmul.f32 %v467, %v449
      %v470 = vmul.f32 %v468, %v464
      %v471 = vadd.f32 %v469, 1.4214138
      %v472 = vadd.f32 %v470, 1.4214138
      %v473 = vmul.f32 %v471, %v449
      %v474 = vmul.f32 %v472, %v464
      %v475 = vadd.f32 %v473, -0.28449672
      %v476 = vadd.f32 %v474, -0.28449672
      %v477 = vmul.f32 %v475, %v449
      %v478 = vmul.f32 %v476, %v464
      %v479 = vadd.f32 %v477, 0.2548296
      %v480 = vadd.f32 %v478, 0.2548296
      %v481 = vmul.f32 %v479, %v449
      %v482 = vmul.f32 %v480, %v464
      %v483 = vsub.f32 0.0, %v429
      %v484 = vsub.f32 0.0, %v430
      %v485 = vmul.f32 %v483, %v429
      %v486 = vmul.f32 %v484, %v430
      %v487 = vmul.f32 %v485, 1.442695
      %v488 = vpow.pop %v487
      %v489 = vmul.f32 %v486, 1.442695
      %v490 = vpow.pop %v489
      %v491 = vmul.f32 %v481, %v488
      %v492 = vmul.f32 %v482, %v490
      %v493 = vsub.f32 1.0, %v491
      %v494 = vsub.f32 1.0, %v492
      %vm495 = vcmp.ge.f32.partialorder %v427, 0.0
      %vm496 = vcmp.ge.f32.partialorder %v428, 0.0
      %v497 = vsub.f32 0.0, %v493
      %v498 = vsub.f32 0.0, %v494
      %v499 = vsel %vm495, %v493, %v497
      %v500 = vsel %vm496, %v494, %v498
      %v501 = vadd.f32 %v499, 1.0
      %v502 = vadd.f32 %v500, 1.0
      %v503 = vmul.f32 %v425, %v501
      %v504 = vmul.f32 %v426, %v502
      %v505 = vpack.c.bf16 %v504, %v503
      %v506 = vld [vmem:[%s361] sm:$0xf]
      %v507 = vld [vmem:[%s361 + $0x4] sm:$0xf]
      %v508 = vld [vmem:[%s361 + $0x8] sm:$0xf]
      %v509 = vld [vmem:[%s361 + $0xc] sm:$0xf]
      %v510 = vld [vmem:[%s361 + $0x10] sm:$0xf]
      %v511 = vld [vmem:[%s361 + $0x14] sm:$0xf]
      %v512 = vld [vmem:[%s361 + $0x18] sm:$0xf]
      %v513 = vld [vmem:[%s361 + $0x1c] sm:$0xf]
      %v514 = vld [vmem:[%s361 + $0x20] sm:$0xf]
      %v515 = vld [vmem:[%s361 + $0x24] sm:$0xf]
      %v516 = vld [vmem:[%s361 + $0x28] sm:$0xf]
      %v517 = vld [vmem:[%s361 + $0x2c] sm:$0xf]
      %v518 = vld [vmem:[%s361 + $0x30] sm:$0xf]
      %v519 = vld [vmem:[%s361 + $0x34] sm:$0xf]
      %v520 = vld [vmem:[%s361 + $0x38] sm:$0xf]
      %v521 = vld [vmem:[%s361 + $0x3c] sm:$0xf]
      %v522 = vld [vmem:[%s364] sm:$0x1]
      %v524 = vperm.slane %v522, 0
      %v542 = vunpack.c.l.b16 %v506
      %v543 = vunpack.c.l.b16 %v507
      %v544 = vunpack.c.l.b16 %v508
      %v545 = vunpack.c.l.b16 %v509
      %v546 = vunpack.c.l.b16 %v510
      %v547 = vunpack.c.l.b16 %v511
      %v548 = vunpack.c.l.b16 %v512
      %v549 = vunpack.c.l.b16 %v513
      %v550 = vunpack.c.l.b16 %v514
      %v551 = vunpack.c.l.b16 %v515
      %v552 = vunpack.c.l.b16 %v516
      %v553 = vunpack.c.l.b16 %v517
      %v554 = vunpack.c.l.b16 %v518
      %v555 = vunpack.c.l.b16 %v519
      %v556 = vunpack.c.l.b16 %v520
      %v557 = vunpack.c.l.b16 %v521
      %v558 = vpack.c.b16 %v543, %v542
      %v559 = vpack.c.b16 %v545, %v544
      %v560 = vpack.c.b16 %v547, %v546
      %v561 = vpack.c.b16 %v549, %v548
      %v562 = vpack.c.b16 %v551, %v550
      %v563 = vpack.c.b16 %v553, %v552
      %v564 = vpack.c.b16 %v555, %v554
      %v565 = vpack.c.b16 %v557, %v556
      %574 = vmatpush.bf16.msra.mxu0 %v565
      %575 = vmatpush.bf16.msra.mxu0 %v564
      %576 = vmatpush.bf16.msra.mxu0 %v563
      %577 = vmatpush.bf16.msra.mxu0 %v562
      %578 = vmatpush.bf16.msra.mxu0 %v561
      %579 = vmatpush.bf16.msra.mxu0 %v560
      %580 = vmatpush.bf16.msra.mxu0 %v559
      %581 = vmatpush.bf16.msra.mxu0 %v558
      %582 = vmatmul.bf16.gmra.mxu0 %v505
      %v583 = vpop.f32.mrf.mxu0
      %v584 = vadd.f32 %v524, %v583
      %v585 = vpop.f32.mrf.mxu0
      %v586 = vadd.f32 %v524, %v585
      %587 = vdwg.mxu0
      %v588 = vld [vmem:[#allocation2] sm:$0xff]
      %v589 = vld [vmem:[#allocation2 + $0x8] sm:$0x3]
      %v590 = vld [vmem:[%s347] sm:$0xf]
      %v591 = vld [vmem:[%s347 + $0x4] sm:$0x1]
      %v592 = vunpack.c.l.bf16 %v590
      %v593 = vunpack.c.l.bf16 %v591
      %v594 = vmul.f32 %v592, %v584
      %v595 = vmul.f32 %v593, %v586
      %v596 = vadd.f32 %v588, %v594
      %v597 = vadd.f32 %v589, %v595
      %598 = vst.msk [vmem:[#allocation2] sm:$0xff] %vm407, %v596
      %vm599 = vcmask 254976
      %600 = vst.msk [vmem:[#allocation2 + $0x8] sm:$0x3] %vm599, %v597
      %p601 = scmp.eq.s32.totalorder %s22, 3
      // Predicated region
      $region49: #{vit_moe_forward.20} parent=43 // pred_check
        %p602 = pneg %p601
      $region50: #{vit_moe_forward.20} parent=43 // pred_check_branch
        %604 = sbr.rel (%p602) target = $region52
      $region51: #{vit_moe_forward.20} parent=43 // pred_region
        %v605 = vld [vmem:[#allocation2] sm:$0xff]
        %v606 = vld [vmem:[#allocation2 + $0x8] sm:$0x3]
        %607 = vst.msk [vmem:[%s369] sm:$0xff] %vm407, %v605
        %608 = vst.msk [vmem:[%s369 + $0x8] sm:$0x3] %vm599, %v606
      $region52: #{vit_moe_forward.20} parent=43 // pred_fallthru
        _
      %s609 = smul.u32 2, %s21
      %p610 = scmp.lt.s32.totalorder %s609, 1
      %s611 = scalar_select %p610, %s609, 1
      %s612 = smul.addr %s611, 8
      %s613 = scalar_lea.vmem %s6, %s612
      // Predicated region
      $region53: #{vit_moe_forward.20} parent=43 // pred_check
        %p614 = pneg %p205
      $region54: #{vit_moe_forward.20} parent=43 // pred_check_branch
        %616 = sbr.rel (%p614) target = $region56
      $region55: #{vit_moe_forward.20} parent=43 // pred_region
        %s617 = smul.u32 2, %s21
      $region56: #{vit_moe_forward.20} parent=43 // pred_fallthru
        _
      // Predicated region
      $region57: #{vit_moe_forward.20} parent=43 // pred_check
        %p618 = pneg %p205
      $region58: #{vit_moe_forward.20} parent=43 // pred_check_branch
        %620 = sbr.rel (%p618) target = $region60
      $region59: #{vit_moe_forward.20} parent=43 // pred_region
        %s621 = smul.u32 2, %s21
        %p622 = scmp.lt.s32.totalorder %s621, 1
        %s623 = scalar_select %p622, %s621, 1
        %s624 = smul.addr %s623, 8
        %s625 = scalar_lea.vmem %s6, %s624
      $region60: #{vit_moe_forward.20} parent=43 // pred_fallthru
        _
    $region44: #{vit_moe_forward.20} parent=5 // pred_fallthru
      _
    %p626 = scmp.le.s32.totalorder 2, %s12
    // Predicated region
    $region61: #{vit_moe_forward.20} parent=5 // pred_check
      %p627 = pneg %p626
    $region62: #{vit_moe_forward.20} parent=5 // pred_check_branch
      %629 = sbr.rel (%p627) target = $region64
    $region63: #{vit_moe_forward.20} parent=5 // pred_region
      %s630 = ssub.s32 %s12, 2
    $region64: #{vit_moe_forward.20} parent=5 // pred_fallthru
      _
  $region6: #{vit_moe_forward.20} parent=0 // loop_footer
    %s16 = sadd.s32 1, %s12
  $region7: #{vit_moe_forward.20} parent=0 // loop_footer_branch
    %11 = sbr.rel target = $region3
  $region8: #{vit_moe_forward.20} parent=0 // loop_exit
    _

// kernel: vit_moe_forward.27
$region0: #{vit_moe_forward.27}
  #allocation0 [shape = 'u32[]', space=smem, size = 0x4, offset = 0x4, fixed_abs, tag = 'smem constant byte address 0x4 - core index']
  #allocation1 [shape = 'u32[72,128]{1,0:T(1,128)}', space=vmem, size = 0x9000, scoped, tag = 'internal scratch']
  %s0 = inlined_call_operand.vmem [shape: f32[2,32], index: 0, kind: input, shape index: {}]
  %s1 = inlined_call_operand.vmem [shape: f32[1,32], index: 1, kind: input, shape index: {}]
  %s2 = inlined_call_operand.vmem [shape: f32[1,32], index: 2, kind: input, shape index: {}]
  %s3 = inlined_call_operand.vmem [shape: bf16[32,10], index: 3, kind: input, shape index: {}]
  %s4 = inlined_call_operand.vmem [shape: f32[1,10], index: 4, kind: input, shape index: {}]
  %s5 = inlined_call_operand.hbm [shape: bf16[2,32], index: 5, kind: output, shape index: {0}]
  %s6 = inlined_call_operand.hbm [shape: f32[2,10], index: 6, kind: output, shape index: {1}]
  %7 = xla_tuple %s5, %s6
  %s8 = sld [smem:[#allocation0]]
  $region38: #{vit_moe_forward.27} parent=0
    _
  %s10 = ssub.s32 1, %s8
  %s11 = scalar_select 0, %s10, %s8
  $region1: #{vit_moe_forward.27} parent=0
    #allocation2 [shape = 'u8[512]{0}', space=vmem, size = 0x400, scoped, tag = 'output window, operand 0, single buffered']
    #allocation3 [shape = 's32[1]{0}', space=sflag, size = 0x4, scoped, tag = 'scoped memory for vit_moe_forward.27']
    #allocation4 [shape = 'u8[1024]{0}', space=vmem, size = 0x400, scoped, tag = 'output window, operand 1, single buffered']
    #allocation5 [shape = 's32[1]{0}', space=sflag, size = 0x4, scoped, tag = 'scoped memory for vit_moe_forward.27']
    %12 = vsyncpa [#allocation3], 0
    %13 = vsyncpa [#allocation5], 0
    // Predicated region
    $region2: #{vit_moe_forward.27} parent=1 // pred_check
      _
    $region3: #{vit_moe_forward.27} parent=1 // pred_check_branch
      %15 = sbr.rel (0) target = $region5
    $region4: #{vit_moe_forward.27} parent=1 // pred_region
      _
    $region5: #{vit_moe_forward.27} parent=1 // pred_fallthru
      _
    // Predicated region
    $region6: #{vit_moe_forward.27} parent=1 // pred_check
      _
    $region7: #{vit_moe_forward.27} parent=1 // pred_check_branch
      %17 = sbr.rel (0) target = $region9
    $region8: #{vit_moe_forward.27} parent=1 // pred_region
      _
    $region9: #{vit_moe_forward.27} parent=1 // pred_fallthru
      _
    // Predicated region
    $region10: #{vit_moe_forward.27} parent=1 // pred_check
      _
    $region11: #{vit_moe_forward.27} parent=1 // pred_check_branch
      %19 = sbr.rel (0) target = $region13
    $region12: #{vit_moe_forward.27} parent=1 // pred_region
      _
    $region13: #{vit_moe_forward.27} parent=1 // pred_fallthru
      _
    // Predicated region
    $region14: #{vit_moe_forward.27} parent=1 // pred_check
      _
    $region15: #{vit_moe_forward.27} parent=1 // pred_check_branch
      %21 = sbr.rel (0) target = $region17
    $region16: #{vit_moe_forward.27} parent=1 // pred_region
      _
    $region17: #{vit_moe_forward.27} parent=1 // pred_fallthru
      _
    // Predicated region
    $region18: #{vit_moe_forward.27} parent=1 // pred_check
      _
    $region19: #{vit_moe_forward.27} parent=1 // pred_check_branch
      %23 = sbr.rel (0) target = $region21
    $region20: #{vit_moe_forward.27} parent=1 // pred_region
      _
    $region21: #{vit_moe_forward.27} parent=1 // pred_fallthru
      _
    %v25 = vld [vmem:[%s0] sm:$0x3]
    %v26 = vld [vmem:[%s1] sm:$0x1]
    %v27 = vld [vmem:[%s2] sm:$0x1]
    %vm28 = vcmask 254976
    %v29 = vsel %vm28, %v25, 0.0
    %30 = vadd.xlane.f32.xlu0 %v29
    %v31 = vpop.xlane.xlu0 %30
    %v32 = vrcp.pop 32.0
    %v33 = vmul.f32 32.0, %v32
    %v34 = vsub.f32 1.0, %v33
    %v35 = vmul.f32 %v32, %v34
    %v36 = vadd.f32 %v32, %v35
    %vm37 = vweird.f32 %v32
    %v38 = vsel %vm37, %v32, %v36
    %v39 = vmul.f32 %v31, %v38
    %v40 = vsub.f32 %v25, %v39
    %v41 = vmul.f32 %v40, %v40
    %v42 = vsel %vm28, %v41, 0.0
    %43 = vadd.xlane.f32.xlu0 %v42
    %v44 = vpop.xlane.xlu0 %43
    %v45 = vmul.f32 %v44, %v38
    %v46 = vadd.f32 %v45, 1e-05
    %v47 = vrsqrt.pop %v46
    %v48 = vmul.f32 %v47, %v46
    %v49 = vmul.f32 %v48, %v47
    %v50 = vmul.f32 0.5, %v49
    %v51 = vsub.f32 1.5, %v50
    %v52 = vmul.f32 %v47, %v51
    %vm53 = vweird.f32 %v46
    %vm54 = vweird.f32 %v47
    %vm55 = vmor %vm53, %vm54
    %v56 = vsel %vm55, %v47, %v52
    %v57 = vmul.f32 %v40, %v56
    %v59 = vperm.slane %v26, 0
    %v61 = vmul.f32 %v57, %v59
    %v63 = vperm.slane %v27, 0
    %v65 = vadd.f32 %v61, %v63
    %v66 = vpack.c.bf16 %v65, %v65
    %vm67 = vcmask 253952
    %68 = vst.msk [vmem:[#allocation2] sm:$0x1] %vm67, %v66
    %v69 = vld [vmem:[%s3] sm:$0xf]
    %v70 = vld [vmem:[%s3 + $0x4] sm:$0xf]
    %v71 = vld [vmem:[%s3 + $0x8] sm:$0xf]
    %v72 = vld [vmem:[%s3 + $0xc] sm:$0xf]
    %v73 = vld [vmem:[%s4] sm:$0x1]
    %v75 = vperm.slane %v73, 0
    %v81 = vunpack.c.l.b16 %v69
    %v82 = vunpack.c.l.b16 %v70
    %v83 = vunpack.c.l.b16 %v71
    %v84 = vunpack.c.l.b16 %v72
    %v85 = vpack.c.b16 %v82, %v81
    %v86 = vpack.c.b16 %v84, %v83
    %vm89 = vcmask 261120
    %v91 = vsel %vm89, %v66, 0
    %93 = vmatpush.bf16.msra.mxu0 0
    %94 = vmatpush.bf16.msra.mxu0 0
    %95 = vmatpush.bf16.msra.mxu0 0
    %96 = vmatpush.bf16.msra.mxu0 0
    %97 = vmatpush.bf16.msra.mxu0 0
    %98 = vmatpush.bf16.msra.mxu0 0
    %99 = vmatpush.bf16.msra.mxu0 %v86
    %100 = vmatpush.bf16.msra.mxu0 %v85
    %101 = vmatmul.bf16.gmra.mxu0 %v91
    %v102 = vpop.f32.mrf.mxu0
    %v103 = vadd.f32 %v75, %v102
    %v104 = vpop.f32.mrf.mxu0
    %105 = vdwg.mxu0
    %vm106 = vcmask 74752
    %107 = vst.msk [vmem:[#allocation4] sm:$0x3] %vm106, %v103
    // Predicated region
    $region22: #{vit_moe_forward.27} parent=1 // pred_check
      _
    $region23: #{vit_moe_forward.27} parent=1 // pred_check_branch
      %109 = sbr.rel (0) target = $region25
    $region24: #{vit_moe_forward.27} parent=1 // pred_region
      %111 = vsyncadd [#allocation3], 0
      %s113 = sshll.u32 [#allocation2], 4
      %s114 = int_to_ptr.vmem [resolvable:$true] %s113
      %s115 = sshll.u32 %s5, 4
      %s116 = int_to_ptr.hbm [resolvable:$true] %s115
      %118 = dma.vmem_to_hbm [thread:$0]  %s114, 16, %s116, [#allocation3]
    $region25: #{vit_moe_forward.27} parent=1 // pred_fallthru
      _
    // Predicated region
    $region26: #{vit_moe_forward.27} parent=1 // pred_check
      _
    $region27: #{vit_moe_forward.27} parent=1 // pred_check_branch
      %120 = sbr.rel (0) target = $region29
    $region28: #{vit_moe_forward.27} parent=1 // pred_region
      %122 = vsyncadd [#allocation5], 0
      %s124 = sshll.u32 [#allocation4], 4
      %s125 = int_to_ptr.vmem [resolvable:$true] %s124
      %s126 = sshll.u32 %s6, 4
      %s127 = int_to_ptr.hbm [resolvable:$true] %s126
      %129 = dma.vmem_to_hbm [thread:$0]  %s125, 32, %s127, [#allocation5]
    $region29: #{vit_moe_forward.27} parent=1 // pred_fallthru
      _
    // Predicated region
    $region30: #{vit_moe_forward.27} parent=1 // pred_check
      _
    $region31: #{vit_moe_forward.27} parent=1 // pred_check_branch
      %131 = sbr.rel (0) target = $region33
    $region32: #{vit_moe_forward.27} parent=1 // pred_region
      %133 = dma.done [#allocation3], 16
    $region33: #{vit_moe_forward.27} parent=1 // pred_fallthru
      _
    // Predicated region
    $region34: #{vit_moe_forward.27} parent=1 // pred_check
      _
    $region35: #{vit_moe_forward.27} parent=1 // pred_check_branch
      %135 = sbr.rel (0) target = $region37
    $region36: #{vit_moe_forward.27} parent=1 // pred_region
      %137 = dma.done [#allocation5], 32
    $region37: #{vit_moe_forward.27} parent=1 // pred_fallthru
      _
    %138 = vsyncpa [#allocation3], 1
    %139 = vsyncpa [#allocation5], 1

</llo_original>
